<compile_context>
chip_gen: v6e
topology: v6e:2x2x1
jax: 0.10.0
libtpu: 0.0.40
codegen_flags: <defaults>
</compile_context>

<pallas_src>
import functools

import jax
import jax.numpy as jnp
from jax import lax
from jax.experimental import pallas as pl
from jax.experimental.pallas import tpu as pltpu


def _round_up(x, m):
    return (x + m - 1) // m * m


_LANES = 128
_MAX_ROWS = 1024          # M-tile cap (rows of B*Ho*Wo) per grid step


def _compiler_params():
    return pltpu.CompilerParams(
        dimension_semantics=("parallel",),        # M blocks are independent
        vmem_limit_bytes=48 * 1024 * 1024,        # <= v7x 64 MiB/TC, headroom on v5e/v6e
    )


# ----------------------------- Pallas kernels -----------------------------
# bf16 MXU operands, f32 accumulation, f32 folded-BN epilogue, bf16 writeback.

def _conv_kernel(relu, p_ref, w_ref, s_ref, b_ref, o_ref):
    acc = jnp.dot(p_ref[...], w_ref[...], preferred_element_type=jnp.float32)
    y = acc * s_ref[...] + b_ref[...]
    if relu:
        y = jnp.maximum(y, 0.0)
    o_ref[...] = y.astype(o_ref.dtype)


def _resblock_kernel(pm_ref, wm_ref, sm_ref, bm_ref,
                     pi_ref, wi_ref, si_ref, bi_ref, o_ref):
    # relu(BN(conv3x3)) + BN(conv1x1): both branches fused in one kernel so the
    # identity activations never round-trip through HBM.
    am = jnp.dot(pm_ref[...], wm_ref[...], preferred_element_type=jnp.float32)
    ai = jnp.dot(pi_ref[...], wi_ref[...], preferred_element_type=jnp.float32)
    y = (jnp.maximum(am * sm_ref[...] + bm_ref[...], 0.0)
         + ai * si_ref[...] + bi_ref[...])
    o_ref[...] = y.astype(o_ref.dtype)


def _concat_conv_kernel(relu, p1_ref, w1_ref, p2_ref, w2_ref, s_ref, b_ref, o_ref):
    # conv(cat(a, b), W) == conv(a, W_a) + conv(b, W_b): the skip-connection channel
    # concat is fused away (two dots, one shared epilogue).
    acc = jnp.dot(p1_ref[...], w1_ref[...], preferred_element_type=jnp.float32)
    acc = acc + jnp.dot(p2_ref[...], w2_ref[...], preferred_element_type=jnp.float32)
    y = acc * s_ref[...] + b_ref[...]
    if relu:
        y = jnp.maximum(y, 0.0)
    o_ref[...] = y.astype(o_ref.dtype)


# ----------------------------- Pallas wrappers -----------------------------

def _m_tiles(m, max_rows=_MAX_ROWS):
    """Pick an M tile that divides the 16-rounded row count, preferring >= 2 grid
    steps (dual-TC on v7x / pipelining) and tiles <= max_rows (v7x VMEM-safe)."""
    mp = _round_up(m, 16)
    divs = [t for t in range(16, min(mp, max_rows) + 1, 16) if mp % t == 0]
    multi = [t for t in divs if mp // t >= 2]
    tm = max(multi) if multi else max(divs)
    if mp > 4 * max_rows and tm < max_rows // 2:
        tm = max_rows                       # awkward M: accept a padded tail block
        mp = _round_up(mp, tm)
    return mp, tm


def _pad2(a, rows, cols):
    pr, pc = rows - a.shape[0], cols - a.shape[1]
    if pr == 0 and pc == 0:
        return a
    return jnp.pad(a, ((0, pr), (0, pc)))


def _prep_scale_bias(scale, bias, n, n_pad):
    s = jnp.pad(scale, (0, n_pad - n)).reshape(1, n_pad).astype(jnp.float32)
    b = jnp.pad(bias, (0, n_pad - n)).reshape(1, n_pad).astype(jnp.float32)
    return s, b


def _conv_matmul(patches, wmat, scale, bias, relu):
    m, k = patches.shape
    n = wmat.shape[1]
    kp, n_pad = _round_up(k, _LANES), _round_up(n, _LANES)
    mp, tm = _m_tiles(m)
    p = _pad2(patches, mp, kp).astype(jnp.bfloat16)
    w = _pad2(wmat, kp, n_pad).astype(jnp.bfloat16)
    s, b = _prep_scale_bias(scale, bias, n, n_pad)
    out = pl.pallas_call(
        functools.partial(_conv_kernel, relu),
        grid=(mp // tm,),
        in_specs=[pl.BlockSpec((tm, kp), lambda i: (i, 0)),
                  pl.BlockSpec((kp, n_pad), lambda i: (0, 0)),
                  pl.BlockSpec((1, n_pad), lambda i: (0, 0)),
                  pl.BlockSpec((1, n_pad), lambda i: (0, 0))],
        out_specs=pl.BlockSpec((tm, n_pad), lambda i: (i, 0)),
        out_shape=jax.ShapeDtypeStruct((mp, n_pad), jnp.bfloat16),
        compiler_params=_compiler_params(),
    )(p, w, s, b)
    return out[:m]


def _resblock_matmul(pm, wm, sm, bm, pi, wi, si, bi):
    m, km = pm.shape
    ki = pi.shape[1]
    n = wm.shape[1]
    kmp, kip, n_pad = _round_up(km, _LANES), _round_up(ki, _LANES), _round_up(n, _LANES)
    mp, tm = _m_tiles(m)
    pm_ = _pad2(pm, mp, kmp).astype(jnp.bfloat16)
    pi_ = _pad2(pi, mp, kip).astype(jnp.bfloat16)
    wm_ = _pad2(wm, kmp, n_pad).astype(jnp.bfloat16)
    wi_ = _pad2(wi, kip, n_pad).astype(jnp.bfloat16)
    sm_, bm_ = _prep_scale_bias(sm, bm, n, n_pad)
    si_, bi_ = _prep_scale_bias(si, bi, n, n_pad)
    out = pl.pallas_call(
        _resblock_kernel,
        grid=(mp // tm,),
        in_specs=[pl.BlockSpec((tm, kmp), lambda i: (i, 0)),
                  pl.BlockSpec((kmp, n_pad), lambda i: (0, 0)),
                  pl.BlockSpec((1, n_pad), lambda i: (0, 0)),
                  pl.BlockSpec((1, n_pad), lambda i: (0, 0)),
                  pl.BlockSpec((tm, kip), lambda i: (i, 0)),
                  pl.BlockSpec((kip, n_pad), lambda i: (0, 0)),
                  pl.BlockSpec((1, n_pad), lambda i: (0, 0)),
                  pl.BlockSpec((1, n_pad), lambda i: (0, 0))],
        out_specs=pl.BlockSpec((tm, n_pad), lambda i: (i, 0)),
        out_shape=jax.ShapeDtypeStruct((mp, n_pad), jnp.bfloat16),
        compiler_params=_compiler_params(),
    )(pm_, wm_, sm_, bm_, pi_, wi_, si_, bi_)
    return out[:m]


def _concat_conv_matmul(p1, w1, p2, w2, scale, bias, relu):
    m, k1 = p1.shape
    k2 = p2.shape[1]
    n = w1.shape[1]
    k1p, k2p, n_pad = _round_up(k1, _LANES), _round_up(k2, _LANES), _round_up(n, _LANES)
    mp, tm = _m_tiles(m)
    p1_ = _pad2(p1, mp, k1p).astype(jnp.bfloat16)
    p2_ = _pad2(p2, mp, k2p).astype(jnp.bfloat16)
    w1_ = _pad2(w1, k1p, n_pad).astype(jnp.bfloat16)
    w2_ = _pad2(w2, k2p, n_pad).astype(jnp.bfloat16)
    s, b = _prep_scale_bias(scale, bias, n, n_pad)
    out = pl.pallas_call(
        functools.partial(_concat_conv_kernel, relu),
        grid=(mp // tm,),
        in_specs=[pl.BlockSpec((tm, k1p), lambda i: (i, 0)),
                  pl.BlockSpec((k1p, n_pad), lambda i: (0, 0)),
                  pl.BlockSpec((tm, k2p), lambda i: (i, 0)),
                  pl.BlockSpec((k2p, n_pad), lambda i: (0, 0)),
                  pl.BlockSpec((1, n_pad), lambda i: (0, 0)),
                  pl.BlockSpec((1, n_pad), lambda i: (0, 0))],
        out_specs=pl.BlockSpec((tm, n_pad), lambda i: (i, 0)),
        out_shape=jax.ShapeDtypeStruct((mp, n_pad), jnp.bfloat16),
        compiler_params=_compiler_params(),
    )(p1_, w1_, p2_, w2_, s, b)
    return out[:m]


# ----------------------------- conv / deconv layer helpers -----------------------------

def _im2col(x, kh, kw, stride, pad):
    # Runs in bf16 (x is bf16 between layers); remaining window read amplification
    # is noted in the top-of-file TODO.
    B, H, W, C = x.shape
    xp = jnp.pad(x, ((0, 0), (pad, pad), (pad, pad), (0, 0)))
    Ho = (H + 2 * pad - kh) // stride + 1
    Wo = (W + 2 * pad - kw) // stride + 1
    cols = []
    for di in range(kh):
        for dj in range(kw):
            cols.append(xp[:, di:di + stride * Ho:stride, dj:dj + stride * Wo:stride, :])
    p = jnp.stack(cols, axis=3)            # (B, Ho, Wo, kh*kw, C), tap-major like w.reshape
    return p.reshape(B * Ho * Wo, kh * kw * C), Ho, Wo


def conv_bn_act(x, w, scale, bias, *, stride, pad, relu):
    B = x.shape[0]
    kh, kw, cin, cout = w.shape
    patches, Ho, Wo = _im2col(x, kh, kw, stride, pad)
    out = _conv_matmul(patches, w.reshape(kh * kw * cin, cout), scale, bias, relu)
    return out[:, :cout].reshape(B, Ho, Wo, cout)


def residual_block(x, wm, sm, bm, wi, si, bi):
    # x -> relu(BN(conv3x3 s2 p1)) + BN(conv1x1 s2), fused in one pallas_call.
    B = x.shape[0]
    kh, kw, cin, cout = wm.shape
    pm, Ho, Wo = _im2col(x, kh, kw, 2, 1)
    pi, Hi, Wi = _im2col(x, 1, 1, 2, 0)
    assert (Ho, Wo) == (Hi, Wi)
    out = _resblock_matmul(pm, wm.reshape(kh * kw * cin, cout), sm, bm,
                           pi, wi.reshape(cin, cout), si, bi)
    return out[:, :cout].reshape(B, Ho, Wo, cout)


def _subpixel_weight(w, pad):
    """Rewrite ConvTranspose2d(k, stride=2, padding=pad, output_padding=1) -- stored
    as the equivalent stride-1 HWIO conv kernel over the zero-dilated input -- as a
    single stride-1 conv over the UNdilated input.

    Returns (w_fused, (pad_lo, pad_hi), win) with w_fused of shape
    (win, win, cin, 4*cout); output-channel group g = 2*r + c holds output phase
    (row%2 == r, col%2 == c) and is scattered back by _depth_to_space.
    """
    k, _, cin, cout = w.shape
    lo = k - 1 - pad                      # low pad of the dilated formulation
    # Phase r contributes taps t with (r + t - lo) even at input offset
    # o = (r + t - lo) // 2, i.e. tap t = 2*o + lo - r.
    offs = [sorted((r + t - lo) // 2 for t in range(k) if (r + t - lo) % 2 == 0)
            for r in (0, 1)]
    o_min = min(o[0] for o in offs)
    o_max = max(o[-1] for o in offs)
    win = o_max - o_min + 1
    zeros = jnp.zeros((cin, cout), w.dtype)
    groups = []
    for r in (0, 1):
        for c in (0, 1):
            rows = []
            for uh in range(win):
                th = 2 * (o_min + uh) + lo - r
                cols = []
                for uw in range(win):
                    tw = 2 * (o_min + uw) + lo - c
                    ok = (0 <= th < k) and (0 <= tw < k)
                    cols.append(w[th, tw] if ok else zeros)
                rows.append(jnp.stack(cols, axis=0))             # (win, cin, cout)
            groups.append(jnp.stack(rows, axis=0))                # (win, win, cin, cout)
    wf = jnp.stack(groups, axis=3).reshape(win, win, cin, 4 * cout)
    return wf, (-o_min, o_max), win


def _depth_to_space(y, cout):
    # y[b, m, n, (2*r + c)*cout + co] -> out[b, 2*m + r, 2*n + c, co]
    B, H, W, _ = y.shape
    y = y.reshape(B, H, W, 2, 2, cout)
    y = jnp.transpose(y, (0, 1, 3, 2, 4, 5))
    return y.reshape(B, 2 * H, 2 * W, cout)


def deconv_bn_relu(x, w, scale, bias, *, pad):
    # ConvTranspose2d(k, stride=2, padding=pad, output_padding=1)+BN+ReLU via
    # sub-pixel decomposition: one stride-1 matmul kernel, then depth->space.
    B, H, W, _ = x.shape
    kh, kw, cin, cout = w.shape
    wf, (plo, phi), win = _subpixel_weight(w, pad)
    xp = jnp.pad(x, ((0, 0), (plo, phi), (plo, phi), (0, 0)))
    patches, Ho, Wo = _im2col(xp, win, win, 1, 0)
    assert (Ho, Wo) == (H, W)
    s4, b4 = jnp.tile(scale, 4), jnp.tile(bias, 4)
    out = _conv_matmul(patches, wf.reshape(win * win * cin, 4 * cout), s4, b4, True)
    y = out[:, :4 * cout].reshape(B, H, W, 4 * cout)
    return _depth_to_space(y, cout)


def concat_deconv_bn_relu(a, b, w, scale, bias, *, pad):
    # upConvBlock on torch.cat((a, b), channel): sub-pixel decomposition + fused
    # concat (two dots in one kernel), then depth->space.
    B, H, W, ca = a.shape
    kh, kw, cin, cout = w.shape
    cb = cin - ca
    wa, (plo, phi), win = _subpixel_weight(w[:, :, :ca, :], pad)
    wb, _, _ = _subpixel_weight(w[:, :, ca:, :], pad)
    ap = jnp.pad(a, ((0, 0), (plo, phi), (plo, phi), (0, 0)))
    bp = jnp.pad(b, ((0, 0), (plo, phi), (plo, phi), (0, 0)))
    pa, Ho, Wo = _im2col(ap, win, win, 1, 0)
    pb, _, _ = _im2col(bp, win, win, 1, 0)
    assert (Ho, Wo) == (H, W)
    s4, b4 = jnp.tile(scale, 4), jnp.tile(bias, 4)
    out = _concat_conv_matmul(pa, wa.reshape(win * win * ca, 4 * cout),
                              pb, wb.reshape(win * win * cb, 4 * cout), s4, b4, True)
    y = out[:, :4 * cout].reshape(B, H, W, 4 * cout)
    return _depth_to_space(y, cout)


def _match_spatial(a, b):
    # Mirrors the module's F.pad logic: pad the smaller tensor at bottom/right.
    Ha, Wa = a.shape[1:3]
    Hb, Wb = b.shape[1:3]
    H, W = max(Ha, Hb), max(Wa, Wb)
    if (Ha, Wa) != (H, W):
        a = jnp.pad(a, ((0, 0), (0, H - Ha), (0, W - Wa), (0, 0)))
    if (Hb, Wb) != (H, W):
        b = jnp.pad(b, ((0, 0), (0, H - Hb), (0, W - Wb), (0, 0)))
    return a, b


# ----------------------------- Parameters -----------------------------
# Transposed-conv weights are stored directly as the equivalent stride-1 conv kernel
# (HWIO) applied to the dilated/padded input (i.e. PyTorch's ConvTranspose2d weight,
# spatially flipped and (Cin,Cout)-transposed).  Weights are randomly initialized
# here, so this is just a storage convention; the op semantics match ConvTranspose2d.

def _fold_bn(conv_b, gamma, beta, mu, var, eps=1e-5):
    scale = gamma / jnp.sqrt(var + eps)
    return scale, (conv_b - mu) * scale + beta


def _init_conv_bn(key, kh, kw, cin, cout):
    ks = jax.random.split(key, 6)
    w = jax.random.normal(ks[0], (kh, kw, cin, cout), jnp.float32) * 0.05
    cb = jax.random.normal(ks[1], (cout,), jnp.float32) * 0.05
    gamma = 1.0 + 0.1 * jax.random.normal(ks[2], (cout,), jnp.float32)
    beta = 0.1 * jax.random.normal(ks[3], (cout,), jnp.float32)
    mu = 0.1 * jax.random.normal(ks[4], (cout,), jnp.float32)
    var = 1.0 + 0.1 * jnp.abs(jax.random.normal(ks[5], (cout,), jnp.float32))
    s, b = _fold_bn(cb, gamma, beta, mu, var)
    return w, s, b


def init_params(key):
    keys = jax.random.split(key, 8)
    return {
        "conv1": _init_conv_bn(keys[0], 7, 7, 3, 32),     # Conv(3->32,k7,s2,p3)+BN+ReLU
        "conv2": _init_conv_bn(keys[1], 3, 3, 32, 64),    # Conv(32->64,k3,s2,p1)+BN+ReLU
        "id2":   _init_conv_bn(keys[2], 1, 1, 32, 64),    # Conv(32->64,k1,s2)+BN
        "conv3": _init_conv_bn(keys[3], 3, 3, 64, 128),   # Conv(64->128,k3,s2,p1)+BN+ReLU
        "id3":   _init_conv_bn(keys[4], 1, 1, 64, 128),   # Conv(64->128,k1,s2)+BN
        "up1":   _init_conv_bn(keys[5], 3, 3, 128, 64),   # ConvT(128->64,k3,s2,p1,op1)+BN+ReLU
        "up2":   _init_conv_bn(keys[6], 3, 3, 128, 32),   # ConvT(128->32,k3,s2,p1,op1)+BN+ReLU
        "up3":   _init_conv_bn(keys[7], 7, 7, 64, 5),     # ConvT(64->5,k7,s2,p3,op1)+BN+ReLU
    }


# ----------------------------- Forward pass -----------------------------

def fcn_forward(x_nchw, params):
    # NCHW -> NHWC boundary transpose kept for PyTorch-parity; activations are bf16
    # from here on (halves all XLA-side glue + kernel DMA traffic).
    x = jnp.transpose(x_nchw, (0, 2, 3, 1)).astype(jnp.bfloat16)
    H_in, W_in = x.shape[1], x.shape[2]

    w, s, b = params["conv1"]
    x1 = conv_bn_act(x, w, s, b, stride=2, pad=3, relu=True)

    wm, sm, bm = params["conv2"]; wi, si, bi = params["id2"]
    x2 = residual_block(x1, wm, sm, bm, wi, si, bi)

    wm, sm, bm = params["conv3"]; wi, si, bi = params["id3"]
    x3 = residual_block(x2, wm, sm, bm, wi, si, bi)

    w, s, b = params["up1"]
    x4 = deconv_bn_relu(x3, w, s, b, pad=1)

    x4, x2m = _match_spatial(x4, x2)
    w, s, b = params["up2"]
    x5 = concat_deconv_bn_relu(x4, x2m, w, s, b, pad=1)

    x5, x1m = _match_spatial(x5, x1)
    w, s, b = params["up3"]
    x6 = concat_deconv_bn_relu(x5, x1m, w, s, b, pad=3)

    x6 = x6[:, :H_in, :W_in, :]                                   # final crop (no-op here)
    return jnp.transpose(x6, (0, 3, 1, 2)).astype(jnp.float32)    # NHWC -> NCHW


# ----------------------------- Plain-JAX reference -----------------------------

def _ref_conv(x, w_hwio, scale, bias, stride, pad, relu):
    w_oihw = jnp.transpose(w_hwio, (3, 2, 0, 1))
    y = lax.conv_general_dilated(x, w_oihw, (stride, stride), [(pad, pad)] * 2,
                                 dimension_numbers=("NCHW", "OIHW", "NCHW"),
                                 precision=lax.Precision.HIGHEST)
    y = y * scale[None, :, None, None] + bias[None, :, None, None]
    return jnp.maximum(y, 0.0) if relu else y


def _ref_deconv(x, w_hwio, scale, bias, stride, pad, output_padding, relu):
    k = w_hwio.shape[0]
    w_oihw = jnp.transpose(w_hwio, (3, 2, 0, 1))
    lo = k - 1 - pad
    hi = k - 1 - pad + output_padding
    y = lax.conv_general_dilated(x, w_oihw, (1, 1), [(lo, hi), (lo, hi)],
                                 lhs_dilation=(stride, stride),
                                 dimension_numbers=("NCHW", "OIHW", "NCHW"),
                                 precision=lax.Precision.HIGHEST)
    y = y * scale[None, :, None, None] + bias[None, :, None, None]
    return jnp.maximum(y, 0.0) if relu else y


def _ref_match(a, b):
    Ha, Wa = a.shape[2:]
    Hb, Wb = b.shape[2:]
    H, W = max(Ha, Hb), max(Wa, Wb)
    a = jnp.pad(a, ((0, 0), (0, 0), (0, H - Ha), (0, W - Wa)))
    b = jnp.pad(b, ((0, 0), (0, 0), (0, H - Hb), (0, W - Wb)))
    return a, b


def reference_forward(x, params):
    w, s, b = params["conv1"]; x1 = _ref_conv(x, w, s, b, 2, 3, True)
    wm, sm, bm = params["conv2"]; wi, si, bi = params["id2"]
    x2 = _ref_conv(x1, wm, sm, bm, 2, 1, True) + _ref_conv(x1, wi, si, bi, 2, 0, False)
    wm, sm, bm = params["conv3"]; wi, si, bi = params["id3"]
    x3 = _ref_conv(x2, wm, sm, bm, 2, 1, True) + _ref_conv(x2, wi, si, bi, 2, 0, False)
    w, s, b = params["up1"]; x4 = _ref_deconv(x3, w, s, b, 2, 1, 1, True)
    x4, x2m = _ref_match(x4, x2)
    w, s, b = params["up2"]
    x5 = _ref_deconv(jnp.concatenate([x4, x2m], axis=1), w, s, b, 2, 1, 1, True)
    x5, x1m = _ref_match(x5, x1)
    w, s, b = params["up3"]
    x6 = _ref_deconv(jnp.concatenate([x5, x1m], axis=1), w, s, b, 2, 3, 1, True)
    return x6[:, :, :x.shape[2], :x.shape[3]]


# ----------------------------- Main -----------------------------

if __name__ == "__main__":
    key = jax.random.PRNGKey(0)
    kx, kp = jax.random.split(key)
    x = jax.random.normal(kx, (2, 3, 16, 16), jnp.float32)   # NCHW, like PyTorch
    params = init_params(kp)

    out = jax.jit(fcn_forward)(x, params)
    out = jax.block_until_ready(out)
    assert out.shape == (2, 5, 16, 16), out.shape

    ref = reference_forward(x, params)
    if not jnp.allclose(out, ref, atol=5e-2, rtol=5e-2):
        raise AssertionError(
            f"mismatch vs reference, max abs err {float(jnp.max(jnp.abs(out - ref)))}")

    print("KERNEL_OK")
</pallas_src>

<mosaic_0001>
module attributes {stable_mosaic.version = 11 : i64} {
  func.func @_conv_kernel(%arg0: i32, %arg1: memref<64x256xbf16, #tpu.memory_space<vmem>>, %arg2: memref<256x128xbf16, #tpu.memory_space<vmem>>, %arg3: memref<1x128xf32, #tpu.memory_space<vmem>>, %arg4: memref<1x128xf32, #tpu.memory_space<vmem>>, %arg5: memref<64x128xbf16, #tpu.memory_space<vmem>>) attributes {dimension_semantics = [#tpu.dimension_semantics<parallel>], iteration_bounds = array<i64: 2>, scalar_prefetch = 0 : i64, scratch_operands = 0 : i64, tpu.core_type = #tpu.core_type<tc>, window_params = [{transform_indices = @transform_0, window_bounds = array<i64: 64, 256>}, {pipeline_mode = #tpu.pipeline_mode<synchronous>, transform_indices = @transform_1, window_bounds = array<i64: 256, 128>}, {pipeline_mode = #tpu.pipeline_mode<synchronous>, transform_indices = @transform_2, window_bounds = array<i64: 1, 128>}, {pipeline_mode = #tpu.pipeline_mode<synchronous>, transform_indices = @transform_3, window_bounds = array<i64: 1, 128>}, {transform_indices = @transform_4, window_bounds = array<i64: 64, 128>}]} {
    %c0 = arith.constant 0 : index
    %c0_0 = arith.constant 0 : index
    %0 = vector.load %arg1[%c0, %c0_0] : memref<64x256xbf16, #tpu.memory_space<vmem>>, vector<64x256xbf16>
    %c0_1 = arith.constant 0 : index
    %c0_2 = arith.constant 0 : index
    %1 = vector.load %arg2[%c0_1, %c0_2] : memref<256x128xbf16, #tpu.memory_space<vmem>>, vector<256x128xbf16>
    %cst = arith.constant dense<0.000000e+00> : vector<64x128xf32>
    %2 = tpu.matmul %0, %1, %cst {dimension_numbers = #tpu.dot_dimension_numbers<[1], [0], [0], [1], [0, 0, 1, 1], [], []>} : vector<64x256xbf16>, vector<256x128xbf16>, vector<64x128xf32> -> vector<64x128xf32>
    %c0_3 = arith.constant 0 : index
    %c0_4 = arith.constant 0 : index
    %3 = vector.load %arg3[%c0_3, %c0_4] : memref<1x128xf32, #tpu.memory_space<vmem>>, vector<1x128xf32>
    %4 = vector.broadcast %3 : vector<1x128xf32> to vector<64x128xf32>
    %5 = arith.mulf %2, %4 : vector<64x128xf32>
    %c0_5 = arith.constant 0 : index
    %c0_6 = arith.constant 0 : index
    %6 = vector.load %arg4[%c0_5, %c0_6] : memref<1x128xf32, #tpu.memory_space<vmem>>, vector<1x128xf32>
    %7 = vector.broadcast %6 : vector<1x128xf32> to vector<64x128xf32>
    %8 = arith.addf %5, %7 : vector<64x128xf32>
    %cst_7 = arith.constant 0.000000e+00 : f32
    %9 = vector.broadcast %cst_7 : f32 to vector<64x128xf32>
    %10 = arith.maximumf %8, %9 : vector<64x128xf32>
    %11 = arith.truncf %10 : vector<64x128xf32> to vector<64x128xbf16>
    %c0_8 = arith.constant 0 : index
    %c0_9 = arith.constant 0 : index
    %12 = vector.load %arg5[%c0_8, %c0_9] : memref<64x128xbf16, #tpu.memory_space<vmem>>, vector<64x128xbf16>
    tpu.vector_store %arg5[%c0_8, %c0_9], %11 {strides = array<i32>} : memref<64x128xbf16, #tpu.memory_space<vmem>>, vector<64x128xbf16>,
    return
  }
  func.func @transform_0(%arg0: i32) -> (i32, i32) {
    %c0_i32 = arith.constant 0 : i32
    %c0_i32_0 = arith.constant 0 : i32
    return %arg0, %c0_i32 : i32, i32
  }
  func.func @transform_1(%arg0: i32) -> (i32, i32) {
    %c0_i32 = arith.constant 0 : i32
    %c0_i32_0 = arith.constant 0 : i32
    %c0_i32_1 = arith.constant 0 : i32
    return %c0_i32, %c0_i32_0 : i32, i32
  }
  func.func @transform_2(%arg0: i32) -> (i32, i32) {
    %c0_i32 = arith.constant 0 : i32
    %c0_i32_0 = arith.constant 0 : i32
    %c0_i32_1 = arith.constant 0 : i32
    return %c0_i32, %c0_i32_0 : i32, i32
  }
  func.func @transform_3(%arg0: i32) -> (i32, i32) {
    %c0_i32 = arith.constant 0 : i32
    %c0_i32_0 = arith.constant 0 : i32
    %c0_i32_1 = arith.constant 0 : i32
    return %c0_i32, %c0_i32_0 : i32, i32
  }
  func.func @transform_4(%arg0: i32) -> (i32, i32) {
    %c0_i32 = arith.constant 0 : i32
    %c0_i32_0 = arith.constant 0 : i32
    return %arg0, %c0_i32 : i32, i32
  }
}

module attributes {stable_mosaic.version = 11 : i64} {
  func.func @_resblock_kernel(%arg0: i32, %arg1: memref<16x384xbf16, #tpu.memory_space<vmem>>, %arg2: memref<384x128xbf16, #tpu.memory_space<vmem>>, %arg3: memref<1x128xf32, #tpu.memory_space<vmem>>, %arg4: memref<1x128xf32, #tpu.memory_space<vmem>>, %arg5: memref<16x128xbf16, #tpu.memory_space<vmem>>, %arg6: memref<128x128xbf16, #tpu.memory_space<vmem>>, %arg7: memref<1x128xf32, #tpu.memory_space<vmem>>, %arg8: memref<1x128xf32, #tpu.memory_space<vmem>>, %arg9: memref<16x128xbf16, #tpu.memory_space<vmem>>) attributes {dimension_semantics = [#tpu.dimension_semantics<parallel>], iteration_bounds = array<i64: 2>, scalar_prefetch = 0 : i64, scratch_operands = 0 : i64, tpu.core_type = #tpu.core_type<tc>, window_params = [{transform_indices = @transform_0, window_bounds = array<i64: 16, 384>}, {pipeline_mode = #tpu.pipeline_mode<synchronous>, transform_indices = @transform_1, window_bounds = array<i64: 384, 128>}, {pipeline_mode = #tpu.pipeline_mode<synchronous>, transform_indices = @transform_2, window_bounds = array<i64: 1, 128>}, {pipeline_mode = #tpu.pipeline_mode<synchronous>, transform_indices = @transform_3, window_bounds = array<i64: 1, 128>}, {transform_indices = @transform_4, window_bounds = array<i64: 16, 128>}, {pipeline_mode = #tpu.pipeline_mode<synchronous>, transform_indices = @transform_5, window_bounds = array<i64: 128, 128>}, {pipeline_mode = #tpu.pipeline_mode<synchronous>, transform_indices = @transform_6, window_bounds = array<i64: 1, 128>}, {pipeline_mode = #tpu.pipeline_mode<synchronous>, transform_indices = @transform_7, window_bounds = array<i64: 1, 128>}, {transform_indices = @transform_8, window_bounds = array<i64: 16, 128>}]} {
    %c0 = arith.constant 0 : index
    %c0_0 = arith.constant 0 : index
    %0 = vector.load %arg1[%c0, %c0_0] : memref<16x384xbf16, #tpu.memory_space<vmem>>, vector<16x384xbf16>
    %c0_1 = arith.constant 0 : index
    %c0_2 = arith.constant 0 : index
    %1 = vector.load %arg2[%c0_1, %c0_2] : memref<384x128xbf16, #tpu.memory_space<vmem>>, vector<384x128xbf16>
    %cst = arith.constant dense<0.000000e+00> : vector<16x128xf32>
    %2 = tpu.matmul %0, %1, %cst {dimension_numbers = #tpu.dot_dimension_numbers<[1], [0], [0], [1], [0, 0, 1, 1], [], []>} : vector<16x384xbf16>, vector<384x128xbf16>, vector<16x128xf32> -> vector<16x128xf32>
    %c0_3 = arith.constant 0 : index
    %c0_4 = arith.constant 0 : index
    %3 = vector.load %arg5[%c0_3, %c0_4] : memref<16x128xbf16, #tpu.memory_space<vmem>>, vector<16x128xbf16>
    %c0_5 = arith.constant 0 : index
    %c0_6 = arith.constant 0 : index
    %4 = vector.load %arg6[%c0_5, %c0_6] : memref<128x128xbf16, #tpu.memory_space<vmem>>, vector<128x128xbf16>
    %cst_7 = arith.constant dense<0.000000e+00> : vector<16x128xf32>
    %5 = tpu.matmul %3, %4, %cst_7 {dimension_numbers = #tpu.dot_dimension_numbers<[1], [0], [0], [1], [0, 0, 1, 1], [], []>} : vector<16x128xbf16>, vector<128x128xbf16>, vector<16x128xf32> -> vector<16x128xf32>
    %c0_8 = arith.constant 0 : index
    %c0_9 = arith.constant 0 : index
    %6 = vector.load %arg3[%c0_8, %c0_9] : memref<1x128xf32, #tpu.memory_space<vmem>>, vector<1x128xf32>
    %7 = vector.broadcast %6 : vector<1x128xf32> to vector<16x128xf32>
    %8 = arith.mulf %2, %7 : vector<16x128xf32>
    %c0_10 = arith.constant 0 : index
    %c0_11 = arith.constant 0 : index
    %9 = vector.load %arg4[%c0_10, %c0_11] : memref<1x128xf32, #tpu.memory_space<vmem>>, vector<1x128xf32>
    %10 = vector.broadcast %9 : vector<1x128xf32> to vector<16x128xf32>
    %11 = arith.addf %8, %10 : vector<16x128xf32>
    %cst_12 = arith.constant 0.000000e+00 : f32
    %12 = vector.broadcast %cst_12 : f32 to vector<16x128xf32>
    %13 = arith.maximumf %11, %12 : vector<16x128xf32>
    %c0_13 = arith.constant 0 : index
    %c0_14 = arith.constant 0 : index
    %14 = vector.load %arg7[%c0_13, %c0_14] : memref<1x128xf32, #tpu.memory_space<vmem>>, vector<1x128xf32>
    %15 = vector.broadcast %14 : vector<1x128xf32> to vector<16x128xf32>
    %16 = arith.mulf %5, %15 : vector<16x128xf32>
    %17 = arith.addf %13, %16 : vector<16x128xf32>
    %c0_15 = arith.constant 0 : index
    %c0_16 = arith.constant 0 : index
    %18 = vector.load %arg8[%c0_15, %c0_16] : memref<1x128xf32, #tpu.memory_space<vmem>>, vector<1x128xf32>
    %19 = vector.broadcast %18 : vector<1x128xf32> to vector<16x128xf32>
    %20 = arith.addf %17, %19 : vector<16x128xf32>
    %21 = arith.truncf %20 : vector<16x128xf32> to vector<16x128xbf16>
    %c0_17 = arith.constant 0 : index
    %c0_18 = arith.constant 0 : index
    %22 = vector.load %arg9[%c0_17, %c0_18] : memref<16x128xbf16, #tpu.memory_space<vmem>>, vector<16x128xbf16>
    tpu.vector_store %arg9[%c0_17, %c0_18], %21 {strides = array<i32>} : memref<16x128xbf16, #tpu.memory_space<vmem>>, vector<16x128xbf16>,
    return
  }
  func.func @transform_0(%arg0: i32) -> (i32, i32) {
    %c0_i32 = arith.constant 0 : i32
    %c0_i32_0 = arith.constant 0 : i32
    return %arg0, %c0_i32 : i32, i32
  }
  func.func @transform_1(%arg0: i32) -> (i32, i32) {
    %c0_i32 = arith.constant 0 : i32
    %c0_i32_0 = arith.constant 0 : i32
    %c0_i32_1 = arith.constant 0 : i32
    return %c0_i32, %c0_i32_0 : i32, i32
  }
  func.func @transform_2(%arg0: i32) -> (i32, i32) {
    %c0_i32 = arith.constant 0 : i32
    %c0_i32_0 = arith.constant 0 : i32
    %c0_i32_1 = arith.constant 0 : i32
    return %c0_i32, %c0_i32_0 : i32, i32
  }
  func.func @transform_3(%arg0: i32) -> (i32, i32) {
    %c0_i32 = arith.constant 0 : i32
    %c0_i32_0 = arith.constant 0 : i32
    %c0_i32_1 = arith.constant 0 : i32
    return %c0_i32, %c0_i32_0 : i32, i32
  }
  func.func @transform_4(%arg0: i32) -> (i32, i32) {
    %c0_i32 = arith.constant 0 : i32
    %c0_i32_0 = arith.constant 0 : i32
    return %arg0, %c0_i32 : i32, i32
  }
  func.func @transform_5(%arg0: i32) -> (i32, i32) {
    %c0_i32 = arith.constant 0 : i32
    %c0_i32_0 = arith.constant 0 : i32
    %c0_i32_1 = arith.constant 0 : i32
    return %c0_i32, %c0_i32_0 : i32, i32
  }
  func.func @transform_6(%arg0: i32) -> (i32, i32) {
    %c0_i32 = arith.constant 0 : i32
    %c0_i32_0 = arith.constant 0 : i32
    %c0_i32_1 = arith.constant 0 : i32
    return %c0_i32, %c0_i32_0 : i32, i32
  }
  func.func @transform_7(%arg0: i32) -> (i32, i32) {
    %c0_i32 = arith.constant 0 : i32
    %c0_i32_0 = arith.constant 0 : i32
    %c0_i32_1 = arith.constant 0 : i32
    return %c0_i32, %c0_i32_0 : i32, i32
  }
  func.func @transform_8(%arg0: i32) -> (i32, i32) {
    %c0_i32 = arith.constant 0 : i32
    %c0_i32_0 = arith.constant 0 : i32
    return %arg0, %c0_i32 : i32, i32
  }
}

module attributes {stable_mosaic.version = 11 : i64} {
  func.func @_resblock_kernel(%arg0: i32, %arg1: memref<16x640xbf16, #tpu.memory_space<vmem>>, %arg2: memref<640x128xbf16, #tpu.memory_space<vmem>>, %arg3: memref<1x128xf32, #tpu.memory_space<vmem>>, %arg4: memref<1x128xf32, #tpu.memory_space<vmem>>, %arg5: memref<16x128xbf16, #tpu.memory_space<vmem>>, %arg6: memref<128x128xbf16, #tpu.memory_space<vmem>>, %arg7: memref<1x128xf32, #tpu.memory_space<vmem>>, %arg8: memref<1x128xf32, #tpu.memory_space<vmem>>, %arg9: memref<16x128xbf16, #tpu.memory_space<vmem>>) attributes {dimension_semantics = [#tpu.dimension_semantics<parallel>], iteration_bounds = array<i64: 1>, scalar_prefetch = 0 : i64, scratch_operands = 0 : i64, tpu.core_type = #tpu.core_type<tc>, window_params = [{transform_indices = @transform_0, window_bounds = array<i64: 16, 640>}, {pipeline_mode = #tpu.pipeline_mode<synchronous>, transform_indices = @transform_1, window_bounds = array<i64: 640, 128>}, {pipeline_mode = #tpu.pipeline_mode<synchronous>, transform_indices = @transform_2, window_bounds = array<i64: 1, 128>}, {pipeline_mode = #tpu.pipeline_mode<synchronous>, transform_indices = @transform_3, window_bounds = array<i64: 1, 128>}, {transform_indices = @transform_4, window_bounds = array<i64: 16, 128>}, {pipeline_mode = #tpu.pipeline_mode<synchronous>, transform_indices = @transform_5, window_bounds = array<i64: 128, 128>}, {pipeline_mode = #tpu.pipeline_mode<synchronous>, transform_indices = @transform_6, window_bounds = array<i64: 1, 128>}, {pipeline_mode = #tpu.pipeline_mode<synchronous>, transform_indices = @transform_7, window_bounds = array<i64: 1, 128>}, {transform_indices = @transform_8, window_bounds = array<i64: 16, 128>}]} {
    %c0 = arith.constant 0 : index
    %c0_0 = arith.constant 0 : index
    %0 = vector.load %arg1[%c0, %c0_0] : memref<16x640xbf16, #tpu.memory_space<vmem>>, vector<16x640xbf16>
    %c0_1 = arith.constant 0 : index
    %c0_2 = arith.constant 0 : index
    %1 = vector.load %arg2[%c0_1, %c0_2] : memref<640x128xbf16, #tpu.memory_space<vmem>>, vector<640x128xbf16>
    %cst = arith.constant dense<0.000000e+00> : vector<16x128xf32>
    %2 = tpu.matmul %0, %1, %cst {dimension_numbers = #tpu.dot_dimension_numbers<[1], [0], [0], [1], [0, 0, 1, 1], [], []>} : vector<16x640xbf16>, vector<640x128xbf16>, vector<16x128xf32> -> vector<16x128xf32>
    %c0_3 = arith.constant 0 : index
    %c0_4 = arith.constant 0 : index
    %3 = vector.load %arg5[%c0_3, %c0_4] : memref<16x128xbf16, #tpu.memory_space<vmem>>, vector<16x128xbf16>
    %c0_5 = arith.constant 0 : index
    %c0_6 = arith.constant 0 : index
    %4 = vector.load %arg6[%c0_5, %c0_6] : memref<128x128xbf16, #tpu.memory_space<vmem>>, vector<128x128xbf16>
    %cst_7 = arith.constant dense<0.000000e+00> : vector<16x128xf32>
    %5 = tpu.matmul %3, %4, %cst_7 {dimension_numbers = #tpu.dot_dimension_numbers<[1], [0], [0], [1], [0, 0, 1, 1], [], []>} : vector<16x128xbf16>, vector<128x128xbf16>, vector<16x128xf32> -> vector<16x128xf32>
    %c0_8 = arith.constant 0 : index
    %c0_9 = arith.constant 0 : index
    %6 = vector.load %arg3[%c0_8, %c0_9] : memref<1x128xf32, #tpu.memory_space<vmem>>, vector<1x128xf32>
    %7 = vector.broadcast %6 : vector<1x128xf32> to vector<16x128xf32>
    %8 = arith.mulf %2, %7 : vector<16x128xf32>
    %c0_10 = arith.constant 0 : index
    %c0_11 = arith.constant 0 : index
    %9 = vector.load %arg4[%c0_10, %c0_11] : memref<1x128xf32, #tpu.memory_space<vmem>>, vector<1x128xf32>
    %10 = vector.broadcast %9 : vector<1x128xf32> to vector<16x128xf32>
    %11 = arith.addf %8, %10 : vector<16x128xf32>
    %cst_12 = arith.constant 0.000000e+00 : f32
    %12 = vector.broadcast %cst_12 : f32 to vector<16x128xf32>
    %13 = arith.maximumf %11, %12 : vector<16x128xf32>
    %c0_13 = arith.constant 0 : index
    %c0_14 = arith.constant 0 : index
    %14 = vector.load %arg7[%c0_13, %c0_14] : memref<1x128xf32, #tpu.memory_space<vmem>>, vector<1x128xf32>
    %15 = vector.broadcast %14 : vector<1x128xf32> to vector<16x128xf32>
    %16 = arith.mulf %5, %15 : vector<16x128xf32>
    %17 = arith.addf %13, %16 : vector<16x128xf32>
    %c0_15 = arith.constant 0 : index
    %c0_16 = arith.constant 0 : index
    %18 = vector.load %arg8[%c0_15, %c0_16] : memref<1x128xf32, #tpu.memory_space<vmem>>, vector<1x128xf32>
    %19 = vector.broadcast %18 : vector<1x128xf32> to vector<16x128xf32>
    %20 = arith.addf %17, %19 : vector<16x128xf32>
    %21 = arith.truncf %20 : vector<16x128xf32> to vector<16x128xbf16>
    %c0_17 = arith.constant 0 : index
    %c0_18 = arith.constant 0 : index
    %22 = vector.load %arg9[%c0_17, %c0_18] : memref<16x128xbf16, #tpu.memory_space<vmem>>, vector<16x128xbf16>
    tpu.vector_store %arg9[%c0_17, %c0_18], %21 {strides = array<i32>} : memref<16x128xbf16, #tpu.memory_space<vmem>>, vector<16x128xbf16>,
    return
  }
  func.func @transform_0(%arg0: i32) -> (i32, i32) {
    %c0_i32 = arith.constant 0 : i32
    %c0_i32_0 = arith.constant 0 : i32
    return %arg0, %c0_i32 : i32, i32
  }
  func.func @transform_1(%arg0: i32) -> (i32, i32) {
    %c0_i32 = arith.constant 0 : i32
    %c0_i32_0 = arith.constant 0 : i32
    %c0_i32_1 = arith.constant 0 : i32
    return %c0_i32, %c0_i32_0 : i32, i32
  }
  func.func @transform_2(%arg0: i32) -> (i32, i32) {
    %c0_i32 = arith.constant 0 : i32
    %c0_i32_0 = arith.constant 0 : i32
    %c0_i32_1 = arith.constant 0 : i32
    return %c0_i32, %c0_i32_0 : i32, i32
  }
  func.func @transform_3(%arg0: i32) -> (i32, i32) {
    %c0_i32 = arith.constant 0 : i32
    %c0_i32_0 = arith.constant 0 : i32
    %c0_i32_1 = arith.constant 0 : i32
    return %c0_i32, %c0_i32_0 : i32, i32
  }
  func.func @transform_4(%arg0: i32) -> (i32, i32) {
    %c0_i32 = arith.constant 0 : i32
    %c0_i32_0 = arith.constant 0 : i32
    return %arg0, %c0_i32 : i32, i32
  }
  func.func @transform_5(%arg0: i32) -> (i32, i32) {
    %c0_i32 = arith.constant 0 : i32
    %c0_i32_0 = arith.constant 0 : i32
    %c0_i32_1 = arith.constant 0 : i32
    return %c0_i32, %c0_i32_0 : i32, i32
  }
  func.func @transform_6(%arg0: i32) -> (i32, i32) {
    %c0_i32 = arith.constant 0 : i32
    %c0_i32_0 = arith.constant 0 : i32
    %c0_i32_1 = arith.constant 0 : i32
    return %c0_i32, %c0_i32_0 : i32, i32
  }
  func.func @transform_7(%arg0: i32) -> (i32, i32) {
    %c0_i32 = arith.constant 0 : i32
    %c0_i32_0 = arith.constant 0 : i32
    %c0_i32_1 = arith.constant 0 : i32
    return %c0_i32, %c0_i32_0 : i32, i32
  }
  func.func @transform_8(%arg0: i32) -> (i32, i32) {
    %c0_i32 = arith.constant 0 : i32
    %c0_i32_0 = arith.constant 0 : i32
    return %arg0, %c0_i32 : i32, i32
  }
}

module attributes {stable_mosaic.version = 11 : i64} {
  func.func @_conv_kernel(%arg0: i32, %arg1: memref<16x512xbf16, #tpu.memory_space<vmem>>, %arg2: memref<512x256xbf16, #tpu.memory_space<vmem>>, %arg3: memref<1x256xf32, #tpu.memory_space<vmem>>, %arg4: memref<1x256xf32, #tpu.memory_space<vmem>>, %arg5: memref<16x256xbf16, #tpu.memory_space<vmem>>) attributes {dimension_semantics = [#tpu.dimension_semantics<parallel>], iteration_bounds = array<i64: 1>, scalar_prefetch = 0 : i64, scratch_operands = 0 : i64, tpu.core_type = #tpu.core_type<tc>, window_params = [{transform_indices = @transform_0, window_bounds = array<i64: 16, 512>}, {pipeline_mode = #tpu.pipeline_mode<synchronous>, transform_indices = @transform_1, window_bounds = array<i64: 512, 256>}, {pipeline_mode = #tpu.pipeline_mode<synchronous>, transform_indices = @transform_2, window_bounds = array<i64: 1, 256>}, {pipeline_mode = #tpu.pipeline_mode<synchronous>, transform_indices = @transform_3, window_bounds = array<i64: 1, 256>}, {transform_indices = @transform_4, window_bounds = array<i64: 16, 256>}]} {
    %c0 = arith.constant 0 : index
    %c0_0 = arith.constant 0 : index
    %0 = vector.load %arg1[%c0, %c0_0] : memref<16x512xbf16, #tpu.memory_space<vmem>>, vector<16x512xbf16>
    %c0_1 = arith.constant 0 : index
    %c0_2 = arith.constant 0 : index
    %1 = vector.load %arg2[%c0_1, %c0_2] : memref<512x256xbf16, #tpu.memory_space<vmem>>, vector<512x256xbf16>
    %cst = arith.constant dense<0.000000e+00> : vector<16x256xf32>
    %2 = tpu.matmul %0, %1, %cst {dimension_numbers = #tpu.dot_dimension_numbers<[1], [0], [0], [1], [0, 0, 1, 1], [], []>} : vector<16x512xbf16>, vector<512x256xbf16>, vector<16x256xf32> -> vector<16x256xf32>
    %c0_3 = arith.constant 0 : index
    %c0_4 = arith.constant 0 : index
    %3 = vector.load %arg3[%c0_3, %c0_4] : memref<1x256xf32, #tpu.memory_space<vmem>>, vector<1x256xf32>
    %4 = vector.broadcast %3 : vector<1x256xf32> to vector<16x256xf32>
    %5 = arith.mulf %2, %4 : vector<16x256xf32>
    %c0_5 = arith.constant 0 : index
    %c0_6 = arith.constant 0 : index
    %6 = vector.load %arg4[%c0_5, %c0_6] : memref<1x256xf32, #tpu.memory_space<vmem>>, vector<1x256xf32>
    %7 = vector.broadcast %6 : vector<1x256xf32> to vector<16x256xf32>
    %8 = arith.addf %5, %7 : vector<16x256xf32>
    %cst_7 = arith.constant 0.000000e+00 : f32
    %9 = vector.broadcast %cst_7 : f32 to vector<16x256xf32>
    %10 = arith.maximumf %8, %9 : vector<16x256xf32>
    %11 = arith.truncf %10 : vector<16x256xf32> to vector<16x256xbf16>
    %c0_8 = arith.constant 0 : index
    %c0_9 = arith.constant 0 : index
    %12 = vector.load %arg5[%c0_8, %c0_9] : memref<16x256xbf16, #tpu.memory_space<vmem>>, vector<16x256xbf16>
    tpu.vector_store %arg5[%c0_8, %c0_9], %11 {strides = array<i32>} : memref<16x256xbf16, #tpu.memory_space<vmem>>, vector<16x256xbf16>,
    return
  }
  func.func @transform_0(%arg0: i32) -> (i32, i32) {
    %c0_i32 = arith.constant 0 : i32
    %c0_i32_0 = arith.constant 0 : i32
    return %arg0, %c0_i32 : i32, i32
  }
  func.func @transform_1(%arg0: i32) -> (i32, i32) {
    %c0_i32 = arith.constant 0 : i32
    %c0_i32_0 = arith.constant 0 : i32
    %c0_i32_1 = arith.constant 0 : i32
    return %c0_i32, %c0_i32_0 : i32, i32
  }
  func.func @transform_2(%arg0: i32) -> (i32, i32) {
    %c0_i32 = arith.constant 0 : i32
    %c0_i32_0 = arith.constant 0 : i32
    %c0_i32_1 = arith.constant 0 : i32
    return %c0_i32, %c0_i32_0 : i32, i32
  }
  func.func @transform_3(%arg0: i32) -> (i32, i32) {
    %c0_i32 = arith.constant 0 : i32
    %c0_i32_0 = arith.constant 0 : i32
    %c0_i32_1 = arith.constant 0 : i32
    return %c0_i32, %c0_i32_0 : i32, i32
  }
  func.func @transform_4(%arg0: i32) -> (i32, i32) {
    %c0_i32 = arith.constant 0 : i32
    %c0_i32_0 = arith.constant 0 : i32
    return %arg0, %c0_i32 : i32, i32
  }
}

module attributes {stable_mosaic.version = 11 : i64} {
  func.func @_concat_conv_kernel(%arg0: i32, %arg1: memref<16x256xbf16, #tpu.memory_space<vmem>>, %arg2: memref<256x128xbf16, #tpu.memory_space<vmem>>, %arg3: memref<16x256xbf16, #tpu.memory_space<vmem>>, %arg4: memref<256x128xbf16, #tpu.memory_space<vmem>>, %arg5: memref<1x128xf32, #tpu.memory_space<vmem>>, %arg6: memref<1x128xf32, #tpu.memory_space<vmem>>, %arg7: memref<16x128xbf16, #tpu.memory_space<vmem>>) attributes {dimension_semantics = [#tpu.dimension_semantics<parallel>], iteration_bounds = array<i64: 2>, scalar_prefetch = 0 : i64, scratch_operands = 0 : i64, tpu.core_type = #tpu.core_type<tc>, window_params = [{transform_indices = @transform_0, window_bounds = array<i64: 16, 256>}, {pipeline_mode = #tpu.pipeline_mode<synchronous>, transform_indices = @transform_1, window_bounds = array<i64: 256, 128>}, {transform_indices = @transform_2, window_bounds = array<i64: 16, 256>}, {pipeline_mode = #tpu.pipeline_mode<synchronous>, transform_indices = @transform_3, window_bounds = array<i64: 256, 128>}, {pipeline_mode = #tpu.pipeline_mode<synchronous>, transform_indices = @transform_4, window_bounds = array<i64: 1, 128>}, {pipeline_mode = #tpu.pipeline_mode<synchronous>, transform_indices = @transform_5, window_bounds = array<i64: 1, 128>}, {transform_indices = @transform_6, window_bounds = array<i64: 16, 128>}]} {
    %c0 = arith.constant 0 : index
    %c0_0 = arith.constant 0 : index
    %0 = vector.load %arg1[%c0, %c0_0] : memref<16x256xbf16, #tpu.memory_space<vmem>>, vector<16x256xbf16>
    %c0_1 = arith.constant 0 : index
    %c0_2 = arith.constant 0 : index
    %1 = vector.load %arg2[%c0_1, %c0_2] : memref<256x128xbf16, #tpu.memory_space<vmem>>, vector<256x128xbf16>
    %cst = arith.constant dense<0.000000e+00> : vector<16x128xf32>
    %2 = tpu.matmul %0, %1, %cst {dimension_numbers = #tpu.dot_dimension_numbers<[1], [0], [0], [1], [0, 0, 1, 1], [], []>} : vector<16x256xbf16>, vector<256x128xbf16>, vector<16x128xf32> -> vector<16x128xf32>
    %c0_3 = arith.constant 0 : index
    %c0_4 = arith.constant 0 : index
    %3 = vector.load %arg3[%c0_3, %c0_4] : memref<16x256xbf16, #tpu.memory_space<vmem>>, vector<16x256xbf16>
    %c0_5 = arith.constant 0 : index
    %c0_6 = arith.constant 0 : index
    %4 = vector.load %arg4[%c0_5, %c0_6] : memref<256x128xbf16, #tpu.memory_space<vmem>>, vector<256x128xbf16>
    %cst_7 = arith.constant dense<0.000000e+00> : vector<16x128xf32>
    %5 = tpu.matmul %3, %4, %cst_7 {dimension_numbers = #tpu.dot_dimension_numbers<[1], [0], [0], [1], [0, 0, 1, 1], [], []>} : vector<16x256xbf16>, vector<256x128xbf16>, vector<16x128xf32> -> vector<16x128xf32>
    %6 = arith.addf %2, %5 : vector<16x128xf32>
    %c0_8 = arith.constant 0 : index
    %c0_9 = arith.constant 0 : index
    %7 = vector.load %arg5[%c0_8, %c0_9] : memref<1x128xf32, #tpu.memory_space<vmem>>, vector<1x128xf32>
    %8 = vector.broadcast %7 : vector<1x128xf32> to vector<16x128xf32>
    %9 = arith.mulf %6, %8 : vector<16x128xf32>
    %c0_10 = arith.constant 0 : index
    %c0_11 = arith.constant 0 : index
    %10 = vector.load %arg6[%c0_10, %c0_11] : memref<1x128xf32, #tpu.memory_space<vmem>>, vector<1x128xf32>
    %11 = vector.broadcast %10 : vector<1x128xf32> to vector<16x128xf32>
    %12 = arith.addf %9, %11 : vector<16x128xf32>
    %cst_12 = arith.constant 0.000000e+00 : f32
    %13 = vector.broadcast %cst_12 : f32 to vector<16x128xf32>
    %14 = arith.maximumf %12, %13 : vector<16x128xf32>
    %15 = arith.truncf %14 : vector<16x128xf32> to vector<16x128xbf16>
    %c0_13 = arith.constant 0 : index
    %c0_14 = arith.constant 0 : index
    %16 = vector.load %arg7[%c0_13, %c0_14] : memref<16x128xbf16, #tpu.memory_space<vmem>>, vector<16x128xbf16>
    tpu.vector_store %arg7[%c0_13, %c0_14], %15 {strides = array<i32>} : memref<16x128xbf16, #tpu.memory_space<vmem>>, vector<16x128xbf16>,
    return
  }
  func.func @transform_0(%arg0: i32) -> (i32, i32) {
    %c0_i32 = arith.constant 0 : i32
    %c0_i32_0 = arith.constant 0 : i32
    return %arg0, %c0_i32 : i32, i32
  }
  func.func @transform_1(%arg0: i32) -> (i32, i32) {
    %c0_i32 = arith.constant 0 : i32
    %c0_i32_0 = arith.constant 0 : i32
    %c0_i32_1 = arith.constant 0 : i32
    return %c0_i32, %c0_i32_0 : i32, i32
  }
  func.func @transform_2(%arg0: i32) -> (i32, i32) {
    %c0_i32 = arith.constant 0 : i32
    %c0_i32_0 = arith.constant 0 : i32
    return %arg0, %c0_i32 : i32, i32
  }
  func.func @transform_3(%arg0: i32) -> (i32, i32) {
    %c0_i32 = arith.constant 0 : i32
    %c0_i32_0 = arith.constant 0 : i32
    %c0_i32_1 = arith.constant 0 : i32
    return %c0_i32, %c0_i32_0 : i32, i32
  }
  func.func @transform_4(%arg0: i32) -> (i32, i32) {
    %c0_i32 = arith.constant 0 : i32
    %c0_i32_0 = arith.constant 0 : i32
    %c0_i32_1 = arith.constant 0 : i32
    return %c0_i32, %c0_i32_0 : i32, i32
  }
  func.func @transform_5(%arg0: i32) -> (i32, i32) {
    %c0_i32 = arith.constant 0 : i32
    %c0_i32_0 = arith.constant 0 : i32
    %c0_i32_1 = arith.constant 0 : i32
    return %c0_i32, %c0_i32_0 : i32, i32
  }
  func.func @transform_6(%arg0: i32) -> (i32, i32) {
    %c0_i32 = arith.constant 0 : i32
    %c0_i32_0 = arith.constant 0 : i32
    return %arg0, %c0_i32 : i32, i32
  }
}

module attributes {stable_mosaic.version = 11 : i64} {
  func.func @_concat_conv_kernel(%arg0: i32, %arg1: memref<64x512xbf16, #tpu.memory_space<vmem>>, %arg2: memref<512x128xbf16, #tpu.memory_space<vmem>>, %arg3: memref<64x512xbf16, #tpu.memory_space<vmem>>, %arg4: memref<512x128xbf16, #tpu.memory_space<vmem>>, %arg5: memref<1x128xf32, #tpu.memory_space<vmem>>, %arg6: memref<1x128xf32, #tpu.memory_space<vmem>>, %arg7: memref<64x128xbf16, #tpu.memory_space<vmem>>) attributes {dimension_semantics = [#tpu.dimension_semantics<parallel>], iteration_bounds = array<i64: 2>, scalar_prefetch = 0 : i64, scratch_operands = 0 : i64, tpu.core_type = #tpu.core_type<tc>, window_params = [{transform_indices = @transform_0, window_bounds = array<i64: 64, 512>}, {pipeline_mode = #tpu.pipeline_mode<synchronous>, transform_indices = @transform_1, window_bounds = array<i64: 512, 128>}, {transform_indices = @transform_2, window_bounds = array<i64: 64, 512>}, {pipeline_mode = #tpu.pipeline_mode<synchronous>, transform_indices = @transform_3, window_bounds = array<i64: 512, 128>}, {pipeline_mode = #tpu.pipeline_mode<synchronous>, transform_indices = @transform_4, window_bounds = array<i64: 1, 128>}, {pipeline_mode = #tpu.pipeline_mode<synchronous>, transform_indices = @transform_5, window_bounds = array<i64: 1, 128>}, {transform_indices = @transform_6, window_bounds = array<i64: 64, 128>}]} {
    %c0 = arith.constant 0 : index
    %c0_0 = arith.constant 0 : index
    %0 = vector.load %arg1[%c0, %c0_0] : memref<64x512xbf16, #tpu.memory_space<vmem>>, vector<64x512xbf16>
    %c0_1 = arith.constant 0 : index
    %c0_2 = arith.constant 0 : index
    %1 = vector.load %arg2[%c0_1, %c0_2] : memref<512x128xbf16, #tpu.memory_space<vmem>>, vector<512x128xbf16>
    %cst = arith.constant dense<0.000000e+00> : vector<64x128xf32>
    %2 = tpu.matmul %0, %1, %cst {dimension_numbers = #tpu.dot_dimension_numbers<[1], [0], [0], [1], [0, 0, 1, 1], [], []>} : vector<64x512xbf16>, vector<512x128xbf16>, vector<64x128xf32> -> vector<64x128xf32>
    %c0_3 = arith.constant 0 : index
    %c0_4 = arith.constant 0 : index
    %3 = vector.load %arg3[%c0_3, %c0_4] : memref<64x512xbf16, #tpu.memory_space<vmem>>, vector<64x512xbf16>
    %c0_5 = arith.constant 0 : index
    %c0_6 = arith.constant 0 : index
    %4 = vector.load %arg4[%c0_5, %c0_6] : memref<512x128xbf16, #tpu.memory_space<vmem>>, vector<512x128xbf16>
    %cst_7 = arith.constant dense<0.000000e+00> : vector<64x128xf32>
    %5 = tpu.matmul %3, %4, %cst_7 {dimension_numbers = #tpu.dot_dimension_numbers<[1], [0], [0], [1], [0, 0, 1, 1], [], []>} : vector<64x512xbf16>, vector<512x128xbf16>, vector<64x128xf32> -> vector<64x128xf32>
    %6 = arith.addf %2, %5 : vector<64x128xf32>
    %c0_8 = arith.constant 0 : index
    %c0_9 = arith.constant 0 : index
    %7 = vector.load %arg5[%c0_8, %c0_9] : memref<1x128xf32, #tpu.memory_space<vmem>>, vector<1x128xf32>
    %8 = vector.broadcast %7 : vector<1x128xf32> to vector<64x128xf32>
    %9 = arith.mulf %6, %8 : vector<64x128xf32>
    %c0_10 = arith.constant 0 : index
    %c0_11 = arith.constant 0 : index
    %10 = vector.load %arg6[%c0_10, %c0_11] : memref<1x128xf32, #tpu.memory_space<vmem>>, vector<1x128xf32>
    %11 = vector.broadcast %10 : vector<1x128xf32> to vector<64x128xf32>
    %12 = arith.addf %9, %11 : vector<64x128xf32>
    %cst_12 = arith.constant 0.000000e+00 : f32
    %13 = vector.broadcast %cst_12 : f32 to vector<64x128xf32>
    %14 = arith.maximumf %12, %13 : vector<64x128xf32>
    %15 = arith.truncf %14 : vector<64x128xf32> to vector<64x128xbf16>
    %c0_13 = arith.constant 0 : index
    %c0_14 = arith.constant 0 : index
    %16 = vector.load %arg7[%c0_13, %c0_14] : memref<64x128xbf16, #tpu.memory_space<vmem>>, vector<64x128xbf16>
    tpu.vector_store %arg7[%c0_13, %c0_14], %15 {strides = array<i32>} : memref<64x128xbf16, #tpu.memory_space<vmem>>, vector<64x128xbf16>,
    return
  }
  func.func @transform_0(%arg0: i32) -> (i32, i32) {
    %c0_i32 = arith.constant 0 : i32
    %c0_i32_0 = arith.constant 0 : i32
    return %arg0, %c0_i32 : i32, i32
  }
  func.func @transform_1(%arg0: i32) -> (i32, i32) {
    %c0_i32 = arith.constant 0 : i32
    %c0_i32_0 = arith.constant 0 : i32
    %c0_i32_1 = arith.constant 0 : i32
    return %c0_i32, %c0_i32_0 : i32, i32
  }
  func.func @transform_2(%arg0: i32) -> (i32, i32) {
    %c0_i32 = arith.constant 0 : i32
    %c0_i32_0 = arith.constant 0 : i32
    return %arg0, %c0_i32 : i32, i32
  }
  func.func @transform_3(%arg0: i32) -> (i32, i32) {
    %c0_i32 = arith.constant 0 : i32
    %c0_i32_0 = arith.constant 0 : i32
    %c0_i32_1 = arith.constant 0 : i32
    return %c0_i32, %c0_i32_0 : i32, i32
  }
  func.func @transform_4(%arg0: i32) -> (i32, i32) {
    %c0_i32 = arith.constant 0 : i32
    %c0_i32_0 = arith.constant 0 : i32
    %c0_i32_1 = arith.constant 0 : i32
    return %c0_i32, %c0_i32_0 : i32, i32
  }
  func.func @transform_5(%arg0: i32) -> (i32, i32) {
    %c0_i32 = arith.constant 0 : i32
    %c0_i32_0 = arith.constant 0 : i32
    %c0_i32_1 = arith.constant 0 : i32
    return %c0_i32, %c0_i32_0 : i32, i32
  }
  func.func @transform_6(%arg0: i32) -> (i32, i32) {
    %c0_i32 = arith.constant 0 : i32
    %c0_i32_0 = arith.constant 0 : i32
    return %arg0, %c0_i32 : i32, i32
  }
}

</mosaic_0001>

<llo_original>
// kernel: fcn_forward.6
$region0: #{fcn_forward.6}
  #allocation0 [shape = 'u32[]', space=smem, size = 0x4, offset = 0x4, fixed_abs, tag = 'smem constant byte address 0x4 - core index']
  #allocation1 [shape = 'u32[144,128]{1,0:T(1,128)}', space=vmem, size = 0x12000, scoped, tag = 'internal scratch']
  %s0 = inlined_call_operand.vmem [shape: bf16[128,256], index: 0, kind: input, shape index: {}]
  %s1 = inlined_call_operand.vmem [shape: bf16[256,128], index: 1, kind: input, shape index: {}]
  %s2 = inlined_call_operand.vmem [shape: f32[1,128], index: 2, kind: input, shape index: {}]
  %s3 = inlined_call_operand.vmem [shape: f32[1,128], index: 3, kind: input, shape index: {}]
  %s4 = inlined_call_operand.vmem [shape: bf16[128,128], index: 4, kind: output, shape index: {}]
  %s5 = sld [smem:[#allocation0]]
  $region49: #{fcn_forward.6} parent=0
    _
  %s7 = ssub.s32 1, %s5
  %s8 = scalar_select 0, %s7, %s5
  loop: start=0, step=1, limit=4
  $region2: #{fcn_forward.6} parent=0 // loop_pre_header
    _
  $region3: #{fcn_forward.6} parent=0 // loop_header
    %s10 = sphi 0, %s14
    %p11 = scmp.ge.s32.totalorder %s10, 4
    %s20 = sphi 0, %s22
    %s23 = sphi 0, %s20
    %s24 = sphi 0, %s23
    %s40 = sphi 0, %s24
    %s44 = sphi 0, %s44
    %s46 = sphi 0, %s44
    %s47 = sphi 0, %s46
    %s61 = sphi 0, %s47
    %s65 = sphi 0, %s65
    %s67 = sphi 0, %s65
    %s68 = sphi 0, %s67
    %s82 = sphi 0, %s68
    %s86 = sphi 0, %s86
    %s88 = sphi 0, %s86
    %s89 = sphi 0, %s88
    %s103 = sphi 0, %s89
    %s109 = sphi 0, %s111
    %s112 = sphi 0, %s109
    %s113 = sphi 0, %s112
    %s129 = sphi 0, %s113
  $region4: #{fcn_forward.6} parent=0 // loop_header_branch
    %13 = sbr.rel (%p11) target = $region8
  $region5: #{fcn_forward.6} parent=0 // loop_body
    %s15 = ssub.s32 %s10, 1
    %s16 = ssub.s32 %s10, 2
    %s17 = sadd.s32 %s10, 1
    %s18 = ssub.s32 %s10, %s17
    %p19 = scmp.eq.s32.totalorder %s18, 0
    %s21 = sadd.s32 %s20, 1
    %s22 = scalar_select %p19, %s20, %s21
    %p25 = pneg %p19
    %p26 = scmp.eq.s32.totalorder %s10, 1
    %p27 = por %p25, %p26
    %p28 = scmp.ne.s32.totalorder %s20, %s23
    %p29 = scmp.eq.s32.totalorder %s10, 0
    %p30 = por %p28, %p29
    %p31 = scmp.ne.s32.totalorder %s20, %s23
    %p32 = scmp.eq.s32.totalorder %s15, 1
    %p33 = por %p31, %p32
    %p34 = scmp.ne.s32.totalorder %s23, %s24
    %p35 = scmp.eq.s32.totalorder %s15, 0
    %p36 = por %p34, %p35
    %p37 = scmp.ne.s32.totalorder %s23, %s24
    %p38 = scmp.eq.s32.totalorder %s16, 1
    %p39 = por %p37, %p38
    %p41 = scmp.ne.s32.totalorder %s24, %s40
    %p42 = scmp.eq.s32.totalorder %s16, 0
    %p43 = por %p41, %p42
    %s45 = sadd.s32 %s44, 1
    %p48 = scmp.eq.s32.totalorder %s10, 1
    %p49 = scmp.ne.s32.totalorder %s44, %s46
    %p50 = scmp.eq.s32.totalorder %s10, 0
    %p51 = por %p49, %p50
    %p52 = scmp.ne.s32.totalorder %s44, %s46
    %p53 = scmp.eq.s32.totalorder %s15, 1
    %p54 = por %p52, %p53
    %p55 = scmp.ne.s32.totalorder %s46, %s47
    %p56 = scmp.eq.s32.totalorder %s15, 0
    %p57 = por %p55, %p56
    %p58 = scmp.ne.s32.totalorder %s46, %s47
    %p59 = scmp.eq.s32.totalorder %s16, 1
    %p60 = por %p58, %p59
    %p62 = scmp.ne.s32.totalorder %s47, %s61
    %p63 = scmp.eq.s32.totalorder %s16, 0
    %p64 = por %p62, %p63
    %s66 = sadd.s32 %s65, 1
    %p69 = scmp.eq.s32.totalorder %s10, 1
    %p70 = scmp.ne.s32.totalorder %s65, %s67
    %p71 = scmp.eq.s32.totalorder %s10, 0
    %p72 = por %p70, %p71
    %p73 = scmp.ne.s32.totalorder %s65, %s67
    %p74 = scmp.eq.s32.totalorder %s15, 1
    %p75 = por %p73, %p74
    %p76 = scmp.ne.s32.totalorder %s67, %s68
    %p77 = scmp.eq.s32.totalorder %s15, 0
    %p78 = por %p76, %p77
    %p79 = scmp.ne.s32.totalorder %s67, %s68
    %p80 = scmp.eq.s32.totalorder %s16, 1
    %p81 = por %p79, %p80
    %p83 = scmp.ne.s32.totalorder %s68, %s82
    %p84 = scmp.eq.s32.totalorder %s16, 0
    %p85 = por %p83, %p84
    %s87 = sadd.s32 %s86, 1
    %p90 = scmp.eq.s32.totalorder %s10, 1
    %p91 = scmp.ne.s32.totalorder %s86, %s88
    %p92 = scmp.eq.s32.totalorder %s10, 0
    %p93 = por %p91, %p92
    %p94 = scmp.ne.s32.totalorder %s86, %s88
    %p95 = scmp.eq.s32.totalorder %s15, 1
    %p96 = por %p94, %p95
    %p97 = scmp.ne.s32.totalorder %s88, %s89
    %p98 = scmp.eq.s32.totalorder %s15, 0
    %p99 = por %p97, %p98
    %p100 = scmp.ne.s32.totalorder %s88, %s89
    %p101 = scmp.eq.s32.totalorder %s16, 1
    %p102 = por %p100, %p101
    %p104 = scmp.ne.s32.totalorder %s89, %s103
    %p105 = scmp.eq.s32.totalorder %s16, 0
    %p106 = por %p104, %p105
    %s107 = ssub.s32 %s10, %s17
    %p108 = scmp.eq.s32.totalorder %s107, 0
    %s110 = sadd.s32 %s109, 1
    %s111 = scalar_select %p108, %s109, %s110
    %p114 = pneg %p108
    %p115 = scmp.eq.s32.totalorder %s10, 1
    %p116 = por %p114, %p115
    %p117 = scmp.ne.s32.totalorder %s109, %s112
    %p118 = scmp.eq.s32.totalorder %s10, 0
    %p119 = por %p117, %p118
    %p120 = scmp.ne.s32.totalorder %s109, %s112
    %p121 = scmp.eq.s32.totalorder %s15, 1
    %p122 = por %p120, %p121
    %p123 = scmp.ne.s32.totalorder %s112, %s113
    %p124 = scmp.eq.s32.totalorder %s15, 0
    %p125 = por %p123, %p124
    %p126 = scmp.ne.s32.totalorder %s112, %s113
    %p127 = scmp.eq.s32.totalorder %s16, 1
    %p128 = por %p126, %p127
    %p130 = scmp.ne.s32.totalorder %s113, %s129
    %p131 = scmp.eq.s32.totalorder %s16, 0
    %p132 = por %p130, %p131
    %p133 = scmp.le.s32.totalorder 1, %s10
    %p134 = scmp.lt.s32.totalorder %s10, 3
    %p135 = pnand %p133, %p134
    %p136 = pneg %p135
    // Predicated region
    $region9: #{fcn_forward.6} parent=5 // pred_check
      _
    $region10: #{fcn_forward.6} parent=5 // pred_check_branch
      %138 = sbr.rel (%p135) target = $region12
    $region11: #{fcn_forward.6} parent=5 // pred_region
      %s139 = ssub.s32 %s10, 1
      // Predicated region
      $region13: #{fcn_forward.6} parent=11 // pred_check
        %p140 = pneg %p57
      $region14: #{fcn_forward.6} parent=11 // pred_check_branch
        %142 = sbr.rel (%p140) target = $region16
      $region15: #{fcn_forward.6} parent=11 // pred_region
        _
      $region16: #{fcn_forward.6} parent=11 // pred_fallthru
        _
      // Predicated region
      $region17: #{fcn_forward.6} parent=11 // pred_check
        %p143 = pneg %p78
      $region18: #{fcn_forward.6} parent=11 // pred_check_branch
        %145 = sbr.rel (%p143) target = $region20
      $region19: #{fcn_forward.6} parent=11 // pred_region
        _
      $region20: #{fcn_forward.6} parent=11 // pred_fallthru
        _
      // Predicated region
      $region21: #{fcn_forward.6} parent=11 // pred_check
        %p146 = pneg %p99
      $region22: #{fcn_forward.6} parent=11 // pred_check_branch
        %148 = sbr.rel (%p146) target = $region24
      $region23: #{fcn_forward.6} parent=11 // pred_region
        _
      $region24: #{fcn_forward.6} parent=11 // pred_fallthru
        _
    $region12: #{fcn_forward.6} parent=5 // pred_fallthru
      _
    %p149 = scmp.lt.s32.totalorder %s10, 2
    // Predicated region
    $region25: #{fcn_forward.6} parent=5 // pred_check
      %p150 = pneg %p149
    $region26: #{fcn_forward.6} parent=5 // pred_check_branch
      %152 = sbr.rel (%p150) target = $region28
    $region27: #{fcn_forward.6} parent=5 // pred_region
      // Predicated region
      $region29: #{fcn_forward.6} parent=27 // pred_check
        %p153 = pneg %p30
      $region30: #{fcn_forward.6} parent=27 // pred_check_branch
        %155 = sbr.rel (%p153) target = $region32
      $region31: #{fcn_forward.6} parent=27 // pred_region
        %s156 = smul.u32 8, %s10
        %p157 = scmp.lt.s32.totalorder %s156, 15
        %s158 = scalar_select %p157, %s156, 15
        %s159 = smul.addr %s158, 2
        %s160 = smul.addr %s159, 4
        %s161 = scalar_lea.vmem %s0, %s160
        %s162 = smul.u32 8, %s10
      $region32: #{fcn_forward.6} parent=27 // pred_fallthru
        _
    $region28: #{fcn_forward.6} parent=5 // pred_fallthru
      _
    %p163 = scmp.le.s32.totalorder 1, %s10
    %p164 = scmp.lt.s32.totalorder %s10, 3
    %p165 = pnand %p163, %p164
    %p166 = pneg %p165
    // Predicated region
    $region33: #{fcn_forward.6} parent=5 // pred_check
      _
    $region34: #{fcn_forward.6} parent=5 // pred_check_branch
      %168 = sbr.rel (%p165) target = $region36
    $region35: #{fcn_forward.6} parent=5 // pred_region
      %s169 = ssub.s32 %s10, 1
      %s170 = smul.u32 8, %s15
      %p171 = scmp.lt.s32.totalorder %s170, 15
      %s172 = scalar_select %p171, %s170, 15
      %s173 = smul.addr %s172, 2
      %s174 = smul.addr %s173, 4
      %s175 = scalar_lea.vmem %s0, %s174
      %p176 = pneg %p36
      %p177 = pneg %p33
      %p178 = pneg %p57
      %p179 = pneg %p54
      %p180 = pneg %p78
      %p181 = pneg %p75
      %p182 = pneg %p99
      %p183 = pneg %p96
      %p184 = pneg %p125
      %p185 = pneg %p122
      %s186 = smul.u32 8, %s15
      %p187 = scmp.lt.s32.totalorder %s186, 15
      %s188 = scalar_select %p187, %s186, 15
      %s189 = smul.addr %s188, 4
      %s190 = scalar_lea.vmem %s4, %s189
      %s191 = smul.u32 8, %s15
      %p192 = scmp.lt.s32.totalorder %s191, 15
      %s193 = scalar_select %p192, %s191, 15
      %s194 = smul.addr %s193, 2
      %s195 = smul.addr %s194, 4
      %s196 = scalar_lea.vmem %s0, %s195
      %s197 = smul.u32 8, %s15
      %s198 = smul.u32 8, %s15
      %p199 = scmp.lt.s32.totalorder %s198, 15
      %s200 = scalar_select %p199, %s198, 15
      %s201 = smul.addr %s200, 4
      %s202 = scalar_lea.vmem %s4, %s201
      %s203 = smul.u32 8, %s15
      %v205 = vld [vmem:[%s196] sm:$0xff]
      %v206 = vld [vmem:[%s196 + $0x8] sm:$0xff]
      %v207 = vld [vmem:[%s196 + $0x10] sm:$0xff]
      %v208 = vld [vmem:[%s196 + $0x18] sm:$0xff]
      %v209 = vld [vmem:[%s196 + $0x20] sm:$0xff]
      %v210 = vld [vmem:[%s196 + $0x28] sm:$0xff]
      %v211 = vld [vmem:[%s196 + $0x30] sm:$0xff]
      %v212 = vld [vmem:[%s196 + $0x38] sm:$0xff]
      %v213 = vld [vmem:[%s1] sm:$0xf]
      %v214 = vld [vmem:[%s1 + $0x4] sm:$0xf]
      %v215 = vld [vmem:[%s1 + $0x8] sm:$0xf]
      %v216 = vld [vmem:[%s1 + $0xc] sm:$0xf]
      %v217 = vld [vmem:[%s1 + $0x10] sm:$0xf]
      %v218 = vld [vmem:[%s1 + $0x14] sm:$0xf]
      %v219 = vld [vmem:[%s1 + $0x18] sm:$0xf]
      %v220 = vld [vmem:[%s1 + $0x1c] sm:$0xf]
      %v221 = vld [vmem:[%s1 + $0x20] sm:$0xf]
      %v222 = vld [vmem:[%s1 + $0x24] sm:$0xf]
      %v223 = vld [vmem:[%s1 + $0x28] sm:$0xf]
      %v224 = vld [vmem:[%s1 + $0x2c] sm:$0xf]
      %v225 = vld [vmem:[%s1 + $0x30] sm:$0xf]
      %v226 = vld [vmem:[%s1 + $0x34] sm:$0xf]
      %v227 = vld [vmem:[%s1 + $0x38] sm:$0xf]
      %v228 = vld [vmem:[%s1 + $0x3c] sm:$0xf]
      %v229 = vld [vmem:[%s1 + $0x40] sm:$0xf]
      %v230 = vld [vmem:[%s1 + $0x44] sm:$0xf]
      %v231 = vld [vmem:[%s1 + $0x48] sm:$0xf]
      %v232 = vld [vmem:[%s1 + $0x4c] sm:$0xf]
      %v233 = vld [vmem:[%s1 + $0x50] sm:$0xf]
      %v234 = vld [vmem:[%s1 + $0x54] sm:$0xf]
      %v235 = vld [vmem:[%s1 + $0x58] sm:$0xf]
      %v236 = vld [vmem:[%s1 + $0x5c] sm:$0xf]
      %v237 = vld [vmem:[%s1 + $0x60] sm:$0xf]
      %v238 = vld [vmem:[%s1 + $0x64] sm:$0xf]
      %v239 = vld [vmem:[%s1 + $0x68] sm:$0xf]
      %v240 = vld [vmem:[%s1 + $0x6c] sm:$0xf]
      %v241 = vld [vmem:[%s1 + $0x70] sm:$0xf]
      %v242 = vld [vmem:[%s1 + $0x74] sm:$0xf]
      %v243 = vld [vmem:[%s1 + $0x78] sm:$0xf]
      %v244 = vld [vmem:[%s1 + $0x7c] sm:$0xf]
      %v253 = vunpack.c.l.b16 %v205
      %v254 = vunpack.c.h.b16 %v205
      %v255 = vunpack.c.l.b16 %v206
      %v256 = vunpack.c.h.b16 %v206
      %v257 = vunpack.c.l.b16 %v207
      %v258 = vunpack.c.h.b16 %v207
      %v259 = vunpack.c.l.b16 %v208
      %v260 = vunpack.c.h.b16 %v208
      %v261 = vunpack.c.l.b16 %v209
      %v262 = vunpack.c.h.b16 %v209
      %v263 = vunpack.c.l.b16 %v210
      %v264 = vunpack.c.h.b16 %v210
      %v265 = vunpack.c.l.b16 %v211
      %v266 = vunpack.c.h.b16 %v211
      %v267 = vunpack.c.l.b16 %v212
      %v268 = vunpack.c.h.b16 %v212
      %v269 = vpack.c.b16 %v255, %v253
      %v270 = vpack.c.b16 %v256, %v254
      %v271 = vpack.c.b16 %v259, %v257
      %v272 = vpack.c.b16 %v260, %v258
      %v273 = vpack.c.b16 %v263, %v261
      %v274 = vpack.c.b16 %v264, %v262
      %v275 = vpack.c.b16 %v267, %v265
      %v276 = vpack.c.b16 %v268, %v266
      %v317 = vunpack.c.l.b16 %v213
      %v318 = vunpack.c.l.b16 %v214
      %v319 = vunpack.c.l.b16 %v215
      %v320 = vunpack.c.l.b16 %v216
      %v321 = vunpack.c.l.b16 %v217
      %v322 = vunpack.c.l.b16 %v218
      %v323 = vunpack.c.l.b16 %v219
      %v324 = vunpack.c.l.b16 %v220
      %v325 = vunpack.c.l.b16 %v221
      %v326 = vunpack.c.l.b16 %v222
      %v327 = vunpack.c.l.b16 %v223
      %v328 = vunpack.c.l.b16 %v224
      %v329 = vunpack.c.l.b16 %v225
      %v330 = vunpack.c.l.b16 %v226
      %v331 = vunpack.c.l.b16 %v227
      %v332 = vunpack.c.l.b16 %v228
      %v333 = vunpack.c.l.b16 %v229
      %v334 = vunpack.c.l.b16 %v230
      %v335 = vunpack.c.l.b16 %v231
      %v336 = vunpack.c.l.b16 %v232
      %v337 = vunpack.c.l.b16 %v233
      %v338 = vunpack.c.l.b16 %v234
      %v339 = vunpack.c.l.b16 %v235
      %v340 = vunpack.c.l.b16 %v236
      %v341 = vunpack.c.l.b16 %v237
      %v342 = vunpack.c.l.b16 %v238
      %v343 = vunpack.c.l.b16 %v239
      %v344 = vunpack.c.l.b16 %v240
      %v345 = vunpack.c.l.b16 %v241
      %v346 = vunpack.c.l.b16 %v242
      %v347 = vunpack.c.l.b16 %v243
      %v348 = vunpack.c.l.b16 %v244
      %v349 = vpack.c.b16 %v318, %v317
      %v350 = vpack.c.b16 %v320, %v319
      %v351 = vpack.c.b16 %v322, %v321
      %v352 = vpack.c.b16 %v324, %v323
      %v353 = vpack.c.b16 %v326, %v325
      %v354 = vpack.c.b16 %v328, %v327
      %v355 = vpack.c.b16 %v330, %v329
      %v356 = vpack.c.b16 %v332, %v331
      %v357 = vpack.c.b16 %v334, %v333
      %v358 = vpack.c.b16 %v336, %v335
      %v359 = vpack.c.b16 %v338, %v337
      %v360 = vpack.c.b16 %v340, %v339
      %v361 = vpack.c.b16 %v342, %v341
      %v362 = vpack.c.b16 %v344, %v343
      %v363 = vpack.c.b16 %v346, %v345
      %v364 = vpack.c.b16 %v348, %v347
      %381 = vmatprep.subr.bf16.mxu0 0
      %382 = vmatpush1.bf16.msra.mxu0 %v356
      %383 = vmatprep.subr.bf16.mxu0 0
      %384 = vmatpush1.bf16.msra.mxu0 %v355
      %385 = vmatprep.subr.bf16.mxu0 0
      %386 = vmatpush1.bf16.msra.mxu0 %v354
      %387 = vmatprep.subr.bf16.mxu0 0
      %388 = vmatpush1.bf16.msra.mxu0 %v353
      %389 = vmatprep.subr.bf16.mxu0 0
      %390 = vmatpush1.bf16.msra.mxu0 %v352
      %391 = vmatprep.subr.bf16.mxu0 0
      %392 = vmatpush1.bf16.msra.mxu0 %v351
      %393 = vmatprep.subr.bf16.mxu0 0
      %394 = vmatpush1.bf16.msra.mxu0 %v350
      %395 = vmatprep.subr.bf16.mxu0 0
      %396 = vmatpush1.bf16.msra.mxu0 %v349
      %397 = vmatprep.subr.bf16.mxu0 0
      %398 = vmatpush2.bf16.msra.mxu0 %v364
      %399 = vmatprep.subr.bf16.mxu0 0
      %400 = vmatpush2.bf16.msra.mxu0 %v363
      %401 = vmatprep.subr.bf16.mxu0 0
      %402 = vmatpush2.bf16.msra.mxu0 %v362
      %403 = vmatprep.subr.bf16.mxu0 0
      %404 = vmatpush2.bf16.msra.mxu0 %v361
      %405 = vmatprep.subr.bf16.mxu0 0
      %406 = vmatpush2.bf16.msra.mxu0 %v360
      %407 = vmatprep.subr.bf16.mxu0 0
      %408 = vmatpush2.bf16.msra.mxu0 %v359
      %409 = vmatprep.subr.bf16.mxu0 0
      %410 = vmatpush2.bf16.msra.mxu0 %v358
      %411 = vmatprep.subr.bf16.mxu0 0
      %412 = vmatpush2.bf16.msra.mxu0 %v357
      %413 = vmatprep.mubr.bf16.mxu0 %v270
      %414 = vmatmul.mubr.bf16.gmra.mxu0 %v269
      %v415 = vpop.f32.mrf.mxu0
      %v416 = vadd.f32 0.0, %v415
      %v417 = vpop.f32.mrf.mxu0
      %v418 = vpop.f32.mrf.mxu0
      %v419 = vadd.f32 0.0, %v418
      %v420 = vpop.f32.mrf.mxu0
      %421 = vmatprep.mubr.bf16.mxu0 %v272
      %422 = vmatmul.mubr.bf16.gmra.mxu0 %v271
      %v423 = vpop.f32.mrf.mxu0
      %v424 = vadd.f32 0.0, %v423
      %v425 = vpop.f32.mrf.mxu0
      %v426 = vpop.f32.mrf.mxu0
      %v427 = vadd.f32 0.0, %v426
      %v428 = vpop.f32.mrf.mxu0
      %429 = vmatprep.mubr.bf16.mxu0 %v274
      %430 = vmatmul.mubr.bf16.gmra.mxu0 %v273
      %v431 = vpop.f32.mrf.mxu0
      %v432 = vadd.f32 0.0, %v431
      %v433 = vpop.f32.mrf.mxu0
      %v434 = vpop.f32.mrf.mxu0
      %v435 = vadd.f32 0.0, %v434
      %v436 = vpop.f32.mrf.mxu0
      %437 = vmatprep.mubr.bf16.mxu0 %v276
      %438 = vmatmul.mubr.bf16.gmra.mxu0 %v275
      %v439 = vpop.f32.mrf.mxu0
      %v440 = vadd.f32 0.0, %v439
      %v441 = vpop.f32.mrf.mxu0
      %v442 = vpop.f32.mrf.mxu0
      %v443 = vadd.f32 0.0, %v442
      %v444 = vpop.f32.mrf.mxu0
      %445 = vdwg.mxu0
      %v446 = vld [vmem:[%s2] sm:$0x1]
      %v448 = vlaneseq
      %v449 = vshrl.u32 %v448, 7
      %v450 = vsub.s32 0, %v449
      %v451 = vrot.slane %v446, %v450
      %v453 = vmul.f32 %v416, %v451
      %v454 = vmul.f32 %v419, %v451
      %v455 = vmul.f32 %v424, %v451
      %v456 = vmul.f32 %v427, %v451
      %v457 = vmul.f32 %v432, %v451
      %v458 = vmul.f32 %v435, %v451
      %v459 = vmul.f32 %v440, %v451
      %v460 = vmul.f32 %v443, %v451
      %v461 = vld [vmem:[%s3] sm:$0x1]
      %v463 = vlaneseq
      %v464 = vshrl.u32 %v463, 7
      %v465 = vsub.s32 0, %v464
      %v466 = vrot.slane %v461, %v465
      %v468 = vadd.f32 %v453, %v466
      %v469 = vadd.f32 %v454, %v466
      %v470 = vadd.f32 %v455, %v466
      %v471 = vadd.f32 %v456, %v466
      %v472 = vadd.f32 %v457, %v466
      %v473 = vadd.f32 %v458, %v466
      %v474 = vadd.f32 %v459, %v466
      %v475 = vadd.f32 %v460, %v466
      %v476 = vmax.f32 %v468, 0.0
      %v477 = vmax.f32 %v469, 0.0
      %v478 = vmax.f32 %v470, 0.0
      %v479 = vmax.f32 %v471, 0.0
      %v480 = vmax.f32 %v472, 0.0
      %v481 = vmax.f32 %v473, 0.0
      %v482 = vmax.f32 %v474, 0.0
      %v483 = vmax.f32 %v475, 0.0
      %v484 = vpack.c.bf16 %v477, %v476
      %v485 = vpack.c.bf16 %v479, %v478
      %v486 = vpack.c.bf16 %v481, %v480
      %v487 = vpack.c.bf16 %v483, %v482
      %v492 = vunpack.c.l.b16 %v484
      %v493 = vunpack.c.h.b16 %v484
      %v494 = vunpack.c.l.b16 %v485
      %v495 = vunpack.c.h.b16 %v485
      %v496 = vunpack.c.l.b16 %v486
      %v497 = vunpack.c.h.b16 %v486
      %v498 = vunpack.c.l.b16 %v487
      %v499 = vunpack.c.h.b16 %v487
      %v500 = vpack.c.b16 %v492, %v492
      %v501 = vpack.c.b16 %v493, %v493
      %v502 = vpack.c.b16 %v494, %v494
      %v503 = vpack.c.b16 %v495, %v495
      %v504 = vpack.c.b16 %v496, %v496
      %v505 = vpack.c.b16 %v497, %v497
      %v506 = vpack.c.b16 %v498, %v498
      %v507 = vpack.c.b16 %v499, %v499
      %516 = vst [vmem:[%s202] sm:$0xf] %v500
      %517 = vst [vmem:[%s202 + $0x4] sm:$0xf] %v501
      %518 = vst [vmem:[%s202 + $0x8] sm:$0xf] %v502
      %519 = vst [vmem:[%s202 + $0xc] sm:$0xf] %v503
      %520 = vst [vmem:[%s202 + $0x10] sm:$0xf] %v504
      %521 = vst [vmem:[%s202 + $0x14] sm:$0xf] %v505
      %522 = vst [vmem:[%s202 + $0x18] sm:$0xf] %v506
      %523 = vst [vmem:[%s202 + $0x1c] sm:$0xf] %v507
      %s524 = smul.u32 8, %s15
      %p525 = scmp.lt.s32.totalorder %s524, 15
      %s526 = scalar_select %p525, %s524, 15
      %s527 = smul.addr %s526, 4
      %s528 = scalar_lea.vmem %s4, %s527
      // Predicated region
      $region37: #{fcn_forward.6} parent=35 // pred_check
        %p529 = pneg %p122
      $region38: #{fcn_forward.6} parent=35 // pred_check_branch
        %531 = sbr.rel (%p529) target = $region40
      $region39: #{fcn_forward.6} parent=35 // pred_region
        %s532 = smul.u32 8, %s15
      $region40: #{fcn_forward.6} parent=35 // pred_fallthru
        _
    $region36: #{fcn_forward.6} parent=5 // pred_fallthru
      _
    %p533 = scmp.le.s32.totalorder 2, %s10
    // Predicated region
    $region41: #{fcn_forward.6} parent=5 // pred_check
      %p534 = pneg %p533
    $region42: #{fcn_forward.6} parent=5 // pred_check_branch
      %536 = sbr.rel (%p534) target = $region44
    $region43: #{fcn_forward.6} parent=5 // pred_region
      %s537 = ssub.s32 %s10, 2
      // Predicated region
      $region45: #{fcn_forward.6} parent=43 // pred_check
        %p538 = pneg %p128
      $region46: #{fcn_forward.6} parent=43 // pred_check_branch
        %540 = sbr.rel (%p538) target = $region48
      $region47: #{fcn_forward.6} parent=43 // pred_region
        %s541 = smul.u32 8, %s16
        %p542 = scmp.lt.s32.totalorder %s541, 15
        %s543 = scalar_select %p542, %s541, 15
        %s544 = smul.addr %s543, 4
        %s545 = scalar_lea.vmem %s4, %s544
      $region48: #{fcn_forward.6} parent=43 // pred_fallthru
        _
    $region44: #{fcn_forward.6} parent=5 // pred_fallthru
      _
  $region6: #{fcn_forward.6} parent=0 // loop_footer
    %s14 = sadd.s32 1, %s10
  $region7: #{fcn_forward.6} parent=0 // loop_footer_branch
    %9 = sbr.rel target = $region3
  $region8: #{fcn_forward.6} parent=0 // loop_exit
    _

// kernel: fcn_forward.7
$region0: #{fcn_forward.7}
  #allocation0 [shape = 'u32[]', space=smem, size = 0x4, offset = 0x4, fixed_abs, tag = 'smem constant byte address 0x4 - core index']
  #allocation1 [shape = 'u32[144,128]{1,0:T(1,128)}', space=vmem, size = 0x12000, scoped, tag = 'internal scratch']
  %s0 = inlined_call_operand.vmem [shape: bf16[32,384], index: 0, kind: input, shape index: {}]
  %s1 = inlined_call_operand.vmem [shape: bf16[384,128], index: 1, kind: input, shape index: {}]
  %s2 = inlined_call_operand.vmem [shape: f32[1,128], index: 2, kind: input, shape index: {}]
  %s3 = inlined_call_operand.vmem [shape: f32[1,128], index: 3, kind: input, shape index: {}]
  %s4 = inlined_call_operand.vmem [shape: bf16[32,128], index: 4, kind: input, shape index: {}]
  %s5 = inlined_call_operand.vmem [shape: bf16[128,128], index: 5, kind: input, shape index: {}]
  %s6 = inlined_call_operand.vmem [shape: f32[1,128], index: 6, kind: input, shape index: {}]
  %s7 = inlined_call_operand.vmem [shape: f32[1,128], index: 7, kind: input, shape index: {}]
  %s8 = inlined_call_operand.vmem [shape: bf16[32,128], index: 8, kind: output, shape index: {}]
  %s9 = sld [smem:[#allocation0]]
  $region65: #{fcn_forward.7} parent=0
    _
  %s11 = ssub.s32 1, %s9
  %s12 = scalar_select 0, %s11, %s9
  loop: start=0, step=1, limit=4
  $region2: #{fcn_forward.7} parent=0 // loop_pre_header
    _
  $region3: #{fcn_forward.7} parent=0 // loop_header
    %s14 = sphi 0, %s18
    %p15 = scmp.ge.s32.totalorder %s14, 4
    %s24 = sphi 0, %s26
    %s27 = sphi 0, %s24
    %s28 = sphi 0, %s27
    %s44 = sphi 0, %s28
    %s48 = sphi 0, %s48
    %s50 = sphi 0, %s48
    %s51 = sphi 0, %s50
    %s65 = sphi 0, %s51
    %s69 = sphi 0, %s69
    %s71 = sphi 0, %s69
    %s72 = sphi 0, %s71
    %s86 = sphi 0, %s72
    %s90 = sphi 0, %s90
    %s92 = sphi 0, %s90
    %s93 = sphi 0, %s92
    %s107 = sphi 0, %s93
    %s113 = sphi 0, %s115
    %s116 = sphi 0, %s113
    %s117 = sphi 0, %s116
    %s133 = sphi 0, %s117
    %s137 = sphi 0, %s137
    %s139 = sphi 0, %s137
    %s140 = sphi 0, %s139
    %s154 = sphi 0, %s140
    %s158 = sphi 0, %s158
    %s160 = sphi 0, %s158
    %s161 = sphi 0, %s160
    %s175 = sphi 0, %s161
    %s179 = sphi 0, %s179
    %s181 = sphi 0, %s179
    %s182 = sphi 0, %s181
    %s196 = sphi 0, %s182
    %s202 = sphi 0, %s204
    %s205 = sphi 0, %s202
    %s206 = sphi 0, %s205
    %s222 = sphi 0, %s206
  $region4: #{fcn_forward.7} parent=0 // loop_header_branch
    %17 = sbr.rel (%p15) target = $region8
  $region5: #{fcn_forward.7} parent=0 // loop_body
    %s19 = ssub.s32 %s14, 1
    %s20 = ssub.s32 %s14, 2
    %s21 = sadd.s32 %s14, 1
    %s22 = ssub.s32 %s14, %s21
    %p23 = scmp.eq.s32.totalorder %s22, 0
    %s25 = sadd.s32 %s24, 1
    %s26 = scalar_select %p23, %s24, %s25
    %p29 = pneg %p23
    %p30 = scmp.eq.s32.totalorder %s14, 1
    %p31 = por %p29, %p30
    %p32 = scmp.ne.s32.totalorder %s24, %s27
    %p33 = scmp.eq.s32.totalorder %s14, 0
    %p34 = por %p32, %p33
    %p35 = scmp.ne.s32.totalorder %s24, %s27
    %p36 = scmp.eq.s32.totalorder %s19, 1
    %p37 = por %p35, %p36
    %p38 = scmp.ne.s32.totalorder %s27, %s28
    %p39 = scmp.eq.s32.totalorder %s19, 0
    %p40 = por %p38, %p39
    %p41 = scmp.ne.s32.totalorder %s27, %s28
    %p42 = scmp.eq.s32.totalorder %s20, 1
    %p43 = por %p41, %p42
    %p45 = scmp.ne.s32.totalorder %s28, %s44
    %p46 = scmp.eq.s32.totalorder %s20, 0
    %p47 = por %p45, %p46
    %s49 = sadd.s32 %s48, 1
    %p52 = scmp.eq.s32.totalorder %s14, 1
    %p53 = scmp.ne.s32.totalorder %s48, %s50
    %p54 = scmp.eq.s32.totalorder %s14, 0
    %p55 = por %p53, %p54
    %p56 = scmp.ne.s32.totalorder %s48, %s50
    %p57 = scmp.eq.s32.totalorder %s19, 1
    %p58 = por %p56, %p57
    %p59 = scmp.ne.s32.totalorder %s50, %s51
    %p60 = scmp.eq.s32.totalorder %s19, 0
    %p61 = por %p59, %p60
    %p62 = scmp.ne.s32.totalorder %s50, %s51
    %p63 = scmp.eq.s32.totalorder %s20, 1
    %p64 = por %p62, %p63
    %p66 = scmp.ne.s32.totalorder %s51, %s65
    %p67 = scmp.eq.s32.totalorder %s20, 0
    %p68 = por %p66, %p67
    %s70 = sadd.s32 %s69, 1
    %p73 = scmp.eq.s32.totalorder %s14, 1
    %p74 = scmp.ne.s32.totalorder %s69, %s71
    %p75 = scmp.eq.s32.totalorder %s14, 0
    %p76 = por %p74, %p75
    %p77 = scmp.ne.s32.totalorder %s69, %s71
    %p78 = scmp.eq.s32.totalorder %s19, 1
    %p79 = por %p77, %p78
    %p80 = scmp.ne.s32.totalorder %s71, %s72
    %p81 = scmp.eq.s32.totalorder %s19, 0
    %p82 = por %p80, %p81
    %p83 = scmp.ne.s32.totalorder %s71, %s72
    %p84 = scmp.eq.s32.totalorder %s20, 1
    %p85 = por %p83, %p84
    %p87 = scmp.ne.s32.totalorder %s72, %s86
    %p88 = scmp.eq.s32.totalorder %s20, 0
    %p89 = por %p87, %p88
    %s91 = sadd.s32 %s90, 1
    %p94 = scmp.eq.s32.totalorder %s14, 1
    %p95 = scmp.ne.s32.totalorder %s90, %s92
    %p96 = scmp.eq.s32.totalorder %s14, 0
    %p97 = por %p95, %p96
    %p98 = scmp.ne.s32.totalorder %s90, %s92
    %p99 = scmp.eq.s32.totalorder %s19, 1
    %p100 = por %p98, %p99
    %p101 = scmp.ne.s32.totalorder %s92, %s93
    %p102 = scmp.eq.s32.totalorder %s19, 0
    %p103 = por %p101, %p102
    %p104 = scmp.ne.s32.totalorder %s92, %s93
    %p105 = scmp.eq.s32.totalorder %s20, 1
    %p106 = por %p104, %p105
    %p108 = scmp.ne.s32.totalorder %s93, %s107
    %p109 = scmp.eq.s32.totalorder %s20, 0
    %p110 = por %p108, %p109
    %s111 = ssub.s32 %s14, %s21
    %p112 = scmp.eq.s32.totalorder %s111, 0
    %s114 = sadd.s32 %s113, 1
    %s115 = scalar_select %p112, %s113, %s114
    %p118 = pneg %p112
    %p119 = scmp.eq.s32.totalorder %s14, 1
    %p120 = por %p118, %p119
    %p121 = scmp.ne.s32.totalorder %s113, %s116
    %p122 = scmp.eq.s32.totalorder %s14, 0
    %p123 = por %p121, %p122
    %p124 = scmp.ne.s32.totalorder %s113, %s116
    %p125 = scmp.eq.s32.totalorder %s19, 1
    %p126 = por %p124, %p125
    %p127 = scmp.ne.s32.totalorder %s116, %s117
    %p128 = scmp.eq.s32.totalorder %s19, 0
    %p129 = por %p127, %p128
    %p130 = scmp.ne.s32.totalorder %s116, %s117
    %p131 = scmp.eq.s32.totalorder %s20, 1
    %p132 = por %p130, %p131
    %p134 = scmp.ne.s32.totalorder %s117, %s133
    %p135 = scmp.eq.s32.totalorder %s20, 0
    %p136 = por %p134, %p135
    %s138 = sadd.s32 %s137, 1
    %p141 = scmp.eq.s32.totalorder %s14, 1
    %p142 = scmp.ne.s32.totalorder %s137, %s139
    %p143 = scmp.eq.s32.totalorder %s14, 0
    %p144 = por %p142, %p143
    %p145 = scmp.ne.s32.totalorder %s137, %s139
    %p146 = scmp.eq.s32.totalorder %s19, 1
    %p147 = por %p145, %p146
    %p148 = scmp.ne.s32.totalorder %s139, %s140
    %p149 = scmp.eq.s32.totalorder %s19, 0
    %p150 = por %p148, %p149
    %p151 = scmp.ne.s32.totalorder %s139, %s140
    %p152 = scmp.eq.s32.totalorder %s20, 1
    %p153 = por %p151, %p152
    %p155 = scmp.ne.s32.totalorder %s140, %s154
    %p156 = scmp.eq.s32.totalorder %s20, 0
    %p157 = por %p155, %p156
    %s159 = sadd.s32 %s158, 1
    %p162 = scmp.eq.s32.totalorder %s14, 1
    %p163 = scmp.ne.s32.totalorder %s158, %s160
    %p164 = scmp.eq.s32.totalorder %s14, 0
    %p165 = por %p163, %p164
    %p166 = scmp.ne.s32.totalorder %s158, %s160
    %p167 = scmp.eq.s32.totalorder %s19, 1
    %p168 = por %p166, %p167
    %p169 = scmp.ne.s32.totalorder %s160, %s161
    %p170 = scmp.eq.s32.totalorder %s19, 0
    %p171 = por %p169, %p170
    %p172 = scmp.ne.s32.totalorder %s160, %s161
    %p173 = scmp.eq.s32.totalorder %s20, 1
    %p174 = por %p172, %p173
    %p176 = scmp.ne.s32.totalorder %s161, %s175
    %p177 = scmp.eq.s32.totalorder %s20, 0
    %p178 = por %p176, %p177
    %s180 = sadd.s32 %s179, 1
    %p183 = scmp.eq.s32.totalorder %s14, 1
    %p184 = scmp.ne.s32.totalorder %s179, %s181
    %p185 = scmp.eq.s32.totalorder %s14, 0
    %p186 = por %p184, %p185
    %p187 = scmp.ne.s32.totalorder %s179, %s181
    %p188 = scmp.eq.s32.totalorder %s19, 1
    %p189 = por %p187, %p188
    %p190 = scmp.ne.s32.totalorder %s181, %s182
    %p191 = scmp.eq.s32.totalorder %s19, 0
    %p192 = por %p190, %p191
    %p193 = scmp.ne.s32.totalorder %s181, %s182
    %p194 = scmp.eq.s32.totalorder %s20, 1
    %p195 = por %p193, %p194
    %p197 = scmp.ne.s32.totalorder %s182, %s196
    %p198 = scmp.eq.s32.totalorder %s20, 0
    %p199 = por %p197, %p198
    %s200 = ssub.s32 %s14, %s21
    %p201 = scmp.eq.s32.totalorder %s200, 0
    %s203 = sadd.s32 %s202, 1
    %s204 = scalar_select %p201, %s202, %s203
    %p207 = pneg %p201
    %p208 = scmp.eq.s32.totalorder %s14, 1
    %p209 = por %p207, %p208
    %p210 = scmp.ne.s32.totalorder %s202, %s205
    %p211 = scmp.eq.s32.totalorder %s14, 0
    %p212 = por %p210, %p211
    %p213 = scmp.ne.s32.totalorder %s202, %s205
    %p214 = scmp.eq.s32.totalorder %s19, 1
    %p215 = por %p213, %p214
    %p216 = scmp.ne.s32.totalorder %s205, %s206
    %p217 = scmp.eq.s32.totalorder %s19, 0
    %p218 = por %p216, %p217
    %p219 = scmp.ne.s32.totalorder %s205, %s206
    %p220 = scmp.eq.s32.totalorder %s20, 1
    %p221 = por %p219, %p220
    %p223 = scmp.ne.s32.totalorder %s206, %s222
    %p224 = scmp.eq.s32.totalorder %s20, 0
    %p225 = por %p223, %p224
    %p226 = scmp.le.s32.totalorder 1, %s14
    %p227 = scmp.lt.s32.totalorder %s14, 3
    %p228 = pnand %p226, %p227
    %p229 = pneg %p228
    // Predicated region
    $region9: #{fcn_forward.7} parent=5 // pred_check
      _
    $region10: #{fcn_forward.7} parent=5 // pred_check_branch
      %231 = sbr.rel (%p228) target = $region12
    $region11: #{fcn_forward.7} parent=5 // pred_region
      %s232 = ssub.s32 %s14, 1
      // Predicated region
      $region13: #{fcn_forward.7} parent=11 // pred_check
        %p233 = pneg %p61
      $region14: #{fcn_forward.7} parent=11 // pred_check_branch
        %235 = sbr.rel (%p233) target = $region16
      $region15: #{fcn_forward.7} parent=11 // pred_region
        _
      $region16: #{fcn_forward.7} parent=11 // pred_fallthru
        _
      // Predicated region
      $region17: #{fcn_forward.7} parent=11 // pred_check
        %p236 = pneg %p82
      $region18: #{fcn_forward.7} parent=11 // pred_check_branch
        %238 = sbr.rel (%p236) target = $region20
      $region19: #{fcn_forward.7} parent=11 // pred_region
        _
      $region20: #{fcn_forward.7} parent=11 // pred_fallthru
        _
      // Predicated region
      $region21: #{fcn_forward.7} parent=11 // pred_check
        %p239 = pneg %p103
      $region22: #{fcn_forward.7} parent=11 // pred_check_branch
        %241 = sbr.rel (%p239) target = $region24
      $region23: #{fcn_forward.7} parent=11 // pred_region
        _
      $region24: #{fcn_forward.7} parent=11 // pred_fallthru
        _
      // Predicated region
      $region25: #{fcn_forward.7} parent=11 // pred_check
        %p242 = pneg %p150
      $region26: #{fcn_forward.7} parent=11 // pred_check_branch
        %244 = sbr.rel (%p242) target = $region28
      $region27: #{fcn_forward.7} parent=11 // pred_region
        _
      $region28: #{fcn_forward.7} parent=11 // pred_fallthru
        _
      // Predicated region
      $region29: #{fcn_forward.7} parent=11 // pred_check
        %p245 = pneg %p171
      $region30: #{fcn_forward.7} parent=11 // pred_check_branch
        %247 = sbr.rel (%p245) target = $region32
      $region31: #{fcn_forward.7} parent=11 // pred_region
        _
      $region32: #{fcn_forward.7} parent=11 // pred_fallthru
        _
      // Predicated region
      $region33: #{fcn_forward.7} parent=11 // pred_check
        %p248 = pneg %p192
      $region34: #{fcn_forward.7} parent=11 // pred_check_branch
        %250 = sbr.rel (%p248) target = $region36
      $region35: #{fcn_forward.7} parent=11 // pred_region
        _
      $region36: #{fcn_forward.7} parent=11 // pred_fallthru
        _
    $region12: #{fcn_forward.7} parent=5 // pred_fallthru
      _
    %p251 = scmp.lt.s32.totalorder %s14, 2
    // Predicated region
    $region37: #{fcn_forward.7} parent=5 // pred_check
      %p252 = pneg %p251
    $region38: #{fcn_forward.7} parent=5 // pred_check_branch
      %254 = sbr.rel (%p252) target = $region40
    $region39: #{fcn_forward.7} parent=5 // pred_region
      // Predicated region
      $region41: #{fcn_forward.7} parent=39 // pred_check
        %p255 = pneg %p34
      $region42: #{fcn_forward.7} parent=39 // pred_check_branch
        %257 = sbr.rel (%p255) target = $region44
      $region43: #{fcn_forward.7} parent=39 // pred_region
        %s258 = smul.u32 2, %s14
        %p259 = scmp.lt.s32.totalorder %s258, 3
        %s260 = scalar_select %p259, %s258, 3
        %s261 = smul.addr %s260, 3
        %s262 = smul.addr %s261, 4
        %s263 = scalar_lea.vmem %s0, %s262
        %s264 = smul.u32 2, %s14
      $region44: #{fcn_forward.7} parent=39 // pred_fallthru
        _
      // Predicated region
      $region45: #{fcn_forward.7} parent=39 // pred_check
        %p265 = pneg %p123
      $region46: #{fcn_forward.7} parent=39 // pred_check_branch
        %267 = sbr.rel (%p265) target = $region48
      $region47: #{fcn_forward.7} parent=39 // pred_region
        %s268 = smul.u32 2, %s14
        %p269 = scmp.lt.s32.totalorder %s268, 3
        %s270 = scalar_select %p269, %s268, 3
        %s271 = smul.addr %s270, 4
        %s272 = scalar_lea.vmem %s4, %s271
        %s273 = smul.u32 2, %s14
      $region48: #{fcn_forward.7} parent=39 // pred_fallthru
        _
    $region40: #{fcn_forward.7} parent=5 // pred_fallthru
      _
    %p274 = scmp.le.s32.totalorder 1, %s14
    %p275 = scmp.lt.s32.totalorder %s14, 3
    %p276 = pnand %p274, %p275
    %p277 = pneg %p276
    // Predicated region
    $region49: #{fcn_forward.7} parent=5 // pred_check
      _
    $region50: #{fcn_forward.7} parent=5 // pred_check_branch
      %279 = sbr.rel (%p276) target = $region52
    $region51: #{fcn_forward.7} parent=5 // pred_region
      %s280 = ssub.s32 %s14, 1
      %s281 = smul.u32 2, %s19
      %p282 = scmp.lt.s32.totalorder %s281, 3
      %s283 = scalar_select %p282, %s281, 3
      %s284 = smul.addr %s283, 3
      %s285 = smul.addr %s284, 4
      %s286 = scalar_lea.vmem %s0, %s285
      %p287 = pneg %p40
      %p288 = pneg %p37
      %p289 = pneg %p61
      %p290 = pneg %p58
      %p291 = pneg %p82
      %p292 = pneg %p79
      %p293 = pneg %p103
      %p294 = pneg %p100
      %s295 = smul.u32 2, %s19
      %p296 = scmp.lt.s32.totalorder %s295, 3
      %s297 = scalar_select %p296, %s295, 3
      %s298 = smul.addr %s297, 4
      %s299 = scalar_lea.vmem %s4, %s298
      %p300 = pneg %p129
      %p301 = pneg %p126
      %p302 = pneg %p150
      %p303 = pneg %p147
      %p304 = pneg %p171
      %p305 = pneg %p168
      %p306 = pneg %p192
      %p307 = pneg %p189
      %p308 = pneg %p218
      %p309 = pneg %p215
      %s310 = smul.u32 2, %s19
      %p311 = scmp.lt.s32.totalorder %s310, 3
      %s312 = scalar_select %p311, %s310, 3
      %s313 = smul.addr %s312, 4
      %s314 = scalar_lea.vmem %s8, %s313
      %s315 = smul.u32 2, %s19
      %p316 = scmp.lt.s32.totalorder %s315, 3
      %s317 = scalar_select %p316, %s315, 3
      %s318 = smul.addr %s317, 3
      %s319 = smul.addr %s318, 4
      %s320 = scalar_lea.vmem %s0, %s319
      %s321 = smul.u32 2, %s19
      %s322 = smul.u32 2, %s19
      %p323 = scmp.lt.s32.totalorder %s322, 3
      %s324 = scalar_select %p323, %s322, 3
      %s325 = smul.addr %s324, 4
      %s326 = scalar_lea.vmem %s4, %s325
      %s327 = smul.u32 2, %s19
      %s328 = smul.u32 2, %s19
      %p329 = scmp.lt.s32.totalorder %s328, 3
      %s330 = scalar_select %p329, %s328, 3
      %s331 = smul.addr %s330, 4
      %s332 = scalar_lea.vmem %s8, %s331
      %s333 = smul.u32 2, %s19
      %v335 = vld [vmem:[%s320] sm:$0xff]
      %v336 = vld [vmem:[%s320 + $0x8] sm:$0xf]
      %v337 = vld [vmem:[%s320 + $0xc] sm:$0xff]
      %v338 = vld [vmem:[%s320 + $0x14] sm:$0xf]
      %v339 = vld [vmem:[%s1] sm:$0xf]
      %v340 = vld [vmem:[%s1 + $0x4] sm:$0xf]
      %v341 = vld [vmem:[%s1 + $0x8] sm:$0xf]
      %v342 = vld [vmem:[%s1 + $0xc] sm:$0xf]
      %v343 = vld [vmem:[%s1 + $0x10] sm:$0xf]
      %v344 = vld [vmem:[%s1 + $0x14] sm:$0xf]
      %v345 = vld [vmem:[%s1 + $0x18] sm:$0xf]
      %v346 = vld [vmem:[%s1 + $0x1c] sm:$0xf]
      %v347 = vld [vmem:[%s1 + $0x20] sm:$0xf]
      %v348 = vld [vmem:[%s1 + $0x24] sm:$0xf]
      %v349 = vld [vmem:[%s1 + $0x28] sm:$0xf]
      %v350 = vld [vmem:[%s1 + $0x2c] sm:$0xf]
      %v351 = vld [vmem:[%s1 + $0x30] sm:$0xf]
      %v352 = vld [vmem:[%s1 + $0x34] sm:$0xf]
      %v353 = vld [vmem:[%s1 + $0x38] sm:$0xf]
      %v354 = vld [vmem:[%s1 + $0x3c] sm:$0xf]
      %v355 = vld [vmem:[%s1 + $0x40] sm:$0xf]
      %v356 = vld [vmem:[%s1 + $0x44] sm:$0xf]
      %v357 = vld [vmem:[%s1 + $0x48] sm:$0xf]
      %v358 = vld [vmem:[%s1 + $0x4c] sm:$0xf]
      %v359 = vld [vmem:[%s1 + $0x50] sm:$0xf]
      %v360 = vld [vmem:[%s1 + $0x54] sm:$0xf]
      %v361 = vld [vmem:[%s1 + $0x58] sm:$0xf]
      %v362 = vld [vmem:[%s1 + $0x5c] sm:$0xf]
      %v363 = vld [vmem:[%s1 + $0x60] sm:$0xf]
      %v364 = vld [vmem:[%s1 + $0x64] sm:$0xf]
      %v365 = vld [vmem:[%s1 + $0x68] sm:$0xf]
      %v366 = vld [vmem:[%s1 + $0x6c] sm:$0xf]
      %v367 = vld [vmem:[%s1 + $0x70] sm:$0xf]
      %v368 = vld [vmem:[%s1 + $0x74] sm:$0xf]
      %v369 = vld [vmem:[%s1 + $0x78] sm:$0xf]
      %v370 = vld [vmem:[%s1 + $0x7c] sm:$0xf]
      %v371 = vld [vmem:[%s1 + $0x80] sm:$0xf]
      %v372 = vld [vmem:[%s1 + $0x84] sm:$0xf]
      %v373 = vld [vmem:[%s1 + $0x88] sm:$0xf]
      %v374 = vld [vmem:[%s1 + $0x8c] sm:$0xf]
      %v375 = vld [vmem:[%s1 + $0x90] sm:$0xf]
      %v376 = vld [vmem:[%s1 + $0x94] sm:$0xf]
      %v377 = vld [vmem:[%s1 + $0x98] sm:$0xf]
      %v378 = vld [vmem:[%s1 + $0x9c] sm:$0xf]
      %v379 = vld [vmem:[%s1 + $0xa0] sm:$0xf]
      %v380 = vld [vmem:[%s1 + $0xa4] sm:$0xf]
      %v381 = vld [vmem:[%s1 + $0xa8] sm:$0xf]
      %v382 = vld [vmem:[%s1 + $0xac] sm:$0xf]
      %v383 = vld [vmem:[%s1 + $0xb0] sm:$0xf]
      %v384 = vld [vmem:[%s1 + $0xb4] sm:$0xf]
      %v385 = vld [vmem:[%s1 + $0xb8] sm:$0xf]
      %v386 = vld [vmem:[%s1 + $0xbc] sm:$0xf]
      %v391 = vunpack.c.l.b16 %v335
      %v392 = vunpack.c.h.b16 %v335
      %v393 = vunpack.c.l.b16 %v336
      %v394 = vunpack.c.l.b16 %v337
      %v395 = vunpack.c.h.b16 %v337
      %v396 = vunpack.c.l.b16 %v338
      %v397 = vpack.c.b16 %v394, %v391
      %v398 = vpack.c.b16 %v395, %v392
      %v399 = vpack.c.b16 %v396, %v393
      %v451 = vunpack.c.l.b16 %v339
      %v452 = vunpack.c.l.b16 %v340
      %v453 = vunpack.c.l.b16 %v341
      %v454 = vunpack.c.l.b16 %v342
      %v455 = vunpack.c.l.b16 %v343
      %v456 = vunpack.c.l.b16 %v344
      %v457 = vunpack.c.l.b16 %v345
      %v458 = vunpack.c.l.b16 %v346
      %v459 = vunpack.c.l.b16 %v347
      %v460 = vunpack.c.l.b16 %v348
      %v461 = vunpack.c.l.b16 %v349
      %v462 = vunpack.c.l.b16 %v350
      %v463 = vunpack.c.l.b16 %v351
      %v464 = vunpack.c.l.b16 %v352
      %v465 = vunpack.c.l.b16 %v353
      %v466 = vunpack.c.l.b16 %v354
      %v467 = vunpack.c.l.b16 %v355
      %v468 = vunpack.c.l.b16 %v356
      %v469 = vunpack.c.l.b16 %v357
      %v470 = vunpack.c.l.b16 %v358
      %v471 = vunpack.c.l.b16 %v359
      %v472 = vunpack.c.l.b16 %v360
      %v473 = vunpack.c.l.b16 %v361
      %v474 = vunpack.c.l.b16 %v362
      %v475 = vunpack.c.l.b16 %v363
      %v476 = vunpack.c.l.b16 %v364
      %v477 = vunpack.c.l.b16 %v365
      %v478 = vunpack.c.l.b16 %v366
      %v479 = vunpack.c.l.b16 %v367
      %v480 = vunpack.c.l.b16 %v368
      %v481 = vunpack.c.l.b16 %v369
      %v482 = vunpack.c.l.b16 %v370
      %v483 = vunpack.c.l.b16 %v371
      %v484 = vunpack.c.l.b16 %v372
      %v485 = vunpack.c.l.b16 %v373
      %v486 = vunpack.c.l.b16 %v374
      %v487 = vunpack.c.l.b16 %v375
      %v488 = vunpack.c.l.b16 %v376
      %v489 = vunpack.c.l.b16 %v377
      %v490 = vunpack.c.l.b16 %v378
      %v491 = vunpack.c.l.b16 %v379
      %v492 = vunpack.c.l.b16 %v380
      %v493 = vunpack.c.l.b16 %v381
      %v494 = vunpack.c.l.b16 %v382
      %v495 = vunpack.c.l.b16 %v383
      %v496 = vunpack.c.l.b16 %v384
      %v497 = vunpack.c.l.b16 %v385
      %v498 = vunpack.c.l.b16 %v386
      %v499 = vpack.c.b16 %v452, %v451
      %v500 = vpack.c.b16 %v454, %v453
      %v501 = vpack.c.b16 %v456, %v455
      %v502 = vpack.c.b16 %v458, %v457
      %v503 = vpack.c.b16 %v460, %v459
      %v504 = vpack.c.b16 %v462, %v461
      %v505 = vpack.c.b16 %v464, %v463
      %v506 = vpack.c.b16 %v466, %v465
      %v507 = vpack.c.b16 %v468, %v467
      %v508 = vpack.c.b16 %v470, %v469
      %v509 = vpack.c.b16 %v472, %v471
      %v510 = vpack.c.b16 %v474, %v473
      %v511 = vpack.c.b16 %v476, %v475
      %v512 = vpack.c.b16 %v478, %v477
      %v513 = vpack.c.b16 %v480, %v479
      %v514 = vpack.c.b16 %v482, %v481
      %v515 = vpack.c.b16 %v484, %v483
      %v516 = vpack.c.b16 %v486, %v485
      %v517 = vpack.c.b16 %v488, %v487
      %v518 = vpack.c.b16 %v490, %v489
      %v519 = vpack.c.b16 %v492, %v491
      %v520 = vpack.c.b16 %v494, %v493
      %v521 = vpack.c.b16 %v496, %v495
      %v522 = vpack.c.b16 %v498, %v497
      %547 = vmatprep.subr.bf16.mxu0 0
      %548 = vmatpush1.bf16.msra.mxu0 %v506
      %549 = vmatprep.subr.bf16.mxu0 0
      %550 = vmatpush1.bf16.msra.mxu0 %v505
      %551 = vmatprep.subr.bf16.mxu0 0
      %552 = vmatpush1.bf16.msra.mxu0 %v504
      %553 = vmatprep.subr.bf16.mxu0 0
      %554 = vmatpush1.bf16.msra.mxu0 %v503
      %555 = vmatprep.subr.bf16.mxu0 0
      %556 = vmatpush1.bf16.msra.mxu0 %v502
      %557 = vmatprep.subr.bf16.mxu0 0
      %558 = vmatpush1.bf16.msra.mxu0 %v501
      %559 = vmatprep.subr.bf16.mxu0 0
      %560 = vmatpush1.bf16.msra.mxu0 %v500
      %561 = vmatprep.subr.bf16.mxu0 0
      %562 = vmatpush1.bf16.msra.mxu0 %v499
      %563 = vmatprep.subr.bf16.mxu0 0
      %564 = vmatpush2.bf16.msra.mxu0 %v514
      %565 = vmatprep.subr.bf16.mxu0 0
      %566 = vmatpush2.bf16.msra.mxu0 %v513
      %567 = vmatprep.subr.bf16.mxu0 0
      %568 = vmatpush2.bf16.msra.mxu0 %v512
      %569 = vmatprep.subr.bf16.mxu0 0
      %570 = vmatpush2.bf16.msra.mxu0 %v511
      %571 = vmatprep.subr.bf16.mxu0 0
      %572 = vmatpush2.bf16.msra.mxu0 %v510
      %573 = vmatprep.subr.bf16.mxu0 0
      %574 = vmatpush2.bf16.msra.mxu0 %v509
      %575 = vmatprep.subr.bf16.mxu0 0
      %576 = vmatpush2.bf16.msra.mxu0 %v508
      %577 = vmatprep.subr.bf16.mxu0 0
      %578 = vmatpush2.bf16.msra.mxu0 %v507
      %579 = vmatprep.mubr.bf16.mxu0 %v398
      %580 = vmatmul.mubr.bf16.gmra.mxu0 %v397
      %v581 = vpop.f32.mrf.mxu0
      %v582 = vadd.f32 0.0, %v581
      %v583 = vpop.f32.mrf.mxu0
      %v584 = vpop.f32.mrf.mxu0
      %v585 = vadd.f32 0.0, %v584
      %v586 = vpop.f32.mrf.mxu0
      %587 = vdwg.mxu0
      %588 = vmatprep.subr.bf16.mxu0 0
      %589 = vmatpush1.bf16.msra.mxu0 %v522
      %590 = vmatprep.subr.bf16.mxu0 0
      %591 = vmatpush1.bf16.msra.mxu0 %v521
      %592 = vmatprep.subr.bf16.mxu0 0
      %593 = vmatpush1.bf16.msra.mxu0 %v520
      %594 = vmatprep.subr.bf16.mxu0 0
      %595 = vmatpush1.bf16.msra.mxu0 %v519
      %596 = vmatprep.subr.bf16.mxu0 0
      %597 = vmatpush1.bf16.msra.mxu0 %v518
      %598 = vmatprep.subr.bf16.mxu0 0
      %599 = vmatpush1.bf16.msra.mxu0 %v517
      %600 = vmatprep.subr.bf16.mxu0 0
      %601 = vmatpush1.bf16.msra.mxu0 %v516
      %602 = vmatprep.subr.bf16.mxu0 0
      %603 = vmatpush1.bf16.msra.mxu0 %v515
      %604 = vmatprep.subr.bf16.mxu0 0
      %605 = vmatpush2.bf16.msra.mxu0 0
      %606 = vmatprep.subr.bf16.mxu0 0
      %607 = vmatpush2.bf16.msra.mxu0 0
      %608 = vmatprep.subr.bf16.mxu0 0
      %609 = vmatpush2.bf16.msra.mxu0 0
      %610 = vmatprep.subr.bf16.mxu0 0
      %611 = vmatpush2.bf16.msra.mxu0 0
      %612 = vmatprep.subr.bf16.mxu0 0
      %613 = vmatpush2.bf16.msra.mxu0 0
      %614 = vmatprep.subr.bf16.mxu0 0
      %615 = vmatpush2.bf16.msra.mxu0 0
      %616 = vmatprep.subr.bf16.mxu0 0
      %617 = vmatpush2.bf16.msra.mxu0 0
      %618 = vmatprep.subr.bf16.mxu0 0
      %619 = vmatpush2.bf16.msra.mxu0 0
      %620 = vmatprep.mubr.bf16.mxu0 0
      %621 = vmatmul.mubr.bf16.gmra.mxu0 %v399
      %v622 = vpop.f32.mrf.mxu0
      %v623 = vadd.f32 %v582, %v622
      %v624 = vpop.f32.mrf.mxu0
      %v625 = vpop.f32.mrf.mxu0
      %v626 = vadd.f32 %v585, %v625
      %v627 = vpop.f32.mrf.mxu0
      %628 = vdwg.mxu0
      %v629 = vld [vmem:[%s326] sm:$0xf]
      %v630 = vld [vmem:[%s326 + $0x4] sm:$0xf]
      %v631 = vld [vmem:[%s5] sm:$0xf]
      %v632 = vld [vmem:[%s5 + $0x4] sm:$0xf]
      %v633 = vld [vmem:[%s5 + $0x8] sm:$0xf]
      %v634 = vld [vmem:[%s5 + $0xc] sm:$0xf]
      %v635 = vld [vmem:[%s5 + $0x10] sm:$0xf]
      %v636 = vld [vmem:[%s5 + $0x14] sm:$0xf]
      %v637 = vld [vmem:[%s5 + $0x18] sm:$0xf]
      %v638 = vld [vmem:[%s5 + $0x1c] sm:$0xf]
      %v639 = vld [vmem:[%s5 + $0x20] sm:$0xf]
      %v640 = vld [vmem:[%s5 + $0x24] sm:$0xf]
      %v641 = vld [vmem:[%s5 + $0x28] sm:$0xf]
      %v642 = vld [vmem:[%s5 + $0x2c] sm:$0xf]
      %v643 = vld [vmem:[%s5 + $0x30] sm:$0xf]
      %v644 = vld [vmem:[%s5 + $0x34] sm:$0xf]
      %v645 = vld [vmem:[%s5 + $0x38] sm:$0xf]
      %v646 = vld [vmem:[%s5 + $0x3c] sm:$0xf]
      %v649 = vunpack.c.l.b16 %v629
      %v650 = vunpack.c.l.b16 %v630
      %v651 = vpack.c.b16 %v650, %v649
      %v669 = vunpack.c.l.b16 %v631
      %v670 = vunpack.c.l.b16 %v632
      %v671 = vunpack.c.l.b16 %v633
      %v672 = vunpack.c.l.b16 %v634
      %v673 = vunpack.c.l.b16 %v635
      %v674 = vunpack.c.l.b16 %v636
      %v675 = vunpack.c.l.b16 %v637
      %v676 = vunpack.c.l.b16 %v638
      %v677 = vunpack.c.l.b16 %v639
      %v678 = vunpack.c.l.b16 %v640
      %v679 = vunpack.c.l.b16 %v641
      %v680 = vunpack.c.l.b16 %v642
      %v681 = vunpack.c.l.b16 %v643
      %v682 = vunpack.c.l.b16 %v644
      %v683 = vunpack.c.l.b16 %v645
      %v684 = vunpack.c.l.b16 %v646
      %v685 = vpack.c.b16 %v670, %v669
      %v686 = vpack.c.b16 %v672, %v671
      %v687 = vpack.c.b16 %v674, %v673
      %v688 = vpack.c.b16 %v676, %v675
      %v689 = vpack.c.b16 %v678, %v677
      %v690 = vpack.c.b16 %v680, %v679
      %v691 = vpack.c.b16 %v682, %v681
      %v692 = vpack.c.b16 %v684, %v683
      %701 = vmatprep.subr.bf16.mxu0 0
      %702 = vmatpush1.bf16.msra.mxu0 %v692
      %703 = vmatprep.subr.bf16.mxu0 0
      %704 = vmatpush1.bf16.msra.mxu0 %v691
      %705 = vmatprep.subr.bf16.mxu0 0
      %706 = vmatpush1.bf16.msra.mxu0 %v690
      %707 = vmatprep.subr.bf16.mxu0 0
      %708 = vmatpush1.bf16.msra.mxu0 %v689
      %709 = vmatprep.subr.bf16.mxu0 0
      %710 = vmatpush1.bf16.msra.mxu0 %v688
      %711 = vmatprep.subr.bf16.mxu0 0
      %712 = vmatpush1.bf16.msra.mxu0 %v687
      %713 = vmatprep.subr.bf16.mxu0 0
      %714 = vmatpush1.bf16.msra.mxu0 %v686
      %715 = vmatprep.subr.bf16.mxu0 0
      %716 = vmatpush1.bf16.msra.mxu0 %v685
      %717 = vmatprep.subr.bf16.mxu0 0
      %718 = vmatpush2.bf16.msra.mxu0 0
      %719 = vmatprep.subr.bf16.mxu0 0
      %720 = vmatpush2.bf16.msra.mxu0 0
      %721 = vmatprep.subr.bf16.mxu0 0
      %722 = vmatpush2.bf16.msra.mxu0 0
      %723 = vmatprep.subr.bf16.mxu0 0
      %724 = vmatpush2.bf16.msra.mxu0 0
      %725 = vmatprep.subr.bf16.mxu0 0
      %726 = vmatpush2.bf16.msra.mxu0 0
      %727 = vmatprep.subr.bf16.mxu0 0
      %728 = vmatpush2.bf16.msra.mxu0 0
      %729 = vmatprep.subr.bf16.mxu0 0
      %730 = vmatpush2.bf16.msra.mxu0 0
      %731 = vmatprep.subr.bf16.mxu0 0
      %732 = vmatpush2.bf16.msra.mxu0 0
      %733 = vmatprep.mubr.bf16.mxu0 0
      %734 = vmatmul.mubr.bf16.gmra.mxu0 %v651
      %v735 = vpop.f32.mrf.mxu0
      %v736 = vadd.f32 0.0, %v735
      %v737 = vpop.f32.mrf.mxu0
      %v738 = vpop.f32.mrf.mxu0
      %v739 = vadd.f32 0.0, %v738
      %v740 = vpop.f32.mrf.mxu0
      %741 = vdwg.mxu0
      %v742 = vld [vmem:[%s2] sm:$0x1]
      %v744 = vlaneseq
      %v745 = vshrl.u32 %v744, 7
      %v746 = vsub.s32 0, %v745
      %v747 = vrot.slane %v742, %v746
      %v749 = vmul.f32 %v623, %v747
      %v750 = vmul.f32 %v626, %v747
      %v751 = vld [vmem:[%s3] sm:$0x1]
      %v753 = vlaneseq
      %v754 = vshrl.u32 %v753, 7
      %v755 = vsub.s32 0, %v754
      %v756 = vrot.slane %v751, %v755
      %v758 = vadd.f32 %v749, %v756
      %v759 = vadd.f32 %v750, %v756
      %v760 = vmax.f32 %v758, 0.0
      %v761 = vmax.f32 %v759, 0.0
      %v762 = vld [vmem:[%s6] sm:$0x1]
      %v764 = vlaneseq
      %v765 = vshrl.u32 %v764, 7
      %v766 = vsub.s32 0, %v765
      %v767 = vrot.slane %v762, %v766
      %v769 = vmul.f32 %v736, %v767
      %v770 = vmul.f32 %v739, %v767
      %v771 = vadd.f32 %v760, %v769
      %v772 = vadd.f32 %v761, %v770
      %v773 = vld [vmem:[%s7] sm:$0x1]
      %v775 = vlaneseq
      %v776 = vshrl.u32 %v775, 7
      %v777 = vsub.s32 0, %v776
      %v778 = vrot.slane %v773, %v777
      %v780 = vadd.f32 %v771, %v778
      %v781 = vadd.f32 %v772, %v778
      %v782 = vpack.c.bf16 %v781, %v780
      %v784 = vunpack.c.l.b16 %v782
      %v785 = vunpack.c.h.b16 %v782
      %v786 = vpack.c.b16 %v784, %v784
      %v787 = vpack.c.b16 %v785, %v785
      %790 = vst [vmem:[%s332] sm:$0xf] %v786
      %791 = vst [vmem:[%s332 + $0x4] sm:$0xf] %v787
      %s792 = smul.u32 2, %s19
      %p793 = scmp.lt.s32.totalorder %s792, 3
      %s794 = scalar_select %p793, %s792, 3
      %s795 = smul.addr %s794, 4
      %s796 = scalar_lea.vmem %s8, %s795
      // Predicated region
      $region53: #{fcn_forward.7} parent=51 // pred_check
        %p797 = pneg %p215
      $region54: #{fcn_forward.7} parent=51 // pred_check_branch
        %799 = sbr.rel (%p797) target = $region56
      $region55: #{fcn_forward.7} parent=51 // pred_region
        %s800 = smul.u32 2, %s19
      $region56: #{fcn_forward.7} parent=51 // pred_fallthru
        _
    $region52: #{fcn_forward.7} parent=5 // pred_fallthru
      _
    %p801 = scmp.le.s32.totalorder 2, %s14
    // Predicated region
    $region57: #{fcn_forward.7} parent=5 // pred_check
      %p802 = pneg %p801
    $region58: #{fcn_forward.7} parent=5 // pred_check_branch
      %804 = sbr.rel (%p802) target = $region60
    $region59: #{fcn_forward.7} parent=5 // pred_region
      %s805 = ssub.s32 %s14, 2
      // Predicated region
      $region61: #{fcn_forward.7} parent=59 // pred_check
        %p806 = pneg %p221
      $region62: #{fcn_forward.7} parent=59 // pred_check_branch
        %808 = sbr.rel (%p806) target = $region64
      $region63: #{fcn_forward.7} parent=59 // pred_region
        %s809 = smul.u32 2, %s20
        %p810 = scmp.lt.s32.totalorder %s809, 3
        %s811 = scalar_select %p810, %s809, 3
        %s812 = smul.addr %s811, 4
        %s813 = scalar_lea.vmem %s8, %s812
      $region64: #{fcn_forward.7} parent=59 // pred_fallthru
        _
    $region60: #{fcn_forward.7} parent=5 // pred_fallthru
      _
  $region6: #{fcn_forward.7} parent=0 // loop_footer
    %s18 = sadd.s32 1, %s14
  $region7: #{fcn_forward.7} parent=0 // loop_footer_branch
    %13 = sbr.rel target = $region3
  $region8: #{fcn_forward.7} parent=0 // loop_exit
    _

// kernel: fcn_forward.8
$region0: #{fcn_forward.8}
  #allocation0 [shape = 'u32[]', space=smem, size = 0x4, offset = 0x4, fixed_abs, tag = 'smem constant byte address 0x4 - core index']
  #allocation1 [shape = 'u32[144,128]{1,0:T(1,128)}', space=vmem, size = 0x12000, scoped, tag = 'internal scratch']
  %s0 = inlined_call_operand.vmem [shape: bf16[16,640], index: 0, kind: input, shape index: {}]
  %s1 = inlined_call_operand.vmem [shape: bf16[640,128], index: 1, kind: input, shape index: {}]
  %s2 = inlined_call_operand.vmem [shape: f32[1,128], index: 2, kind: input, shape index: {}]
  %s3 = inlined_call_operand.vmem [shape: f32[1,128], index: 3, kind: input, shape index: {}]
  %s4 = inlined_call_operand.vmem [shape: bf16[16,128], index: 4, kind: input, shape index: {}]
  %s5 = inlined_call_operand.vmem [shape: bf16[128,128], index: 5, kind: input, shape index: {}]
  %s6 = inlined_call_operand.vmem [shape: f32[1,128], index: 6, kind: input, shape index: {}]
  %s7 = inlined_call_operand.vmem [shape: f32[1,128], index: 7, kind: input, shape index: {}]
  %s8 = inlined_call_operand.vmem [shape: bf16[16,128], index: 8, kind: output, shape index: {}]
  %s9 = sld [smem:[#allocation0]]
  $region42: #{fcn_forward.8} parent=0
    _
  %s11 = ssub.s32 1, %s9
  %s12 = scalar_select 0, %s11, %s9
  // Predicated region
  $region2: #{fcn_forward.8} parent=0 // pred_check
    _
  $region3: #{fcn_forward.8} parent=0 // pred_check_branch
    %14 = sbr.rel (0) target = $region5
  $region4: #{fcn_forward.8} parent=0 // pred_region
    _
  $region5: #{fcn_forward.8} parent=0 // pred_fallthru
    _
  // Predicated region
  $region6: #{fcn_forward.8} parent=0 // pred_check
    _
  $region7: #{fcn_forward.8} parent=0 // pred_check_branch
    %16 = sbr.rel (0) target = $region9
  $region8: #{fcn_forward.8} parent=0 // pred_region
    _
  $region9: #{fcn_forward.8} parent=0 // pred_fallthru
    _
  // Predicated region
  $region10: #{fcn_forward.8} parent=0 // pred_check
    _
  $region11: #{fcn_forward.8} parent=0 // pred_check_branch
    %18 = sbr.rel (0) target = $region13
  $region12: #{fcn_forward.8} parent=0 // pred_region
    _
  $region13: #{fcn_forward.8} parent=0 // pred_fallthru
    _
  // Predicated region
  $region14: #{fcn_forward.8} parent=0 // pred_check
    _
  $region15: #{fcn_forward.8} parent=0 // pred_check_branch
    %20 = sbr.rel (0) target = $region17
  $region16: #{fcn_forward.8} parent=0 // pred_region
    _
  $region17: #{fcn_forward.8} parent=0 // pred_fallthru
    _
  // Predicated region
  $region18: #{fcn_forward.8} parent=0 // pred_check
    _
  $region19: #{fcn_forward.8} parent=0 // pred_check_branch
    %22 = sbr.rel (0) target = $region21
  $region20: #{fcn_forward.8} parent=0 // pred_region
    _
  $region21: #{fcn_forward.8} parent=0 // pred_fallthru
    _
  // Predicated region
  $region22: #{fcn_forward.8} parent=0 // pred_check
    _
  $region23: #{fcn_forward.8} parent=0 // pred_check_branch
    %24 = sbr.rel (0) target = $region25
  $region24: #{fcn_forward.8} parent=0 // pred_region
    _
  $region25: #{fcn_forward.8} parent=0 // pred_fallthru
    _
  // Predicated region
  $region26: #{fcn_forward.8} parent=0 // pred_check
    _
  $region27: #{fcn_forward.8} parent=0 // pred_check_branch
    %26 = sbr.rel (0) target = $region29
  $region28: #{fcn_forward.8} parent=0 // pred_region
    _
  $region29: #{fcn_forward.8} parent=0 // pred_fallthru
    _
  // Predicated region
  $region30: #{fcn_forward.8} parent=0 // pred_check
    _
  $region31: #{fcn_forward.8} parent=0 // pred_check_branch
    %28 = sbr.rel (0) target = $region33
  $region32: #{fcn_forward.8} parent=0 // pred_region
    _
  $region33: #{fcn_forward.8} parent=0 // pred_fallthru
    _
  %v30 = vld [vmem:[%s0] sm:$0xff]
  %v31 = vld [vmem:[%s0 + $0x8] sm:$0xff]
  %v32 = vld [vmem:[%s0 + $0x10] sm:$0xf]
  %v33 = vld [vmem:[%s0 + $0x14] sm:$0xff]
  %v34 = vld [vmem:[%s0 + $0x1c] sm:$0xff]
  %v35 = vld [vmem:[%s0 + $0x24] sm:$0xf]
  %v36 = vld [vmem:[%s1] sm:$0xf]
  %v37 = vld [vmem:[%s1 + $0x4] sm:$0xf]
  %v38 = vld [vmem:[%s1 + $0x8] sm:$0xf]
  %v39 = vld [vmem:[%s1 + $0xc] sm:$0xf]
  %v40 = vld [vmem:[%s1 + $0x10] sm:$0xf]
  %v41 = vld [vmem:[%s1 + $0x14] sm:$0xf]
  %v42 = vld [vmem:[%s1 + $0x18] sm:$0xf]
  %v43 = vld [vmem:[%s1 + $0x1c] sm:$0xf]
  %v44 = vld [vmem:[%s1 + $0x20] sm:$0xf]
  %v45 = vld [vmem:[%s1 + $0x24] sm:$0xf]
  %v46 = vld [vmem:[%s1 + $0x28] sm:$0xf]
  %v47 = vld [vmem:[%s1 + $0x2c] sm:$0xf]
  %v48 = vld [vmem:[%s1 + $0x30] sm:$0xf]
  %v49 = vld [vmem:[%s1 + $0x34] sm:$0xf]
  %v50 = vld [vmem:[%s1 + $0x38] sm:$0xf]
  %v51 = vld [vmem:[%s1 + $0x3c] sm:$0xf]
  %v52 = vld [vmem:[%s1 + $0x40] sm:$0xf]
  %v53 = vld [vmem:[%s1 + $0x44] sm:$0xf]
  %v54 = vld [vmem:[%s1 + $0x48] sm:$0xf]
  %v55 = vld [vmem:[%s1 + $0x4c] sm:$0xf]
  %v56 = vld [vmem:[%s1 + $0x50] sm:$0xf]
  %v57 = vld [vmem:[%s1 + $0x54] sm:$0xf]
  %v58 = vld [vmem:[%s1 + $0x58] sm:$0xf]
  %v59 = vld [vmem:[%s1 + $0x5c] sm:$0xf]
  %v60 = vld [vmem:[%s1 + $0x60] sm:$0xf]
  %v61 = vld [vmem:[%s1 + $0x64] sm:$0xf]
  %v62 = vld [vmem:[%s1 + $0x68] sm:$0xf]
  %v63 = vld [vmem:[%s1 + $0x6c] sm:$0xf]
  %v64 = vld [vmem:[%s1 + $0x70] sm:$0xf]
  %v65 = vld [vmem:[%s1 + $0x74] sm:$0xf]
  %v66 = vld [vmem:[%s1 + $0x78] sm:$0xf]
  %v67 = vld [vmem:[%s1 + $0x7c] sm:$0xf]
  %v68 = vld [vmem:[%s1 + $0x80] sm:$0xf]
  %v69 = vld [vmem:[%s1 + $0x84] sm:$0xf]
  %v70 = vld [vmem:[%s1 + $0x88] sm:$0xf]
  %v71 = vld [vmem:[%s1 + $0x8c] sm:$0xf]
  %v72 = vld [vmem:[%s1 + $0x90] sm:$0xf]
  %v73 = vld [vmem:[%s1 + $0x94] sm:$0xf]
  %v74 = vld [vmem:[%s1 + $0x98] sm:$0xf]
  %v75 = vld [vmem:[%s1 + $0x9c] sm:$0xf]
  %v76 = vld [vmem:[%s1 + $0xa0] sm:$0xf]
  %v77 = vld [vmem:[%s1 + $0xa4] sm:$0xf]
  %v78 = vld [vmem:[%s1 + $0xa8] sm:$0xf]
  %v79 = vld [vmem:[%s1 + $0xac] sm:$0xf]
  %v80 = vld [vmem:[%s1 + $0xb0] sm:$0xf]
  %v81 = vld [vmem:[%s1 + $0xb4] sm:$0xf]
  %v82 = vld [vmem:[%s1 + $0xb8] sm:$0xf]
  %v83 = vld [vmem:[%s1 + $0xbc] sm:$0xf]
  %v84 = vld [vmem:[%s1 + $0xc0] sm:$0xf]
  %v85 = vld [vmem:[%s1 + $0xc4] sm:$0xf]
  %v86 = vld [vmem:[%s1 + $0xc8] sm:$0xf]
  %v87 = vld [vmem:[%s1 + $0xcc] sm:$0xf]
  %v88 = vld [vmem:[%s1 + $0xd0] sm:$0xf]
  %v89 = vld [vmem:[%s1 + $0xd4] sm:$0xf]
  %v90 = vld [vmem:[%s1 + $0xd8] sm:$0xf]
  %v91 = vld [vmem:[%s1 + $0xdc] sm:$0xf]
  %v92 = vld [vmem:[%s1 + $0xe0] sm:$0xf]
  %v93 = vld [vmem:[%s1 + $0xe4] sm:$0xf]
  %v94 = vld [vmem:[%s1 + $0xe8] sm:$0xf]
  %v95 = vld [vmem:[%s1 + $0xec] sm:$0xf]
  %v96 = vld [vmem:[%s1 + $0xf0] sm:$0xf]
  %v97 = vld [vmem:[%s1 + $0xf4] sm:$0xf]
  %v98 = vld [vmem:[%s1 + $0xf8] sm:$0xf]
  %v99 = vld [vmem:[%s1 + $0xfc] sm:$0xf]
  %v100 = vld [vmem:[%s1 + $0x100] sm:$0xf]
  %v101 = vld [vmem:[%s1 + $0x104] sm:$0xf]
  %v102 = vld [vmem:[%s1 + $0x108] sm:$0xf]
  %v103 = vld [vmem:[%s1 + $0x10c] sm:$0xf]
  %v104 = vld [vmem:[%s1 + $0x110] sm:$0xf]
  %v105 = vld [vmem:[%s1 + $0x114] sm:$0xf]
  %v106 = vld [vmem:[%s1 + $0x118] sm:$0xf]
  %v107 = vld [vmem:[%s1 + $0x11c] sm:$0xf]
  %v108 = vld [vmem:[%s1 + $0x120] sm:$0xf]
  %v109 = vld [vmem:[%s1 + $0x124] sm:$0xf]
  %v110 = vld [vmem:[%s1 + $0x128] sm:$0xf]
  %v111 = vld [vmem:[%s1 + $0x12c] sm:$0xf]
  %v112 = vld [vmem:[%s1 + $0x130] sm:$0xf]
  %v113 = vld [vmem:[%s1 + $0x134] sm:$0xf]
  %v114 = vld [vmem:[%s1 + $0x138] sm:$0xf]
  %v115 = vld [vmem:[%s1 + $0x13c] sm:$0xf]
  %v122 = vunpack.c.l.b16 %v30
  %v123 = vunpack.c.h.b16 %v30
  %v124 = vunpack.c.l.b16 %v31
  %v125 = vunpack.c.h.b16 %v31
  %v126 = vunpack.c.l.b16 %v32
  %v127 = vunpack.c.l.b16 %v33
  %v128 = vunpack.c.h.b16 %v33
  %v129 = vunpack.c.l.b16 %v34
  %v130 = vunpack.c.h.b16 %v34
  %v131 = vunpack.c.l.b16 %v35
  %v132 = vpack.c.b16 %v127, %v122
  %v133 = vpack.c.b16 %v128, %v123
  %v134 = vpack.c.b16 %v129, %v124
  %v135 = vpack.c.b16 %v130, %v125
  %v136 = vpack.c.b16 %v131, %v126
  %v222 = vunpack.c.l.b16 %v36
  %v223 = vunpack.c.l.b16 %v37
  %v224 = vunpack.c.l.b16 %v38
  %v225 = vunpack.c.l.b16 %v39
  %v226 = vunpack.c.l.b16 %v40
  %v227 = vunpack.c.l.b16 %v41
  %v228 = vunpack.c.l.b16 %v42
  %v229 = vunpack.c.l.b16 %v43
  %v230 = vunpack.c.l.b16 %v44
  %v231 = vunpack.c.l.b16 %v45
  %v232 = vunpack.c.l.b16 %v46
  %v233 = vunpack.c.l.b16 %v47
  %v234 = vunpack.c.l.b16 %v48
  %v235 = vunpack.c.l.b16 %v49
  %v236 = vunpack.c.l.b16 %v50
  %v237 = vunpack.c.l.b16 %v51
  %v238 = vunpack.c.l.b16 %v52
  %v239 = vunpack.c.l.b16 %v53
  %v240 = vunpack.c.l.b16 %v54
  %v241 = vunpack.c.l.b16 %v55
  %v242 = vunpack.c.l.b16 %v56
  %v243 = vunpack.c.l.b16 %v57
  %v244 = vunpack.c.l.b16 %v58
  %v245 = vunpack.c.l.b16 %v59
  %v246 = vunpack.c.l.b16 %v60
  %v247 = vunpack.c.l.b16 %v61
  %v248 = vunpack.c.l.b16 %v62
  %v249 = vunpack.c.l.b16 %v63
  %v250 = vunpack.c.l.b16 %v64
  %v251 = vunpack.c.l.b16 %v65
  %v252 = vunpack.c.l.b16 %v66
  %v253 = vunpack.c.l.b16 %v67
  %v254 = vunpack.c.l.b16 %v68
  %v255 = vunpack.c.l.b16 %v69
  %v256 = vunpack.c.l.b16 %v70
  %v257 = vunpack.c.l.b16 %v71
  %v258 = vunpack.c.l.b16 %v72
  %v259 = vunpack.c.l.b16 %v73
  %v260 = vunpack.c.l.b16 %v74
  %v261 = vunpack.c.l.b16 %v75
  %v262 = vunpack.c.l.b16 %v76
  %v263 = vunpack.c.l.b16 %v77
  %v264 = vunpack.c.l.b16 %v78
  %v265 = vunpack.c.l.b16 %v79
  %v266 = vunpack.c.l.b16 %v80
  %v267 = vunpack.c.l.b16 %v81
  %v268 = vunpack.c.l.b16 %v82
  %v269 = vunpack.c.l.b16 %v83
  %v270 = vunpack.c.l.b16 %v84
  %v271 = vunpack.c.l.b16 %v85
  %v272 = vunpack.c.l.b16 %v86
  %v273 = vunpack.c.l.b16 %v87
  %v274 = vunpack.c.l.b16 %v88
  %v275 = vunpack.c.l.b16 %v89
  %v276 = vunpack.c.l.b16 %v90
  %v277 = vunpack.c.l.b16 %v91
  %v278 = vunpack.c.l.b16 %v92
  %v279 = vunpack.c.l.b16 %v93
  %v280 = vunpack.c.l.b16 %v94
  %v281 = vunpack.c.l.b16 %v95
  %v282 = vunpack.c.l.b16 %v96
  %v283 = vunpack.c.l.b16 %v97
  %v284 = vunpack.c.l.b16 %v98
  %v285 = vunpack.c.l.b16 %v99
  %v286 = vunpack.c.l.b16 %v100
  %v287 = vunpack.c.l.b16 %v101
  %v288 = vunpack.c.l.b16 %v102
  %v289 = vunpack.c.l.b16 %v103
  %v290 = vunpack.c.l.b16 %v104
  %v291 = vunpack.c.l.b16 %v105
  %v292 = vunpack.c.l.b16 %v106
  %v293 = vunpack.c.l.b16 %v107
  %v294 = vunpack.c.l.b16 %v108
  %v295 = vunpack.c.l.b16 %v109
  %v296 = vunpack.c.l.b16 %v110
  %v297 = vunpack.c.l.b16 %v111
  %v298 = vunpack.c.l.b16 %v112
  %v299 = vunpack.c.l.b16 %v113
  %v300 = vunpack.c.l.b16 %v114
  %v301 = vunpack.c.l.b16 %v115
  %v302 = vpack.c.b16 %v223, %v222
  %v303 = vpack.c.b16 %v225, %v224
  %v304 = vpack.c.b16 %v227, %v226
  %v305 = vpack.c.b16 %v229, %v228
  %v306 = vpack.c.b16 %v231, %v230
  %v307 = vpack.c.b16 %v233, %v232
  %v308 = vpack.c.b16 %v235, %v234
  %v309 = vpack.c.b16 %v237, %v236
  %v310 = vpack.c.b16 %v239, %v238
  %v311 = vpack.c.b16 %v241, %v240
  %v312 = vpack.c.b16 %v243, %v242
  %v313 = vpack.c.b16 %v245, %v244
  %v314 = vpack.c.b16 %v247, %v246
  %v315 = vpack.c.b16 %v249, %v248
  %v316 = vpack.c.b16 %v251, %v250
  %v317 = vpack.c.b16 %v253, %v252
  %v318 = vpack.c.b16 %v255, %v254
  %v319 = vpack.c.b16 %v257, %v256
  %v320 = vpack.c.b16 %v259, %v258
  %v321 = vpack.c.b16 %v261, %v260
  %v322 = vpack.c.b16 %v263, %v262
  %v323 = vpack.c.b16 %v265, %v264
  %v324 = vpack.c.b16 %v267, %v266
  %v325 = vpack.c.b16 %v269, %v268
  %v326 = vpack.c.b16 %v271, %v270
  %v327 = vpack.c.b16 %v273, %v272
  %v328 = vpack.c.b16 %v275, %v274
  %v329 = vpack.c.b16 %v277, %v276
  %v330 = vpack.c.b16 %v279, %v278
  %v331 = vpack.c.b16 %v281, %v280
  %v332 = vpack.c.b16 %v283, %v282
  %v333 = vpack.c.b16 %v285, %v284
  %v334 = vpack.c.b16 %v287, %v286
  %v335 = vpack.c.b16 %v289, %v288
  %v336 = vpack.c.b16 %v291, %v290
  %v337 = vpack.c.b16 %v293, %v292
  %v338 = vpack.c.b16 %v295, %v294
  %v339 = vpack.c.b16 %v297, %v296
  %v340 = vpack.c.b16 %v299, %v298
  %v341 = vpack.c.b16 %v301, %v300
  %382 = vmatprep.subr.bf16.mxu0 0
  %383 = vmatpush1.bf16.msra.mxu0 %v309
  %384 = vmatprep.subr.bf16.mxu0 0
  %385 = vmatpush1.bf16.msra.mxu0 %v308
  %386 = vmatprep.subr.bf16.mxu0 0
  %387 = vmatpush1.bf16.msra.mxu0 %v307
  %388 = vmatprep.subr.bf16.mxu0 0
  %389 = vmatpush1.bf16.msra.mxu0 %v306
  %390 = vmatprep.subr.bf16.mxu0 0
  %391 = vmatpush1.bf16.msra.mxu0 %v305
  %392 = vmatprep.subr.bf16.mxu0 0
  %393 = vmatpush1.bf16.msra.mxu0 %v304
  %394 = vmatprep.subr.bf16.mxu0 0
  %395 = vmatpush1.bf16.msra.mxu0 %v303
  %396 = vmatprep.subr.bf16.mxu0 0
  %397 = vmatpush1.bf16.msra.mxu0 %v302
  %398 = vmatprep.subr.bf16.mxu0 0
  %399 = vmatpush2.bf16.msra.mxu0 %v317
  %400 = vmatprep.subr.bf16.mxu0 0
  %401 = vmatpush2.bf16.msra.mxu0 %v316
  %402 = vmatprep.subr.bf16.mxu0 0
  %403 = vmatpush2.bf16.msra.mxu0 %v315
  %404 = vmatprep.subr.bf16.mxu0 0
  %405 = vmatpush2.bf16.msra.mxu0 %v314
  %406 = vmatprep.subr.bf16.mxu0 0
  %407 = vmatpush2.bf16.msra.mxu0 %v313
  %408 = vmatprep.subr.bf16.mxu0 0
  %409 = vmatpush2.bf16.msra.mxu0 %v312
  %410 = vmatprep.subr.bf16.mxu0 0
  %411 = vmatpush2.bf16.msra.mxu0 %v311
  %412 = vmatprep.subr.bf16.mxu0 0
  %413 = vmatpush2.bf16.msra.mxu0 %v310
  %414 = vmatprep.mubr.bf16.mxu0 %v133
  %415 = vmatmul.mubr.bf16.gmra.mxu0 %v132
  %v416 = vpop.f32.mrf.mxu0
  %v417 = vadd.f32 0.0, %v416
  %v418 = vpop.f32.mrf.mxu0
  %v419 = vpop.f32.mrf.mxu0
  %v420 = vadd.f32 0.0, %v419
  %v421 = vpop.f32.mrf.mxu0
  %422 = vdwg.mxu0
  %423 = vmatprep.subr.bf16.mxu0 0
  %424 = vmatpush1.bf16.msra.mxu0 %v325
  %425 = vmatprep.subr.bf16.mxu0 0
  %426 = vmatpush1.bf16.msra.mxu0 %v324
  %427 = vmatprep.subr.bf16.mxu0 0
  %428 = vmatpush1.bf16.msra.mxu0 %v323
  %429 = vmatprep.subr.bf16.mxu0 0
  %430 = vmatpush1.bf16.msra.mxu0 %v322
  %431 = vmatprep.subr.bf16.mxu0 0
  %432 = vmatpush1.bf16.msra.mxu0 %v321
  %433 = vmatprep.subr.bf16.mxu0 0
  %434 = vmatpush1.bf16.msra.mxu0 %v320
  %435 = vmatprep.subr.bf16.mxu0 0
  %436 = vmatpush1.bf16.msra.mxu0 %v319
  %437 = vmatprep.subr.bf16.mxu0 0
  %438 = vmatpush1.bf16.msra.mxu0 %v318
  %439 = vmatprep.subr.bf16.mxu0 0
  %440 = vmatpush2.bf16.msra.mxu0 %v333
  %441 = vmatprep.subr.bf16.mxu0 0
  %442 = vmatpush2.bf16.msra.mxu0 %v332
  %443 = vmatprep.subr.bf16.mxu0 0
  %444 = vmatpush2.bf16.msra.mxu0 %v331
  %445 = vmatprep.subr.bf16.mxu0 0
  %446 = vmatpush2.bf16.msra.mxu0 %v330
  %447 = vmatprep.subr.bf16.mxu0 0
  %448 = vmatpush2.bf16.msra.mxu0 %v329
  %449 = vmatprep.subr.bf16.mxu0 0
  %450 = vmatpush2.bf16.msra.mxu0 %v328
  %451 = vmatprep.subr.bf16.mxu0 0
  %452 = vmatpush2.bf16.msra.mxu0 %v327
  %453 = vmatprep.subr.bf16.mxu0 0
  %454 = vmatpush2.bf16.msra.mxu0 %v326
  %455 = vmatprep.mubr.bf16.mxu0 %v135
  %456 = vmatmul.mubr.bf16.gmra.mxu0 %v134
  %v457 = vpop.f32.mrf.mxu0
  %v458 = vadd.f32 %v417, %v457
  %v459 = vpop.f32.mrf.mxu0
  %v460 = vpop.f32.mrf.mxu0
  %v461 = vadd.f32 %v420, %v460
  %v462 = vpop.f32.mrf.mxu0
  %463 = vdwg.mxu0
  %464 = vmatprep.subr.bf16.mxu0 0
  %465 = vmatpush1.bf16.msra.mxu0 %v341
  %466 = vmatprep.subr.bf16.mxu0 0
  %467 = vmatpush1.bf16.msra.mxu0 %v340
  %468 = vmatprep.subr.bf16.mxu0 0
  %469 = vmatpush1.bf16.msra.mxu0 %v339
  %470 = vmatprep.subr.bf16.mxu0 0
  %471 = vmatpush1.bf16.msra.mxu0 %v338
  %472 = vmatprep.subr.bf16.mxu0 0
  %473 = vmatpush1.bf16.msra.mxu0 %v337
  %474 = vmatprep.subr.bf16.mxu0 0
  %475 = vmatpush1.bf16.msra.mxu0 %v336
  %476 = vmatprep.subr.bf16.mxu0 0
  %477 = vmatpush1.bf16.msra.mxu0 %v335
  %478 = vmatprep.subr.bf16.mxu0 0
  %479 = vmatpush1.bf16.msra.mxu0 %v334
  %480 = vmatprep.subr.bf16.mxu0 0
  %481 = vmatpush2.bf16.msra.mxu0 0
  %482 = vmatprep.subr.bf16.mxu0 0
  %483 = vmatpush2.bf16.msra.mxu0 0
  %484 = vmatprep.subr.bf16.mxu0 0
  %485 = vmatpush2.bf16.msra.mxu0 0
  %486 = vmatprep.subr.bf16.mxu0 0
  %487 = vmatpush2.bf16.msra.mxu0 0
  %488 = vmatprep.subr.bf16.mxu0 0
  %489 = vmatpush2.bf16.msra.mxu0 0
  %490 = vmatprep.subr.bf16.mxu0 0
  %491 = vmatpush2.bf16.msra.mxu0 0
  %492 = vmatprep.subr.bf16.mxu0 0
  %493 = vmatpush2.bf16.msra.mxu0 0
  %494 = vmatprep.subr.bf16.mxu0 0
  %495 = vmatpush2.bf16.msra.mxu0 0
  %496 = vmatprep.mubr.bf16.mxu0 0
  %497 = vmatmul.mubr.bf16.gmra.mxu0 %v136
  %v498 = vpop.f32.mrf.mxu0
  %v499 = vadd.f32 %v458, %v498
  %v500 = vpop.f32.mrf.mxu0
  %v501 = vpop.f32.mrf.mxu0
  %v502 = vadd.f32 %v461, %v501
  %v503 = vpop.f32.mrf.mxu0
  %504 = vdwg.mxu0
  %v505 = vld [vmem:[%s4] sm:$0xf]
  %v506 = vld [vmem:[%s4 + $0x4] sm:$0xf]
  %v507 = vld [vmem:[%s5] sm:$0xf]
  %v508 = vld [vmem:[%s5 + $0x4] sm:$0xf]
  %v509 = vld [vmem:[%s5 + $0x8] sm:$0xf]
  %v510 = vld [vmem:[%s5 + $0xc] sm:$0xf]
  %v511 = vld [vmem:[%s5 + $0x10] sm:$0xf]
  %v512 = vld [vmem:[%s5 + $0x14] sm:$0xf]
  %v513 = vld [vmem:[%s5 + $0x18] sm:$0xf]
  %v514 = vld [vmem:[%s5 + $0x1c] sm:$0xf]
  %v515 = vld [vmem:[%s5 + $0x20] sm:$0xf]
  %v516 = vld [vmem:[%s5 + $0x24] sm:$0xf]
  %v517 = vld [vmem:[%s5 + $0x28] sm:$0xf]
  %v518 = vld [vmem:[%s5 + $0x2c] sm:$0xf]
  %v519 = vld [vmem:[%s5 + $0x30] sm:$0xf]
  %v520 = vld [vmem:[%s5 + $0x34] sm:$0xf]
  %v521 = vld [vmem:[%s5 + $0x38] sm:$0xf]
  %v522 = vld [vmem:[%s5 + $0x3c] sm:$0xf]
  %v525 = vunpack.c.l.b16 %v505
  %v526 = vunpack.c.l.b16 %v506
  %v527 = vpack.c.b16 %v526, %v525
  %v545 = vunpack.c.l.b16 %v507
  %v546 = vunpack.c.l.b16 %v508
  %v547 = vunpack.c.l.b16 %v509
  %v548 = vunpack.c.l.b16 %v510
  %v549 = vunpack.c.l.b16 %v511
  %v550 = vunpack.c.l.b16 %v512
  %v551 = vunpack.c.l.b16 %v513
  %v552 = vunpack.c.l.b16 %v514
  %v553 = vunpack.c.l.b16 %v515
  %v554 = vunpack.c.l.b16 %v516
  %v555 = vunpack.c.l.b16 %v517
  %v556 = vunpack.c.l.b16 %v518
  %v557 = vunpack.c.l.b16 %v519
  %v558 = vunpack.c.l.b16 %v520
  %v559 = vunpack.c.l.b16 %v521
  %v560 = vunpack.c.l.b16 %v522
  %v561 = vpack.c.b16 %v546, %v545
  %v562 = vpack.c.b16 %v548, %v547
  %v563 = vpack.c.b16 %v550, %v549
  %v564 = vpack.c.b16 %v552, %v551
  %v565 = vpack.c.b16 %v554, %v553
  %v566 = vpack.c.b16 %v556, %v555
  %v567 = vpack.c.b16 %v558, %v557
  %v568 = vpack.c.b16 %v560, %v559
  %577 = vmatprep.subr.bf16.mxu0 0
  %578 = vmatpush1.bf16.msra.mxu0 %v568
  %579 = vmatprep.subr.bf16.mxu0 0
  %580 = vmatpush1.bf16.msra.mxu0 %v567
  %581 = vmatprep.subr.bf16.mxu0 0
  %582 = vmatpush1.bf16.msra.mxu0 %v566
  %583 = vmatprep.subr.bf16.mxu0 0
  %584 = vmatpush1.bf16.msra.mxu0 %v565
  %585 = vmatprep.subr.bf16.mxu0 0
  %586 = vmatpush1.bf16.msra.mxu0 %v564
  %587 = vmatprep.subr.bf16.mxu0 0
  %588 = vmatpush1.bf16.msra.mxu0 %v563
  %589 = vmatprep.subr.bf16.mxu0 0
  %590 = vmatpush1.bf16.msra.mxu0 %v562
  %591 = vmatprep.subr.bf16.mxu0 0
  %592 = vmatpush1.bf16.msra.mxu0 %v561
  %593 = vmatprep.subr.bf16.mxu0 0
  %594 = vmatpush2.bf16.msra.mxu0 0
  %595 = vmatprep.subr.bf16.mxu0 0
  %596 = vmatpush2.bf16.msra.mxu0 0
  %597 = vmatprep.subr.bf16.mxu0 0
  %598 = vmatpush2.bf16.msra.mxu0 0
  %599 = vmatprep.subr.bf16.mxu0 0
  %600 = vmatpush2.bf16.msra.mxu0 0
  %601 = vmatprep.subr.bf16.mxu0 0
  %602 = vmatpush2.bf16.msra.mxu0 0
  %603 = vmatprep.subr.bf16.mxu0 0
  %604 = vmatpush2.bf16.msra.mxu0 0
  %605 = vmatprep.subr.bf16.mxu0 0
  %606 = vmatpush2.bf16.msra.mxu0 0
  %607 = vmatprep.subr.bf16.mxu0 0
  %608 = vmatpush2.bf16.msra.mxu0 0
  %609 = vmatprep.mubr.bf16.mxu0 0
  %610 = vmatmul.mubr.bf16.gmra.mxu0 %v527
  %v611 = vpop.f32.mrf.mxu0
  %v612 = vadd.f32 0.0, %v611
  %v613 = vpop.f32.mrf.mxu0
  %v614 = vpop.f32.mrf.mxu0
  %v615 = vadd.f32 0.0, %v614
  %v616 = vpop.f32.mrf.mxu0
  %617 = vdwg.mxu0
  %v618 = vld [vmem:[%s2] sm:$0x1]
  %v620 = vlaneseq
  %v621 = vshrl.u32 %v620, 7
  %v622 = vsub.s32 0, %v621
  %v623 = vrot.slane %v618, %v622
  %v625 = vmul.f32 %v499, %v623
  %v626 = vmul.f32 %v502, %v623
  %v627 = vld [vmem:[%s3] sm:$0x1]
  %v629 = vlaneseq
  %v630 = vshrl.u32 %v629, 7
  %v631 = vsub.s32 0, %v630
  %v632 = vrot.slane %v627, %v631
  %v634 = vadd.f32 %v625, %v632
  %v635 = vadd.f32 %v626, %v632
  %v636 = vmax.f32 %v634, 0.0
  %v637 = vmax.f32 %v635, 0.0
  %v638 = vld [vmem:[%s6] sm:$0x1]
  %v640 = vlaneseq
  %v641 = vshrl.u32 %v640, 7
  %v642 = vsub.s32 0, %v641
  %v643 = vrot.slane %v638, %v642
  %v645 = vmul.f32 %v612, %v643
  %v646 = vmul.f32 %v615, %v643
  %v647 = vadd.f32 %v636, %v645
  %v648 = vadd.f32 %v637, %v646
  %v649 = vld [vmem:[%s7] sm:$0x1]
  %v651 = vlaneseq
  %v652 = vshrl.u32 %v651, 7
  %v653 = vsub.s32 0, %v652
  %v654 = vrot.slane %v649, %v653
  %v656 = vadd.f32 %v647, %v654
  %v657 = vadd.f32 %v648, %v654
  %v658 = vpack.c.bf16 %v657, %v656
  %v660 = vunpack.c.l.b16 %v658
  %v661 = vunpack.c.h.b16 %v658
  %v662 = vpack.c.b16 %v660, %v660
  %v663 = vpack.c.b16 %v661, %v661
  %666 = vst [vmem:[%s8] sm:$0xf] %v662
  %667 = vst [vmem:[%s8 + $0x4] sm:$0xf] %v663
  // Predicated region
  $region34: #{fcn_forward.8} parent=0 // pred_check
    _
  $region35: #{fcn_forward.8} parent=0 // pred_check_branch
    %669 = sbr.rel (0) target = $region37
  $region36: #{fcn_forward.8} parent=0 // pred_region
    _
  $region37: #{fcn_forward.8} parent=0 // pred_fallthru
    _
  // Predicated region
  $region38: #{fcn_forward.8} parent=0 // pred_check
    _
  $region39: #{fcn_forward.8} parent=0 // pred_check_branch
    %671 = sbr.rel (0) target = $region41
  $region40: #{fcn_forward.8} parent=0 // pred_region
    _
  $region41: #{fcn_forward.8} parent=0 // pred_fallthru
    _

// kernel: tile.33
$region0: #{tile.33}
  #allocation0 [shape = 's32[1]{0}', space=sflag, size = 0x4, scoped, tag = 'scoped memory for tile.33']
  %s0 = inlined_call_operand.vmem [shape: f32[64], index: 0, kind: input, shape index: {}]
  %s1 = inlined_call_operand.vmem [shape: f32[4,64], index: 1, kind: output, shape index: {}]
  // Predicated region
  $region2: #{tile.33} parent=0 // pred_check
    _
  $region3: #{tile.33} parent=0 // pred_check_branch
    %3 = sbr.rel (0) target = $region5
  $region4: #{tile.33} parent=0 // pred_region
    _
  $region5: #{tile.33} parent=0 // pred_fallthru
    _
  %v4 = vld [vmem:[%s0] ss:$0 sm:$0xff]
  %5 = vst [vmem:[%s1] sm:$0xf] %v4

// kernel: fcn_forward.9
$region0: #{fcn_forward.9}
  #allocation0 [shape = 'u32[]', space=smem, size = 0x4, offset = 0x4, fixed_abs, tag = 'smem constant byte address 0x4 - core index']
  #allocation1 [shape = 'u32[144,128]{1,0:T(1,128)}', space=vmem, size = 0x12000, scoped, tag = 'internal scratch']
  %s0 = inlined_call_operand.vmem [shape: bf16[16,512], index: 0, kind: input, shape index: {}]
  %s1 = inlined_call_operand.vmem [shape: bf16[512,256], index: 1, kind: input, shape index: {}]
  %s2 = inlined_call_operand.vmem [shape: f32[1,256], index: 2, kind: input, shape index: {}]
  %s3 = inlined_call_operand.vmem [shape: f32[1,256], index: 3, kind: input, shape index: {}]
  %s4 = inlined_call_operand.vmem [shape: bf16[16,256], index: 4, kind: output, shape index: {}]
  %s5 = sld [smem:[#allocation0]]
  $region26: #{fcn_forward.9} parent=0
    _
  %s7 = ssub.s32 1, %s5
  %s8 = scalar_select 0, %s7, %s5
  // Predicated region
  $region2: #{fcn_forward.9} parent=0 // pred_check
    _
  $region3: #{fcn_forward.9} parent=0 // pred_check_branch
    %10 = sbr.rel (0) target = $region5
  $region4: #{fcn_forward.9} parent=0 // pred_region
    _
  $region5: #{fcn_forward.9} parent=0 // pred_fallthru
    _
  // Predicated region
  $region6: #{fcn_forward.9} parent=0 // pred_check
    _
  $region7: #{fcn_forward.9} parent=0 // pred_check_branch
    %12 = sbr.rel (0) target = $region9
  $region8: #{fcn_forward.9} parent=0 // pred_region
    _
  $region9: #{fcn_forward.9} parent=0 // pred_fallthru
    _
  // Predicated region
  $region10: #{fcn_forward.9} parent=0 // pred_check
    _
  $region11: #{fcn_forward.9} parent=0 // pred_check_branch
    %14 = sbr.rel (0) target = $region13
  $region12: #{fcn_forward.9} parent=0 // pred_region
    _
  $region13: #{fcn_forward.9} parent=0 // pred_fallthru
    _
  // Predicated region
  $region14: #{fcn_forward.9} parent=0 // pred_check
    _
  $region15: #{fcn_forward.9} parent=0 // pred_check_branch
    %16 = sbr.rel (0) target = $region17
  $region16: #{fcn_forward.9} parent=0 // pred_region
    _
  $region17: #{fcn_forward.9} parent=0 // pred_fallthru
    _
  %v17 = vld [vmem:[%s0] sm:$0xff]
  %v18 = vld [vmem:[%s0 + $0x8] sm:$0xff]
  %v19 = vld [vmem:[%s0 + $0x10] sm:$0xff]
  %v20 = vld [vmem:[%s0 + $0x18] sm:$0xff]
  %v21 = vld [vmem:[%s1] sm:$0xff]
  %v22 = vld [vmem:[%s1 + $0x8] sm:$0xff]
  %v23 = vld [vmem:[%s1 + $0x10] sm:$0xff]
  %v24 = vld [vmem:[%s1 + $0x18] sm:$0xff]
  %v25 = vld [vmem:[%s1 + $0x20] sm:$0xff]
  %v26 = vld [vmem:[%s1 + $0x28] sm:$0xff]
  %v27 = vld [vmem:[%s1 + $0x30] sm:$0xff]
  %v28 = vld [vmem:[%s1 + $0x38] sm:$0xff]
  %v29 = vld [vmem:[%s1 + $0x40] sm:$0xff]
  %v30 = vld [vmem:[%s1 + $0x48] sm:$0xff]
  %v31 = vld [vmem:[%s1 + $0x50] sm:$0xff]
  %v32 = vld [vmem:[%s1 + $0x58] sm:$0xff]
  %v33 = vld [vmem:[%s1 + $0x60] sm:$0xff]
  %v34 = vld [vmem:[%s1 + $0x68] sm:$0xff]
  %v35 = vld [vmem:[%s1 + $0x70] sm:$0xff]
  %v36 = vld [vmem:[%s1 + $0x78] sm:$0xff]
  %v37 = vld [vmem:[%s1 + $0x80] sm:$0xff]
  %v38 = vld [vmem:[%s1 + $0x88] sm:$0xff]
  %v39 = vld [vmem:[%s1 + $0x90] sm:$0xff]
  %v40 = vld [vmem:[%s1 + $0x98] sm:$0xff]
  %v41 = vld [vmem:[%s1 + $0xa0] sm:$0xff]
  %v42 = vld [vmem:[%s1 + $0xa8] sm:$0xff]
  %v43 = vld [vmem:[%s1 + $0xb0] sm:$0xff]
  %v44 = vld [vmem:[%s1 + $0xb8] sm:$0xff]
  %v45 = vld [vmem:[%s1 + $0xc0] sm:$0xff]
  %v46 = vld [vmem:[%s1 + $0xc8] sm:$0xff]
  %v47 = vld [vmem:[%s1 + $0xd0] sm:$0xff]
  %v48 = vld [vmem:[%s1 + $0xd8] sm:$0xff]
  %v49 = vld [vmem:[%s1 + $0xe0] sm:$0xff]
  %v50 = vld [vmem:[%s1 + $0xe8] sm:$0xff]
  %v51 = vld [vmem:[%s1 + $0xf0] sm:$0xff]
  %v52 = vld [vmem:[%s1 + $0xf8] sm:$0xff]
  %v53 = vld [vmem:[%s1 + $0x100] sm:$0xff]
  %v54 = vld [vmem:[%s1 + $0x108] sm:$0xff]
  %v55 = vld [vmem:[%s1 + $0x110] sm:$0xff]
  %v56 = vld [vmem:[%s1 + $0x118] sm:$0xff]
  %v57 = vld [vmem:[%s1 + $0x120] sm:$0xff]
  %v58 = vld [vmem:[%s1 + $0x128] sm:$0xff]
  %v59 = vld [vmem:[%s1 + $0x130] sm:$0xff]
  %v60 = vld [vmem:[%s1 + $0x138] sm:$0xff]
  %v61 = vld [vmem:[%s1 + $0x140] sm:$0xff]
  %v62 = vld [vmem:[%s1 + $0x148] sm:$0xff]
  %v63 = vld [vmem:[%s1 + $0x150] sm:$0xff]
  %v64 = vld [vmem:[%s1 + $0x158] sm:$0xff]
  %v65 = vld [vmem:[%s1 + $0x160] sm:$0xff]
  %v66 = vld [vmem:[%s1 + $0x168] sm:$0xff]
  %v67 = vld [vmem:[%s1 + $0x170] sm:$0xff]
  %v68 = vld [vmem:[%s1 + $0x178] sm:$0xff]
  %v69 = vld [vmem:[%s1 + $0x180] sm:$0xff]
  %v70 = vld [vmem:[%s1 + $0x188] sm:$0xff]
  %v71 = vld [vmem:[%s1 + $0x190] sm:$0xff]
  %v72 = vld [vmem:[%s1 + $0x198] sm:$0xff]
  %v73 = vld [vmem:[%s1 + $0x1a0] sm:$0xff]
  %v74 = vld [vmem:[%s1 + $0x1a8] sm:$0xff]
  %v75 = vld [vmem:[%s1 + $0x1b0] sm:$0xff]
  %v76 = vld [vmem:[%s1 + $0x1b8] sm:$0xff]
  %v77 = vld [vmem:[%s1 + $0x1c0] sm:$0xff]
  %v78 = vld [vmem:[%s1 + $0x1c8] sm:$0xff]
  %v79 = vld [vmem:[%s1 + $0x1d0] sm:$0xff]
  %v80 = vld [vmem:[%s1 + $0x1d8] sm:$0xff]
  %v81 = vld [vmem:[%s1 + $0x1e0] sm:$0xff]
  %v82 = vld [vmem:[%s1 + $0x1e8] sm:$0xff]
  %v83 = vld [vmem:[%s1 + $0x1f0] sm:$0xff]
  %v84 = vld [vmem:[%s1 + $0x1f8] sm:$0xff]
  %v89 = vunpack.c.l.b16 %v17
  %v90 = vunpack.c.h.b16 %v17
  %v91 = vunpack.c.l.b16 %v18
  %v92 = vunpack.c.h.b16 %v18
  %v93 = vunpack.c.l.b16 %v19
  %v94 = vunpack.c.h.b16 %v19
  %v95 = vunpack.c.l.b16 %v20
  %v96 = vunpack.c.h.b16 %v20
  %v97 = vpack.c.b16 %v93, %v89
  %v98 = vpack.c.b16 %v94, %v90
  %v99 = vpack.c.b16 %v95, %v91
  %v100 = vpack.c.b16 %v96, %v92
  %v169 = vunpack.c.l.b16 %v21
  %v170 = vunpack.c.h.b16 %v21
  %v171 = vunpack.c.l.b16 %v22
  %v172 = vunpack.c.h.b16 %v22
  %v173 = vunpack.c.l.b16 %v23
  %v174 = vunpack.c.h.b16 %v23
  %v175 = vunpack.c.l.b16 %v24
  %v176 = vunpack.c.h.b16 %v24
  %v177 = vunpack.c.l.b16 %v25
  %v178 = vunpack.c.h.b16 %v25
  %v179 = vunpack.c.l.b16 %v26
  %v180 = vunpack.c.h.b16 %v26
  %v181 = vunpack.c.l.b16 %v27
  %v182 = vunpack.c.h.b16 %v27
  %v183 = vunpack.c.l.b16 %v28
  %v184 = vunpack.c.h.b16 %v28
  %v185 = vunpack.c.l.b16 %v29
  %v186 = vunpack.c.h.b16 %v29
  %v187 = vunpack.c.l.b16 %v30
  %v188 = vunpack.c.h.b16 %v30
  %v189 = vunpack.c.l.b16 %v31
  %v190 = vunpack.c.h.b16 %v31
  %v191 = vunpack.c.l.b16 %v32
  %v192 = vunpack.c.h.b16 %v32
  %v193 = vunpack.c.l.b16 %v33
  %v194 = vunpack.c.h.b16 %v33
  %v195 = vunpack.c.l.b16 %v34
  %v196 = vunpack.c.h.b16 %v34
  %v197 = vunpack.c.l.b16 %v35
  %v198 = vunpack.c.h.b16 %v35
  %v199 = vunpack.c.l.b16 %v36
  %v200 = vunpack.c.h.b16 %v36
  %v201 = vunpack.c.l.b16 %v37
  %v202 = vunpack.c.h.b16 %v37
  %v203 = vunpack.c.l.b16 %v38
  %v204 = vunpack.c.h.b16 %v38
  %v205 = vunpack.c.l.b16 %v39
  %v206 = vunpack.c.h.b16 %v39
  %v207 = vunpack.c.l.b16 %v40
  %v208 = vunpack.c.h.b16 %v40
  %v209 = vunpack.c.l.b16 %v41
  %v210 = vunpack.c.h.b16 %v41
  %v211 = vunpack.c.l.b16 %v42
  %v212 = vunpack.c.h.b16 %v42
  %v213 = vunpack.c.l.b16 %v43
  %v214 = vunpack.c.h.b16 %v43
  %v215 = vunpack.c.l.b16 %v44
  %v216 = vunpack.c.h.b16 %v44
  %v217 = vunpack.c.l.b16 %v45
  %v218 = vunpack.c.h.b16 %v45
  %v219 = vunpack.c.l.b16 %v46
  %v220 = vunpack.c.h.b16 %v46
  %v221 = vunpack.c.l.b16 %v47
  %v222 = vunpack.c.h.b16 %v47
  %v223 = vunpack.c.l.b16 %v48
  %v224 = vunpack.c.h.b16 %v48
  %v225 = vunpack.c.l.b16 %v49
  %v226 = vunpack.c.h.b16 %v49
  %v227 = vunpack.c.l.b16 %v50
  %v228 = vunpack.c.h.b16 %v50
  %v229 = vunpack.c.l.b16 %v51
  %v230 = vunpack.c.h.b16 %v51
  %v231 = vunpack.c.l.b16 %v52
  %v232 = vunpack.c.h.b16 %v52
  %v233 = vunpack.c.l.b16 %v53
  %v234 = vunpack.c.h.b16 %v53
  %v235 = vunpack.c.l.b16 %v54
  %v236 = vunpack.c.h.b16 %v54
  %v237 = vunpack.c.l.b16 %v55
  %v238 = vunpack.c.h.b16 %v55
  %v239 = vunpack.c.l.b16 %v56
  %v240 = vunpack.c.h.b16 %v56
  %v241 = vunpack.c.l.b16 %v57
  %v242 = vunpack.c.h.b16 %v57
  %v243 = vunpack.c.l.b16 %v58
  %v244 = vunpack.c.h.b16 %v58
  %v245 = vunpack.c.l.b16 %v59
  %v246 = vunpack.c.h.b16 %v59
  %v247 = vunpack.c.l.b16 %v60
  %v248 = vunpack.c.h.b16 %v60
  %v249 = vunpack.c.l.b16 %v61
  %v250 = vunpack.c.h.b16 %v61
  %v251 = vunpack.c.l.b16 %v62
  %v252 = vunpack.c.h.b16 %v62
  %v253 = vunpack.c.l.b16 %v63
  %v254 = vunpack.c.h.b16 %v63
  %v255 = vunpack.c.l.b16 %v64
  %v256 = vunpack.c.h.b16 %v64
  %v257 = vunpack.c.l.b16 %v65
  %v258 = vunpack.c.h.b16 %v65
  %v259 = vunpack.c.l.b16 %v66
  %v260 = vunpack.c.h.b16 %v66
  %v261 = vunpack.c.l.b16 %v67
  %v262 = vunpack.c.h.b16 %v67
  %v263 = vunpack.c.l.b16 %v68
  %v264 = vunpack.c.h.b16 %v68
  %v265 = vunpack.c.l.b16 %v69
  %v266 = vunpack.c.h.b16 %v69
  %v267 = vunpack.c.l.b16 %v70
  %v268 = vunpack.c.h.b16 %v70
  %v269 = vunpack.c.l.b16 %v71
  %v270 = vunpack.c.h.b16 %v71
  %v271 = vunpack.c.l.b16 %v72
  %v272 = vunpack.c.h.b16 %v72
  %v273 = vunpack.c.l.b16 %v73
  %v274 = vunpack.c.h.b16 %v73
  %v275 = vunpack.c.l.b16 %v74
  %v276 = vunpack.c.h.b16 %v74
  %v277 = vunpack.c.l.b16 %v75
  %v278 = vunpack.c.h.b16 %v75
  %v279 = vunpack.c.l.b16 %v76
  %v280 = vunpack.c.h.b16 %v76
  %v281 = vunpack.c.l.b16 %v77
  %v282 = vunpack.c.h.b16 %v77
  %v283 = vunpack.c.l.b16 %v78
  %v284 = vunpack.c.h.b16 %v78
  %v285 = vunpack.c.l.b16 %v79
  %v286 = vunpack.c.h.b16 %v79
  %v287 = vunpack.c.l.b16 %v80
  %v288 = vunpack.c.h.b16 %v80
  %v289 = vunpack.c.l.b16 %v81
  %v290 = vunpack.c.h.b16 %v81
  %v291 = vunpack.c.l.b16 %v82
  %v292 = vunpack.c.h.b16 %v82
  %v293 = vunpack.c.l.b16 %v83
  %v294 = vunpack.c.h.b16 %v83
  %v295 = vunpack.c.l.b16 %v84
  %v296 = vunpack.c.h.b16 %v84
  %v297 = vpack.c.b16 %v171, %v169
  %v298 = vpack.c.b16 %v172, %v170
  %v299 = vpack.c.b16 %v175, %v173
  %v300 = vpack.c.b16 %v176, %v174
  %v301 = vpack.c.b16 %v179, %v177
  %v302 = vpack.c.b16 %v180, %v178
  %v303 = vpack.c.b16 %v183, %v181
  %v304 = vpack.c.b16 %v184, %v182
  %v305 = vpack.c.b16 %v187, %v185
  %v306 = vpack.c.b16 %v188, %v186
  %v307 = vpack.c.b16 %v191, %v189
  %v308 = vpack.c.b16 %v192, %v190
  %v309 = vpack.c.b16 %v195, %v193
  %v310 = vpack.c.b16 %v196, %v194
  %v311 = vpack.c.b16 %v199, %v197
  %v312 = vpack.c.b16 %v200, %v198
  %v313 = vpack.c.b16 %v203, %v201
  %v314 = vpack.c.b16 %v204, %v202
  %v315 = vpack.c.b16 %v207, %v205
  %v316 = vpack.c.b16 %v208, %v206
  %v317 = vpack.c.b16 %v211, %v209
  %v318 = vpack.c.b16 %v212, %v210
  %v319 = vpack.c.b16 %v215, %v213
  %v320 = vpack.c.b16 %v216, %v214
  %v321 = vpack.c.b16 %v219, %v217
  %v322 = vpack.c.b16 %v220, %v218
  %v323 = vpack.c.b16 %v223, %v221
  %v324 = vpack.c.b16 %v224, %v222
  %v325 = vpack.c.b16 %v227, %v225
  %v326 = vpack.c.b16 %v228, %v226
  %v327 = vpack.c.b16 %v231, %v229
  %v328 = vpack.c.b16 %v232, %v230
  %v329 = vpack.c.b16 %v235, %v233
  %v330 = vpack.c.b16 %v236, %v234
  %v331 = vpack.c.b16 %v239, %v237
  %v332 = vpack.c.b16 %v240, %v238
  %v333 = vpack.c.b16 %v243, %v241
  %v334 = vpack.c.b16 %v244, %v242
  %v335 = vpack.c.b16 %v247, %v245
  %v336 = vpack.c.b16 %v248, %v246
  %v337 = vpack.c.b16 %v251, %v249
  %v338 = vpack.c.b16 %v252, %v250
  %v339 = vpack.c.b16 %v255, %v253
  %v340 = vpack.c.b16 %v256, %v254
  %v341 = vpack.c.b16 %v259, %v257
  %v342 = vpack.c.b16 %v260, %v258
  %v343 = vpack.c.b16 %v263, %v261
  %v344 = vpack.c.b16 %v264, %v262
  %v345 = vpack.c.b16 %v267, %v265
  %v346 = vpack.c.b16 %v268, %v266
  %v347 = vpack.c.b16 %v271, %v269
  %v348 = vpack.c.b16 %v272, %v270
  %v349 = vpack.c.b16 %v275, %v273
  %v350 = vpack.c.b16 %v276, %v274
  %v351 = vpack.c.b16 %v279, %v277
  %v352 = vpack.c.b16 %v280, %v278
  %v353 = vpack.c.b16 %v283, %v281
  %v354 = vpack.c.b16 %v284, %v282
  %v355 = vpack.c.b16 %v287, %v285
  %v356 = vpack.c.b16 %v288, %v286
  %v357 = vpack.c.b16 %v291, %v289
  %v358 = vpack.c.b16 %v292, %v290
  %v359 = vpack.c.b16 %v295, %v293
  %v360 = vpack.c.b16 %v296, %v294
  %425 = vmatprep.subr.bf16.mxu0 %v312
  %426 = vmatpush1.bf16.msra.mxu0 %v311
  %427 = vmatprep.subr.bf16.mxu0 %v310
  %428 = vmatpush1.bf16.msra.mxu0 %v309
  %429 = vmatprep.subr.bf16.mxu0 %v308
  %430 = vmatpush1.bf16.msra.mxu0 %v307
  %431 = vmatprep.subr.bf16.mxu0 %v306
  %432 = vmatpush1.bf16.msra.mxu0 %v305
  %433 = vmatprep.subr.bf16.mxu0 %v304
  %434 = vmatpush1.bf16.msra.mxu0 %v303
  %435 = vmatprep.subr.bf16.mxu0 %v302
  %436 = vmatpush1.bf16.msra.mxu0 %v301
  %437 = vmatprep.subr.bf16.mxu0 %v300
  %438 = vmatpush1.bf16.msra.mxu0 %v299
  %439 = vmatprep.subr.bf16.mxu0 %v298
  %440 = vmatpush1.bf16.msra.mxu0 %v297
  %441 = vmatprep.subr.bf16.mxu0 %v328
  %442 = vmatpush2.bf16.msra.mxu0 %v327
  %443 = vmatprep.subr.bf16.mxu0 %v326
  %444 = vmatpush2.bf16.msra.mxu0 %v325
  %445 = vmatprep.subr.bf16.mxu0 %v324
  %446 = vmatpush2.bf16.msra.mxu0 %v323
  %447 = vmatprep.subr.bf16.mxu0 %v322
  %448 = vmatpush2.bf16.msra.mxu0 %v321
  %449 = vmatprep.subr.bf16.mxu0 %v320
  %450 = vmatpush2.bf16.msra.mxu0 %v319
  %451 = vmatprep.subr.bf16.mxu0 %v318
  %452 = vmatpush2.bf16.msra.mxu0 %v317
  %453 = vmatprep.subr.bf16.mxu0 %v316
  %454 = vmatpush2.bf16.msra.mxu0 %v315
  %455 = vmatprep.subr.bf16.mxu0 %v314
  %456 = vmatpush2.bf16.msra.mxu0 %v313
  %457 = vmatprep.mubr.bf16.mxu0 %v98
  %458 = vmatmul.mubr.bf16.gmra.mxu0 %v97
  %v459 = vpop.f32.mrf.mxu0
  %v460 = vadd.f32 0.0, %v459
  %v461 = vpop.f32.mrf.mxu0
  %v462 = vadd.f32 0.0, %v461
  %v463 = vpop.f32.mrf.mxu0
  %v464 = vadd.f32 0.0, %v463
  %v465 = vpop.f32.mrf.mxu0
  %v466 = vadd.f32 0.0, %v465
  %467 = vdwg.mxu0
  %468 = vmatprep.subr.bf16.mxu0 %v344
  %469 = vmatpush1.bf16.msra.mxu0 %v343
  %470 = vmatprep.subr.bf16.mxu0 %v342
  %471 = vmatpush1.bf16.msra.mxu0 %v341
  %472 = vmatprep.subr.bf16.mxu0 %v340
  %473 = vmatpush1.bf16.msra.mxu0 %v339
  %474 = vmatprep.subr.bf16.mxu0 %v338
  %475 = vmatpush1.bf16.msra.mxu0 %v337
  %476 = vmatprep.subr.bf16.mxu0 %v336
  %477 = vmatpush1.bf16.msra.mxu0 %v335
  %478 = vmatprep.subr.bf16.mxu0 %v334
  %479 = vmatpush1.bf16.msra.mxu0 %v333
  %480 = vmatprep.subr.bf16.mxu0 %v332
  %481 = vmatpush1.bf16.msra.mxu0 %v331
  %482 = vmatprep.subr.bf16.mxu0 %v330
  %483 = vmatpush1.bf16.msra.mxu0 %v329
  %484 = vmatprep.subr.bf16.mxu0 %v360
  %485 = vmatpush2.bf16.msra.mxu0 %v359
  %486 = vmatprep.subr.bf16.mxu0 %v358
  %487 = vmatpush2.bf16.msra.mxu0 %v357
  %488 = vmatprep.subr.bf16.mxu0 %v356
  %489 = vmatpush2.bf16.msra.mxu0 %v355
  %490 = vmatprep.subr.bf16.mxu0 %v354
  %491 = vmatpush2.bf16.msra.mxu0 %v353
  %492 = vmatprep.subr.bf16.mxu0 %v352
  %493 = vmatpush2.bf16.msra.mxu0 %v351
  %494 = vmatprep.subr.bf16.mxu0 %v350
  %495 = vmatpush2.bf16.msra.mxu0 %v349
  %496 = vmatprep.subr.bf16.mxu0 %v348
  %497 = vmatpush2.bf16.msra.mxu0 %v347
  %498 = vmatprep.subr.bf16.mxu0 %v346
  %499 = vmatpush2.bf16.msra.mxu0 %v345
  %500 = vmatprep.mubr.bf16.mxu0 %v100
  %501 = vmatmul.mubr.bf16.gmra.mxu0 %v99
  %v502 = vpop.f32.mrf.mxu0
  %v503 = vadd.f32 %v460, %v502
  %v504 = vpop.f32.mrf.mxu0
  %v505 = vadd.f32 %v462, %v504
  %v506 = vpop.f32.mrf.mxu0
  %v507 = vadd.f32 %v464, %v506
  %v508 = vpop.f32.mrf.mxu0
  %v509 = vadd.f32 %v466, %v508
  %510 = vdwg.mxu0
  %v511 = vld [vmem:[%s2] sm:$0x3]
  %v513 = vlaneseq
  %v514 = vshrl.u32 %v513, 7
  %v515 = vsub.s32 0, %v514
  %v516 = vrot.slane %v511, %v515
  %v517 = vlaneseq
  %v518 = vshrl.u32 %v517, 7
  %v519 = vsub.s32 1, %v518
  %v520 = vrot.slane %v511, %v519
  %v523 = vmul.f32 %v503, %v516
  %v524 = vmul.f32 %v505, %v520
  %v525 = vmul.f32 %v507, %v516
  %v526 = vmul.f32 %v509, %v520
  %v527 = vld [vmem:[%s3] sm:$0x3]
  %v529 = vlaneseq
  %v530 = vshrl.u32 %v529, 7
  %v531 = vsub.s32 0, %v530
  %v532 = vrot.slane %v527, %v531
  %v533 = vlaneseq
  %v534 = vshrl.u32 %v533, 7
  %v535 = vsub.s32 1, %v534
  %v536 = vrot.slane %v527, %v535
  %v539 = vadd.f32 %v523, %v532
  %v540 = vadd.f32 %v524, %v536
  %v541 = vadd.f32 %v525, %v532
  %v542 = vadd.f32 %v526, %v536
  %v543 = vmax.f32 %v539, 0.0
  %v544 = vmax.f32 %v540, 0.0
  %v545 = vmax.f32 %v541, 0.0
  %v546 = vmax.f32 %v542, 0.0
  %v547 = vpack.c.bf16 %v545, %v543
  %v548 = vpack.c.bf16 %v546, %v544
  %v551 = vunpack.c.l.b16 %v547
  %v552 = vunpack.c.l.b16 %v548
  %v553 = vunpack.c.h.b16 %v547
  %v554 = vunpack.c.h.b16 %v548
  %v555 = vpack.c.b16 %v552, %v551
  %v556 = vpack.c.b16 %v554, %v553
  %559 = vst [vmem:[%s4] sm:$0xff] %v555
  %560 = vst [vmem:[%s4 + $0x8] sm:$0xff] %v556
  // Predicated region
  $region18: #{fcn_forward.9} parent=0 // pred_check
    _
  $region19: #{fcn_forward.9} parent=0 // pred_check_branch
    %562 = sbr.rel (0) target = $region21
  $region20: #{fcn_forward.9} parent=0 // pred_region
    _
  $region21: #{fcn_forward.9} parent=0 // pred_fallthru
    _
  // Predicated region
  $region22: #{fcn_forward.9} parent=0 // pred_check
    _
  $region23: #{fcn_forward.9} parent=0 // pred_check_branch
    %564 = sbr.rel (0) target = $region25
  $region24: #{fcn_forward.9} parent=0 // pred_region
    _
  $region25: #{fcn_forward.9} parent=0 // pred_fallthru
    _

// kernel: tile.43
$region0: #{tile.43}
  #allocation0 [shape = 's32[1]{0}', space=sflag, size = 0x4, scoped, tag = 'scoped memory for tile.43']
  %s0 = inlined_call_operand.vmem [shape: f32[32], index: 0, kind: input, shape index: {}]
  %s1 = inlined_call_operand.vmem [shape: f32[4,32], index: 1, kind: output, shape index: {}]
  // Predicated region
  $region2: #{tile.43} parent=0 // pred_check
    _
  $region3: #{tile.43} parent=0 // pred_check_branch
    %3 = sbr.rel (0) target = $region5
  $region4: #{tile.43} parent=0 // pred_region
    _
  $region5: #{tile.43} parent=0 // pred_fallthru
    _
  %v4 = vld [vmem:[%s0] ss:$0 sm:$0xff]
  %5 = vst [vmem:[%s1] sm:$0xf] %v4

// kernel: fcn_forward.10
$region0: #{fcn_forward.10}
  #allocation0 [shape = 'u32[]', space=smem, size = 0x4, offset = 0x4, fixed_abs, tag = 'smem constant byte address 0x4 - core index']
  #allocation1 [shape = 'u32[144,128]{1,0:T(1,128)}', space=vmem, size = 0x12000, scoped, tag = 'internal scratch']
  %s0 = inlined_call_operand.vmem [shape: bf16[32,256], index: 0, kind: input, shape index: {}]
  %s1 = inlined_call_operand.vmem [shape: bf16[256,128], index: 1, kind: input, shape index: {}]
  %s2 = inlined_call_operand.vmem [shape: bf16[32,256], index: 2, kind: input, shape index: {}]
  %s3 = inlined_call_operand.vmem [shape: bf16[256,128], index: 3, kind: input, shape index: {}]
  %s4 = inlined_call_operand.vmem [shape: f32[1,128], index: 4, kind: input, shape index: {}]
  %s5 = inlined_call_operand.vmem [shape: f32[1,128], index: 5, kind: input, shape index: {}]
  %s6 = inlined_call_operand.vmem [shape: bf16[32,128], index: 6, kind: output, shape index: {}]
  %s7 = sld [smem:[#allocation0]]
  $region57: #{fcn_forward.10} parent=0
    _
  %s9 = ssub.s32 1, %s7
  %s10 = scalar_select 0, %s9, %s7
  loop: start=0, step=1, limit=4
  $region2: #{fcn_forward.10} parent=0 // loop_pre_header
    _
  $region3: #{fcn_forward.10} parent=0 // loop_header
    %s12 = sphi 0, %s16
    %p13 = scmp.ge.s32.totalorder %s12, 4
    %s22 = sphi 0, %s24
    %s25 = sphi 0, %s22
    %s26 = sphi 0, %s25
    %s42 = sphi 0, %s26
    %s46 = sphi 0, %s46
    %s48 = sphi 0, %s46
    %s49 = sphi 0, %s48
    %s63 = sphi 0, %s49
    %s69 = sphi 0, %s71
    %s72 = sphi 0, %s69
    %s73 = sphi 0, %s72
    %s89 = sphi 0, %s73
    %s93 = sphi 0, %s93
    %s95 = sphi 0, %s93
    %s96 = sphi 0, %s95
    %s110 = sphi 0, %s96
    %s114 = sphi 0, %s114
    %s116 = sphi 0, %s114
    %s117 = sphi 0, %s116
    %s131 = sphi 0, %s117
    %s135 = sphi 0, %s135
    %s137 = sphi 0, %s135
    %s138 = sphi 0, %s137
    %s152 = sphi 0, %s138
    %s158 = sphi 0, %s160
    %s161 = sphi 0, %s158
    %s162 = sphi 0, %s161
    %s178 = sphi 0, %s162
  $region4: #{fcn_forward.10} parent=0 // loop_header_branch
    %15 = sbr.rel (%p13) target = $region8
  $region5: #{fcn_forward.10} parent=0 // loop_body
    %s17 = ssub.s32 %s12, 1
    %s18 = ssub.s32 %s12, 2
    %s19 = sadd.s32 %s12, 1
    %s20 = ssub.s32 %s12, %s19
    %p21 = scmp.eq.s32.totalorder %s20, 0
    %s23 = sadd.s32 %s22, 1
    %s24 = scalar_select %p21, %s22, %s23
    %p27 = pneg %p21
    %p28 = scmp.eq.s32.totalorder %s12, 1
    %p29 = por %p27, %p28
    %p30 = scmp.ne.s32.totalorder %s22, %s25
    %p31 = scmp.eq.s32.totalorder %s12, 0
    %p32 = por %p30, %p31
    %p33 = scmp.ne.s32.totalorder %s22, %s25
    %p34 = scmp.eq.s32.totalorder %s17, 1
    %p35 = por %p33, %p34
    %p36 = scmp.ne.s32.totalorder %s25, %s26
    %p37 = scmp.eq.s32.totalorder %s17, 0
    %p38 = por %p36, %p37
    %p39 = scmp.ne.s32.totalorder %s25, %s26
    %p40 = scmp.eq.s32.totalorder %s18, 1
    %p41 = por %p39, %p40
    %p43 = scmp.ne.s32.totalorder %s26, %s42
    %p44 = scmp.eq.s32.totalorder %s18, 0
    %p45 = por %p43, %p44
    %s47 = sadd.s32 %s46, 1
    %p50 = scmp.eq.s32.totalorder %s12, 1
    %p51 = scmp.ne.s32.totalorder %s46, %s48
    %p52 = scmp.eq.s32.totalorder %s12, 0
    %p53 = por %p51, %p52
    %p54 = scmp.ne.s32.totalorder %s46, %s48
    %p55 = scmp.eq.s32.totalorder %s17, 1
    %p56 = por %p54, %p55
    %p57 = scmp.ne.s32.totalorder %s48, %s49
    %p58 = scmp.eq.s32.totalorder %s17, 0
    %p59 = por %p57, %p58
    %p60 = scmp.ne.s32.totalorder %s48, %s49
    %p61 = scmp.eq.s32.totalorder %s18, 1
    %p62 = por %p60, %p61
    %p64 = scmp.ne.s32.totalorder %s49, %s63
    %p65 = scmp.eq.s32.totalorder %s18, 0
    %p66 = por %p64, %p65
    %s67 = ssub.s32 %s12, %s19
    %p68 = scmp.eq.s32.totalorder %s67, 0
    %s70 = sadd.s32 %s69, 1
    %s71 = scalar_select %p68, %s69, %s70
    %p74 = pneg %p68
    %p75 = scmp.eq.s32.totalorder %s12, 1
    %p76 = por %p74, %p75
    %p77 = scmp.ne.s32.totalorder %s69, %s72
    %p78 = scmp.eq.s32.totalorder %s12, 0
    %p79 = por %p77, %p78
    %p80 = scmp.ne.s32.totalorder %s69, %s72
    %p81 = scmp.eq.s32.totalorder %s17, 1
    %p82 = por %p80, %p81
    %p83 = scmp.ne.s32.totalorder %s72, %s73
    %p84 = scmp.eq.s32.totalorder %s17, 0
    %p85 = por %p83, %p84
    %p86 = scmp.ne.s32.totalorder %s72, %s73
    %p87 = scmp.eq.s32.totalorder %s18, 1
    %p88 = por %p86, %p87
    %p90 = scmp.ne.s32.totalorder %s73, %s89
    %p91 = scmp.eq.s32.totalorder %s18, 0
    %p92 = por %p90, %p91
    %s94 = sadd.s32 %s93, 1
    %p97 = scmp.eq.s32.totalorder %s12, 1
    %p98 = scmp.ne.s32.totalorder %s93, %s95
    %p99 = scmp.eq.s32.totalorder %s12, 0
    %p100 = por %p98, %p99
    %p101 = scmp.ne.s32.totalorder %s93, %s95
    %p102 = scmp.eq.s32.totalorder %s17, 1
    %p103 = por %p101, %p102
    %p104 = scmp.ne.s32.totalorder %s95, %s96
    %p105 = scmp.eq.s32.totalorder %s17, 0
    %p106 = por %p104, %p105
    %p107 = scmp.ne.s32.totalorder %s95, %s96
    %p108 = scmp.eq.s32.totalorder %s18, 1
    %p109 = por %p107, %p108
    %p111 = scmp.ne.s32.totalorder %s96, %s110
    %p112 = scmp.eq.s32.totalorder %s18, 0
    %p113 = por %p111, %p112
    %s115 = sadd.s32 %s114, 1
    %p118 = scmp.eq.s32.totalorder %s12, 1
    %p119 = scmp.ne.s32.totalorder %s114, %s116
    %p120 = scmp.eq.s32.totalorder %s12, 0
    %p121 = por %p119, %p120
    %p122 = scmp.ne.s32.totalorder %s114, %s116
    %p123 = scmp.eq.s32.totalorder %s17, 1
    %p124 = por %p122, %p123
    %p125 = scmp.ne.s32.totalorder %s116, %s117
    %p126 = scmp.eq.s32.totalorder %s17, 0
    %p127 = por %p125, %p126
    %p128 = scmp.ne.s32.totalorder %s116, %s117
    %p129 = scmp.eq.s32.totalorder %s18, 1
    %p130 = por %p128, %p129
    %p132 = scmp.ne.s32.totalorder %s117, %s131
    %p133 = scmp.eq.s32.totalorder %s18, 0
    %p134 = por %p132, %p133
    %s136 = sadd.s32 %s135, 1
    %p139 = scmp.eq.s32.totalorder %s12, 1
    %p140 = scmp.ne.s32.totalorder %s135, %s137
    %p141 = scmp.eq.s32.totalorder %s12, 0
    %p142 = por %p140, %p141
    %p143 = scmp.ne.s32.totalorder %s135, %s137
    %p144 = scmp.eq.s32.totalorder %s17, 1
    %p145 = por %p143, %p144
    %p146 = scmp.ne.s32.totalorder %s137, %s138
    %p147 = scmp.eq.s32.totalorder %s17, 0
    %p148 = por %p146, %p147
    %p149 = scmp.ne.s32.totalorder %s137, %s138
    %p150 = scmp.eq.s32.totalorder %s18, 1
    %p151 = por %p149, %p150
    %p153 = scmp.ne.s32.totalorder %s138, %s152
    %p154 = scmp.eq.s32.totalorder %s18, 0
    %p155 = por %p153, %p154
    %s156 = ssub.s32 %s12, %s19
    %p157 = scmp.eq.s32.totalorder %s156, 0
    %s159 = sadd.s32 %s158, 1
    %s160 = scalar_select %p157, %s158, %s159
    %p163 = pneg %p157
    %p164 = scmp.eq.s32.totalorder %s12, 1
    %p165 = por %p163, %p164
    %p166 = scmp.ne.s32.totalorder %s158, %s161
    %p167 = scmp.eq.s32.totalorder %s12, 0
    %p168 = por %p166, %p167
    %p169 = scmp.ne.s32.totalorder %s158, %s161
    %p170 = scmp.eq.s32.totalorder %s17, 1
    %p171 = por %p169, %p170
    %p172 = scmp.ne.s32.totalorder %s161, %s162
    %p173 = scmp.eq.s32.totalorder %s17, 0
    %p174 = por %p172, %p173
    %p175 = scmp.ne.s32.totalorder %s161, %s162
    %p176 = scmp.eq.s32.totalorder %s18, 1
    %p177 = por %p175, %p176
    %p179 = scmp.ne.s32.totalorder %s162, %s178
    %p180 = scmp.eq.s32.totalorder %s18, 0
    %p181 = por %p179, %p180
    %p182 = scmp.le.s32.totalorder 1, %s12
    %p183 = scmp.lt.s32.totalorder %s12, 3
    %p184 = pnand %p182, %p183
    %p185 = pneg %p184
    // Predicated region
    $region9: #{fcn_forward.10} parent=5 // pred_check
      _
    $region10: #{fcn_forward.10} parent=5 // pred_check_branch
      %187 = sbr.rel (%p184) target = $region12
    $region11: #{fcn_forward.10} parent=5 // pred_region
      %s188 = ssub.s32 %s12, 1
      // Predicated region
      $region13: #{fcn_forward.10} parent=11 // pred_check
        %p189 = pneg %p59
      $region14: #{fcn_forward.10} parent=11 // pred_check_branch
        %191 = sbr.rel (%p189) target = $region16
      $region15: #{fcn_forward.10} parent=11 // pred_region
        _
      $region16: #{fcn_forward.10} parent=11 // pred_fallthru
        _
      // Predicated region
      $region17: #{fcn_forward.10} parent=11 // pred_check
        %p192 = pneg %p106
      $region18: #{fcn_forward.10} parent=11 // pred_check_branch
        %194 = sbr.rel (%p192) target = $region20
      $region19: #{fcn_forward.10} parent=11 // pred_region
        _
      $region20: #{fcn_forward.10} parent=11 // pred_fallthru
        _
      // Predicated region
      $region21: #{fcn_forward.10} parent=11 // pred_check
        %p195 = pneg %p127
      $region22: #{fcn_forward.10} parent=11 // pred_check_branch
        %197 = sbr.rel (%p195) target = $region24
      $region23: #{fcn_forward.10} parent=11 // pred_region
        _
      $region24: #{fcn_forward.10} parent=11 // pred_fallthru
        _
      // Predicated region
      $region25: #{fcn_forward.10} parent=11 // pred_check
        %p198 = pneg %p148
      $region26: #{fcn_forward.10} parent=11 // pred_check_branch
        %200 = sbr.rel (%p198) target = $region28
      $region27: #{fcn_forward.10} parent=11 // pred_region
        _
      $region28: #{fcn_forward.10} parent=11 // pred_fallthru
        _
    $region12: #{fcn_forward.10} parent=5 // pred_fallthru
      _
    %p201 = scmp.lt.s32.totalorder %s12, 2
    // Predicated region
    $region29: #{fcn_forward.10} parent=5 // pred_check
      %p202 = pneg %p201
    $region30: #{fcn_forward.10} parent=5 // pred_check_branch
      %204 = sbr.rel (%p202) target = $region32
    $region31: #{fcn_forward.10} parent=5 // pred_region
      // Predicated region
      $region33: #{fcn_forward.10} parent=31 // pred_check
        %p205 = pneg %p32
      $region34: #{fcn_forward.10} parent=31 // pred_check_branch
        %207 = sbr.rel (%p205) target = $region36
      $region35: #{fcn_forward.10} parent=31 // pred_region
        %s208 = smul.u32 2, %s12
        %p209 = scmp.lt.s32.totalorder %s208, 3
        %s210 = scalar_select %p209, %s208, 3
        %s211 = smul.addr %s210, 2
        %s212 = smul.addr %s211, 4
        %s213 = scalar_lea.vmem %s0, %s212
        %s214 = smul.u32 2, %s12
      $region36: #{fcn_forward.10} parent=31 // pred_fallthru
        _
      // Predicated region
      $region37: #{fcn_forward.10} parent=31 // pred_check
        %p215 = pneg %p79
      $region38: #{fcn_forward.10} parent=31 // pred_check_branch
        %217 = sbr.rel (%p215) target = $region40
      $region39: #{fcn_forward.10} parent=31 // pred_region
        %s218 = smul.u32 2, %s12
        %p219 = scmp.lt.s32.totalorder %s218, 3
        %s220 = scalar_select %p219, %s218, 3
        %s221 = smul.addr %s220, 2
        %s222 = smul.addr %s221, 4
        %s223 = scalar_lea.vmem %s2, %s222
        %s224 = smul.u32 2, %s12
      $region40: #{fcn_forward.10} parent=31 // pred_fallthru
        _
    $region32: #{fcn_forward.10} parent=5 // pred_fallthru
      _
    %p225 = scmp.le.s32.totalorder 1, %s12
    %p226 = scmp.lt.s32.totalorder %s12, 3
    %p227 = pnand %p225, %p226
    %p228 = pneg %p227
    // Predicated region
    $region41: #{fcn_forward.10} parent=5 // pred_check
      _
    $region42: #{fcn_forward.10} parent=5 // pred_check_branch
      %230 = sbr.rel (%p227) target = $region44
    $region43: #{fcn_forward.10} parent=5 // pred_region
      %s231 = ssub.s32 %s12, 1
      %s232 = smul.u32 2, %s17
      %p233 = scmp.lt.s32.totalorder %s232, 3
      %s234 = scalar_select %p233, %s232, 3
      %s235 = smul.addr %s234, 2
      %s236 = smul.addr %s235, 4
      %s237 = scalar_lea.vmem %s0, %s236
      %p238 = pneg %p38
      %p239 = pneg %p35
      %p240 = pneg %p59
      %p241 = pneg %p56
      %s242 = smul.u32 2, %s17
      %p243 = scmp.lt.s32.totalorder %s242, 3
      %s244 = scalar_select %p243, %s242, 3
      %s245 = smul.addr %s244, 2
      %s246 = smul.addr %s245, 4
      %s247 = scalar_lea.vmem %s2, %s246
      %p248 = pneg %p85
      %p249 = pneg %p82
      %p250 = pneg %p106
      %p251 = pneg %p103
      %p252 = pneg %p127
      %p253 = pneg %p124
      %p254 = pneg %p148
      %p255 = pneg %p145
      %p256 = pneg %p174
      %p257 = pneg %p171
      %s258 = smul.u32 2, %s17
      %p259 = scmp.lt.s32.totalorder %s258, 3
      %s260 = scalar_select %p259, %s258, 3
      %s261 = smul.addr %s260, 4
      %s262 = scalar_lea.vmem %s6, %s261
      %s263 = smul.u32 2, %s17
      %p264 = scmp.lt.s32.totalorder %s263, 3
      %s265 = scalar_select %p264, %s263, 3
      %s266 = smul.addr %s265, 2
      %s267 = smul.addr %s266, 4
      %s268 = scalar_lea.vmem %s0, %s267
      %s269 = smul.u32 2, %s17
      %s270 = smul.u32 2, %s17
      %p271 = scmp.lt.s32.totalorder %s270, 3
      %s272 = scalar_select %p271, %s270, 3
      %s273 = smul.addr %s272, 2
      %s274 = smul.addr %s273, 4
      %s275 = scalar_lea.vmem %s2, %s274
      %s276 = smul.u32 2, %s17
      %s277 = smul.u32 2, %s17
      %p278 = scmp.lt.s32.totalorder %s277, 3
      %s279 = scalar_select %p278, %s277, 3
      %s280 = smul.addr %s279, 4
      %s281 = scalar_lea.vmem %s6, %s280
      %s282 = smul.u32 2, %s17
      %v284 = vld [vmem:[%s268] sm:$0xff]
      %v285 = vld [vmem:[%s268 + $0x8] sm:$0xff]
      %v286 = vld [vmem:[%s1] sm:$0xf]
      %v287 = vld [vmem:[%s1 + $0x4] sm:$0xf]
      %v288 = vld [vmem:[%s1 + $0x8] sm:$0xf]
      %v289 = vld [vmem:[%s1 + $0xc] sm:$0xf]
      %v290 = vld [vmem:[%s1 + $0x10] sm:$0xf]
      %v291 = vld [vmem:[%s1 + $0x14] sm:$0xf]
      %v292 = vld [vmem:[%s1 + $0x18] sm:$0xf]
      %v293 = vld [vmem:[%s1 + $0x1c] sm:$0xf]
      %v294 = vld [vmem:[%s1 + $0x20] sm:$0xf]
      %v295 = vld [vmem:[%s1 + $0x24] sm:$0xf]
      %v296 = vld [vmem:[%s1 + $0x28] sm:$0xf]
      %v297 = vld [vmem:[%s1 + $0x2c] sm:$0xf]
      %v298 = vld [vmem:[%s1 + $0x30] sm:$0xf]
      %v299 = vld [vmem:[%s1 + $0x34] sm:$0xf]
      %v300 = vld [vmem:[%s1 + $0x38] sm:$0xf]
      %v301 = vld [vmem:[%s1 + $0x3c] sm:$0xf]
      %v302 = vld [vmem:[%s1 + $0x40] sm:$0xf]
      %v303 = vld [vmem:[%s1 + $0x44] sm:$0xf]
      %v304 = vld [vmem:[%s1 + $0x48] sm:$0xf]
      %v305 = vld [vmem:[%s1 + $0x4c] sm:$0xf]
      %v306 = vld [vmem:[%s1 + $0x50] sm:$0xf]
      %v307 = vld [vmem:[%s1 + $0x54] sm:$0xf]
      %v308 = vld [vmem:[%s1 + $0x58] sm:$0xf]
      %v309 = vld [vmem:[%s1 + $0x5c] sm:$0xf]
      %v310 = vld [vmem:[%s1 + $0x60] sm:$0xf]
      %v311 = vld [vmem:[%s1 + $0x64] sm:$0xf]
      %v312 = vld [vmem:[%s1 + $0x68] sm:$0xf]
      %v313 = vld [vmem:[%s1 + $0x6c] sm:$0xf]
      %v314 = vld [vmem:[%s1 + $0x70] sm:$0xf]
      %v315 = vld [vmem:[%s1 + $0x74] sm:$0xf]
      %v316 = vld [vmem:[%s1 + $0x78] sm:$0xf]
      %v317 = vld [vmem:[%s1 + $0x7c] sm:$0xf]
      %v318 = vld [vmem:[%s275] sm:$0xff]
      %v319 = vld [vmem:[%s275 + $0x8] sm:$0xff]
      %v320 = vld [vmem:[%s3] sm:$0xf]
      %v321 = vld [vmem:[%s3 + $0x4] sm:$0xf]
      %v322 = vld [vmem:[%s3 + $0x8] sm:$0xf]
      %v323 = vld [vmem:[%s3 + $0xc] sm:$0xf]
      %v324 = vld [vmem:[%s3 + $0x10] sm:$0xf]
      %v325 = vld [vmem:[%s3 + $0x14] sm:$0xf]
      %v326 = vld [vmem:[%s3 + $0x18] sm:$0xf]
      %v327 = vld [vmem:[%s3 + $0x1c] sm:$0xf]
      %v328 = vld [vmem:[%s3 + $0x20] sm:$0xf]
      %v329 = vld [vmem:[%s3 + $0x24] sm:$0xf]
      %v330 = vld [vmem:[%s3 + $0x28] sm:$0xf]
      %v331 = vld [vmem:[%s3 + $0x2c] sm:$0xf]
      %v332 = vld [vmem:[%s3 + $0x30] sm:$0xf]
      %v333 = vld [vmem:[%s3 + $0x34] sm:$0xf]
      %v334 = vld [vmem:[%s3 + $0x38] sm:$0xf]
      %v335 = vld [vmem:[%s3 + $0x3c] sm:$0xf]
      %v336 = vld [vmem:[%s3 + $0x40] sm:$0xf]
      %v337 = vld [vmem:[%s3 + $0x44] sm:$0xf]
      %v338 = vld [vmem:[%s3 + $0x48] sm:$0xf]
      %v339 = vld [vmem:[%s3 + $0x4c] sm:$0xf]
      %v340 = vld [vmem:[%s3 + $0x50] sm:$0xf]
      %v341 = vld [vmem:[%s3 + $0x54] sm:$0xf]
      %v342 = vld [vmem:[%s3 + $0x58] sm:$0xf]
      %v343 = vld [vmem:[%s3 + $0x5c] sm:$0xf]
      %v344 = vld [vmem:[%s3 + $0x60] sm:$0xf]
      %v345 = vld [vmem:[%s3 + $0x64] sm:$0xf]
      %v346 = vld [vmem:[%s3 + $0x68] sm:$0xf]
      %v347 = vld [vmem:[%s3 + $0x6c] sm:$0xf]
      %v348 = vld [vmem:[%s3 + $0x70] sm:$0xf]
      %v349 = vld [vmem:[%s3 + $0x74] sm:$0xf]
      %v350 = vld [vmem:[%s3 + $0x78] sm:$0xf]
      %v351 = vld [vmem:[%s3 + $0x7c] sm:$0xf]
      %v354 = vunpack.c.l.b16 %v318
      %v355 = vunpack.c.h.b16 %v318
      %v356 = vunpack.c.l.b16 %v319
      %v357 = vunpack.c.h.b16 %v319
      %v358 = vpack.c.b16 %v356, %v354
      %v359 = vpack.c.b16 %v357, %v355
      %v394 = vunpack.c.l.b16 %v320
      %v395 = vunpack.c.l.b16 %v321
      %v396 = vunpack.c.l.b16 %v322
      %v397 = vunpack.c.l.b16 %v323
      %v398 = vunpack.c.l.b16 %v324
      %v399 = vunpack.c.l.b16 %v325
      %v400 = vunpack.c.l.b16 %v326
      %v401 = vunpack.c.l.b16 %v327
      %v402 = vunpack.c.l.b16 %v328
      %v403 = vunpack.c.l.b16 %v329
      %v404 = vunpack.c.l.b16 %v330
      %v405 = vunpack.c.l.b16 %v331
      %v406 = vunpack.c.l.b16 %v332
      %v407 = vunpack.c.l.b16 %v333
      %v408 = vunpack.c.l.b16 %v334
      %v409 = vunpack.c.l.b16 %v335
      %v410 = vunpack.c.l.b16 %v336
      %v411 = vunpack.c.l.b16 %v337
      %v412 = vunpack.c.l.b16 %v338
      %v413 = vunpack.c.l.b16 %v339
      %v414 = vunpack.c.l.b16 %v340
      %v415 = vunpack.c.l.b16 %v341
      %v416 = vunpack.c.l.b16 %v342
      %v417 = vunpack.c.l.b16 %v343
      %v418 = vunpack.c.l.b16 %v344
      %v419 = vunpack.c.l.b16 %v345
      %v420 = vunpack.c.l.b16 %v346
      %v421 = vunpack.c.l.b16 %v347
      %v422 = vunpack.c.l.b16 %v348
      %v423 = vunpack.c.l.b16 %v349
      %v424 = vunpack.c.l.b16 %v350
      %v425 = vunpack.c.l.b16 %v351
      %v426 = vpack.c.b16 %v395, %v394
      %v427 = vpack.c.b16 %v397, %v396
      %v428 = vpack.c.b16 %v399, %v398
      %v429 = vpack.c.b16 %v401, %v400
      %v430 = vpack.c.b16 %v403, %v402
      %v431 = vpack.c.b16 %v405, %v404
      %v432 = vpack.c.b16 %v407, %v406
      %v433 = vpack.c.b16 %v409, %v408
      %v434 = vpack.c.b16 %v411, %v410
      %v435 = vpack.c.b16 %v413, %v412
      %v436 = vpack.c.b16 %v415, %v414
      %v437 = vpack.c.b16 %v417, %v416
      %v438 = vpack.c.b16 %v419, %v418
      %v439 = vpack.c.b16 %v421, %v420
      %v440 = vpack.c.b16 %v423, %v422
      %v441 = vpack.c.b16 %v425, %v424
      %458 = vmatprep.subr.bf16.mxu0 0
      %459 = vmatpush1.bf16.msra.mxu0 %v433
      %460 = vmatprep.subr.bf16.mxu0 0
      %461 = vmatpush1.bf16.msra.mxu0 %v432
      %462 = vmatprep.subr.bf16.mxu0 0
      %463 = vmatpush1.bf16.msra.mxu0 %v431
      %464 = vmatprep.subr.bf16.mxu0 0
      %465 = vmatpush1.bf16.msra.mxu0 %v430
      %466 = vmatprep.subr.bf16.mxu0 0
      %467 = vmatpush1.bf16.msra.mxu0 %v429
      %468 = vmatprep.subr.bf16.mxu0 0
      %469 = vmatpush1.bf16.msra.mxu0 %v428
      %470 = vmatprep.subr.bf16.mxu0 0
      %471 = vmatpush1.bf16.msra.mxu0 %v427
      %472 = vmatprep.subr.bf16.mxu0 0
      %473 = vmatpush1.bf16.msra.mxu0 %v426
      %474 = vmatprep.subr.bf16.mxu0 0
      %475 = vmatpush2.bf16.msra.mxu0 %v441
      %476 = vmatprep.subr.bf16.mxu0 0
      %477 = vmatpush2.bf16.msra.mxu0 %v440
      %478 = vmatprep.subr.bf16.mxu0 0
      %479 = vmatpush2.bf16.msra.mxu0 %v439
      %480 = vmatprep.subr.bf16.mxu0 0
      %481 = vmatpush2.bf16.msra.mxu0 %v438
      %482 = vmatprep.subr.bf16.mxu0 0
      %483 = vmatpush2.bf16.msra.mxu0 %v437
      %484 = vmatprep.subr.bf16.mxu0 0
      %485 = vmatpush2.bf16.msra.mxu0 %v436
      %486 = vmatprep.subr.bf16.mxu0 0
      %487 = vmatpush2.bf16.msra.mxu0 %v435
      %488 = vmatprep.subr.bf16.mxu0 0
      %489 = vmatpush2.bf16.msra.mxu0 %v434
      %490 = vmatprep.mubr.bf16.mxu0 %v359
      %491 = vmatmul.mubr.bf16.gmra.mxu0 %v358
      %v492 = vpop.f32.mrf.mxu0
      %v493 = vadd.f32 0.0, %v492
      %v494 = vpop.f32.mrf.mxu0
      %v495 = vpop.f32.mrf.mxu0
      %v496 = vadd.f32 0.0, %v495
      %v497 = vpop.f32.mrf.mxu0
      %498 = vdwg.mxu0
      %v501 = vunpack.c.l.b16 %v284
      %v502 = vunpack.c.h.b16 %v284
      %v503 = vunpack.c.l.b16 %v285
      %v504 = vunpack.c.h.b16 %v285
      %v505 = vpack.c.b16 %v503, %v501
      %v506 = vpack.c.b16 %v504, %v502
      %v541 = vunpack.c.l.b16 %v286
      %v542 = vunpack.c.l.b16 %v287
      %v543 = vunpack.c.l.b16 %v288
      %v544 = vunpack.c.l.b16 %v289
      %v545 = vunpack.c.l.b16 %v290
      %v546 = vunpack.c.l.b16 %v291
      %v547 = vunpack.c.l.b16 %v292
      %v548 = vunpack.c.l.b16 %v293
      %v549 = vunpack.c.l.b16 %v294
      %v550 = vunpack.c.l.b16 %v295
      %v551 = vunpack.c.l.b16 %v296
      %v552 = vunpack.c.l.b16 %v297
      %v553 = vunpack.c.l.b16 %v298
      %v554 = vunpack.c.l.b16 %v299
      %v555 = vunpack.c.l.b16 %v300
      %v556 = vunpack.c.l.b16 %v301
      %v557 = vunpack.c.l.b16 %v302
      %v558 = vunpack.c.l.b16 %v303
      %v559 = vunpack.c.l.b16 %v304
      %v560 = vunpack.c.l.b16 %v305
      %v561 = vunpack.c.l.b16 %v306
      %v562 = vunpack.c.l.b16 %v307
      %v563 = vunpack.c.l.b16 %v308
      %v564 = vunpack.c.l.b16 %v309
      %v565 = vunpack.c.l.b16 %v310
      %v566 = vunpack.c.l.b16 %v311
      %v567 = vunpack.c.l.b16 %v312
      %v568 = vunpack.c.l.b16 %v313
      %v569 = vunpack.c.l.b16 %v314
      %v570 = vunpack.c.l.b16 %v315
      %v571 = vunpack.c.l.b16 %v316
      %v572 = vunpack.c.l.b16 %v317
      %v573 = vpack.c.b16 %v542, %v541
      %v574 = vpack.c.b16 %v544, %v543
      %v575 = vpack.c.b16 %v546, %v545
      %v576 = vpack.c.b16 %v548, %v547
      %v577 = vpack.c.b16 %v550, %v549
      %v578 = vpack.c.b16 %v552, %v551
      %v579 = vpack.c.b16 %v554, %v553
      %v580 = vpack.c.b16 %v556, %v555
      %v581 = vpack.c.b16 %v558, %v557
      %v582 = vpack.c.b16 %v560, %v559
      %v583 = vpack.c.b16 %v562, %v561
      %v584 = vpack.c.b16 %v564, %v563
      %v585 = vpack.c.b16 %v566, %v565
      %v586 = vpack.c.b16 %v568, %v567
      %v587 = vpack.c.b16 %v570, %v569
      %v588 = vpack.c.b16 %v572, %v571
      %605 = vmatprep.subr.bf16.mxu0 0
      %606 = vmatpush1.bf16.msra.mxu0 %v580
      %607 = vmatprep.subr.bf16.mxu0 0
      %608 = vmatpush1.bf16.msra.mxu0 %v579
      %609 = vmatprep.subr.bf16.mxu0 0
      %610 = vmatpush1.bf16.msra.mxu0 %v578
      %611 = vmatprep.subr.bf16.mxu0 0
      %612 = vmatpush1.bf16.msra.mxu0 %v577
      %613 = vmatprep.subr.bf16.mxu0 0
      %614 = vmatpush1.bf16.msra.mxu0 %v576
      %615 = vmatprep.subr.bf16.mxu0 0
      %616 = vmatpush1.bf16.msra.mxu0 %v575
      %617 = vmatprep.subr.bf16.mxu0 0
      %618 = vmatpush1.bf16.msra.mxu0 %v574
      %619 = vmatprep.subr.bf16.mxu0 0
      %620 = vmatpush1.bf16.msra.mxu0 %v573
      %621 = vmatprep.subr.bf16.mxu0 0
      %622 = vmatpush2.bf16.msra.mxu0 %v588
      %623 = vmatprep.subr.bf16.mxu0 0
      %624 = vmatpush2.bf16.msra.mxu0 %v587
      %625 = vmatprep.subr.bf16.mxu0 0
      %626 = vmatpush2.bf16.msra.mxu0 %v586
      %627 = vmatprep.subr.bf16.mxu0 0
      %628 = vmatpush2.bf16.msra.mxu0 %v585
      %629 = vmatprep.subr.bf16.mxu0 0
      %630 = vmatpush2.bf16.msra.mxu0 %v584
      %631 = vmatprep.subr.bf16.mxu0 0
      %632 = vmatpush2.bf16.msra.mxu0 %v583
      %633 = vmatprep.subr.bf16.mxu0 0
      %634 = vmatpush2.bf16.msra.mxu0 %v582
      %635 = vmatprep.subr.bf16.mxu0 0
      %636 = vmatpush2.bf16.msra.mxu0 %v581
      %637 = vmatprep.mubr.bf16.mxu0 %v506
      %638 = vmatmul.mubr.bf16.gmra.mxu0 %v505
      %v639 = vpop.f32.mrf.mxu0
      %v640 = vadd.f32 %v493, %v639
      %v641 = vpop.f32.mrf.mxu0
      %v642 = vpop.f32.mrf.mxu0
      %v643 = vadd.f32 %v496, %v642
      %v644 = vpop.f32.mrf.mxu0
      %645 = vdwg.mxu0
      %v646 = vld [vmem:[%s4] sm:$0x1]
      %v648 = vlaneseq
      %v649 = vshrl.u32 %v648, 7
      %v650 = vsub.s32 0, %v649
      %v651 = vrot.slane %v646, %v650
      %v653 = vmul.f32 %v640, %v651
      %v654 = vmul.f32 %v643, %v651
      %v655 = vld [vmem:[%s5] sm:$0x1]
      %v657 = vlaneseq
      %v658 = vshrl.u32 %v657, 7
      %v659 = vsub.s32 0, %v658
      %v660 = vrot.slane %v655, %v659
      %v662 = vadd.f32 %v653, %v660
      %v663 = vadd.f32 %v654, %v660
      %v664 = vmax.f32 %v662, 0.0
      %v665 = vmax.f32 %v663, 0.0
      %v666 = vpack.c.bf16 %v665, %v664
      %v668 = vunpack.c.l.b16 %v666
      %v669 = vunpack.c.h.b16 %v666
      %v670 = vpack.c.b16 %v668, %v668
      %v671 = vpack.c.b16 %v669, %v669
      %674 = vst [vmem:[%s281] sm:$0xf] %v670
      %675 = vst [vmem:[%s281 + $0x4] sm:$0xf] %v671
      %s676 = smul.u32 2, %s17
      %p677 = scmp.lt.s32.totalorder %s676, 3
      %s678 = scalar_select %p677, %s676, 3
      %s679 = smul.addr %s678, 4
      %s680 = scalar_lea.vmem %s6, %s679
      // Predicated region
      $region45: #{fcn_forward.10} parent=43 // pred_check
        %p681 = pneg %p171
      $region46: #{fcn_forward.10} parent=43 // pred_check_branch
        %683 = sbr.rel (%p681) target = $region48
      $region47: #{fcn_forward.10} parent=43 // pred_region
        %s684 = smul.u32 2, %s17
      $region48: #{fcn_forward.10} parent=43 // pred_fallthru
        _
    $region44: #{fcn_forward.10} parent=5 // pred_fallthru
      _
    %p685 = scmp.le.s32.totalorder 2, %s12
    // Predicated region
    $region49: #{fcn_forward.10} parent=5 // pred_check
      %p686 = pneg %p685
    $region50: #{fcn_forward.10} parent=5 // pred_check_branch
      %688 = sbr.rel (%p686) target = $region52
    $region51: #{fcn_forward.10} parent=5 // pred_region
      %s689 = ssub.s32 %s12, 2
      // Predicated region
      $region53: #{fcn_forward.10} parent=51 // pred_check
        %p690 = pneg %p177
      $region54: #{fcn_forward.10} parent=51 // pred_check_branch
        %692 = sbr.rel (%p690) target = $region56
      $region55: #{fcn_forward.10} parent=51 // pred_region
        %s693 = smul.u32 2, %s18
        %p694 = scmp.lt.s32.totalorder %s693, 3
        %s695 = scalar_select %p694, %s693, 3
        %s696 = smul.addr %s695, 4
        %s697 = scalar_lea.vmem %s6, %s696
      $region56: #{fcn_forward.10} parent=51 // pred_fallthru
        _
    $region52: #{fcn_forward.10} parent=5 // pred_fallthru
      _
  $region6: #{fcn_forward.10} parent=0 // loop_footer
    %s16 = sadd.s32 1, %s12
  $region7: #{fcn_forward.10} parent=0 // loop_footer_branch
    %11 = sbr.rel target = $region3
  $region8: #{fcn_forward.10} parent=0 // loop_exit
    _

// kernel: tile.58
$region0: #{tile.58}
  #allocation0 [shape = 's32[1]{0}', space=sflag, size = 0x4, scoped, tag = 'scoped memory for tile.58']
  %s0 = inlined_call_operand.vmem [shape: f32[5], index: 0, kind: input, shape index: {}]
  %s1 = inlined_call_operand.vmem [shape: f32[4,5], index: 1, kind: output, shape index: {}]
  // Predicated region
  $region2: #{tile.58} parent=0 // pred_check
    _
  $region3: #{tile.58} parent=0 // pred_check_branch
    %3 = sbr.rel (0) target = $region5
  $region4: #{tile.58} parent=0 // pred_region
    _
  $region5: #{tile.58} parent=0 // pred_fallthru
    _
  %v4 = vld [vmem:[%s0] ss:$0 sm:$0xff]
  %5 = vst [vmem:[%s1] sm:$0xf] %v4

// kernel: tile.59
$region0: #{tile.59}
  %s0 = inlined_call_operand.vmem [shape: f32[4,5], index: 0, kind: input, shape index: {}]
  %s1 = inlined_call_operand.vmem [shape: f32[20], index: 1, kind: output, shape index: {}]
  $region1: #{tile.59} parent=0
    #allocation0 [shape = 'u8[4096]{0}', space=vmem, size = 0x1000, scoped, tag = 'scoped mem for output reshape']
    #allocation1 [shape = 'u8[4096]{0}', space=vmem, size = 0x1000, scoped, tag = 'scoped mem for input reshape']
    %s3 = sshll.u32 1, 4
    %s4 = ssub.s32 %s3, 1
    %v5 = vld [vmem:[%s0] sm:%s4]
    %6 = vst [vmem:[#allocation1] sm:%s4] %v5
    %v7 = vld [vmem:[#allocation1] sm:$0x1]
    %vm8 = vcmask 39936
    %9 = vst.msk [vmem:[#allocation0] sm:$0x1] %vm8, %v7
    %s10 = scalar_lea.vmem [#allocation1], 3
    %v11 = vld [vmem:[%s10] sm:$0x1]
    %12 = vrot.lane.b32.xlu0 %v11, 15
    %v13 = vpop.permute.xlu0 %12
    %vm14 = vcmask 162936
    %15 = vst.msk [vmem:[#allocation0] sm:$0x1] %vm14, %v13
    %s16 = scalar_lea.vmem [#allocation1], 2
    %v17 = vld [vmem:[%s16] sm:$0x1]
    %18 = vrot.lane.b32.xlu0 %v17, 10
    %v19 = vpop.permute.xlu0 %18
    %vm20 = vcmask 121936
    %21 = vst.msk [vmem:[#allocation0] sm:$0x1] %vm20, %v19
    %s22 = scalar_lea.vmem [#allocation1], 1
    %v23 = vld [vmem:[%s22] sm:$0x1]
    %24 = vrot.lane.b32.xlu0 %v23, 5
    %v25 = vpop.permute.xlu0 %24
    %vm26 = vcmask 80936
    %27 = vst.msk [vmem:[#allocation0] sm:$0x1] %vm26, %v25
    %s29 = sshll.u32 1, 1
    %s30 = ssub.s32 %s29, 1
    %v32 = vld [vmem:[#allocation0] sm:%s30]
    %s33 = sshll.u32 1, 1
    %s34 = ssub.s32 %s33, 1
    %35 = vst [vmem:[%s1] sm:%s34] %v32

// kernel: fcn_forward.11
$region0: #{fcn_forward.11}
  #allocation0 [shape = 'u32[]', space=smem, size = 0x4, offset = 0x4, fixed_abs, tag = 'smem constant byte address 0x4 - core index']
  #allocation1 [shape = 'u32[144,128]{1,0:T(1,128)}', space=vmem, size = 0x12000, scoped, tag = 'internal scratch']
  %s0 = inlined_call_operand.vmem [shape: bf16[128,512], index: 0, kind: input, shape index: {}]
  %s1 = inlined_call_operand.vmem [shape: bf16[512,128], index: 1, kind: input, shape index: {}]
  %s2 = inlined_call_operand.vmem [shape: bf16[128,512], index: 2, kind: input, shape index: {}]
  %s3 = inlined_call_operand.vmem [shape: bf16[512,128], index: 3, kind: input, shape index: {}]
  %s4 = inlined_call_operand.vmem [shape: f32[1,128], index: 4, kind: input, shape index: {}]
  %s5 = inlined_call_operand.vmem [shape: f32[1,128], index: 5, kind: input, shape index: {}]
  %s6 = inlined_call_operand.vmem [shape: bf16[128,128], index: 6, kind: output, shape index: {}]
  %s7 = sld [smem:[#allocation0]]
  $region57: #{fcn_forward.11} parent=0
    _
  %s9 = ssub.s32 1, %s7
  %s10 = scalar_select 0, %s9, %s7
  loop: start=0, step=1, limit=4
  $region2: #{fcn_forward.11} parent=0 // loop_pre_header
    _
  $region3: #{fcn_forward.11} parent=0 // loop_header
    %s12 = sphi 0, %s16
    %p13 = scmp.ge.s32.totalorder %s12, 4
    %s22 = sphi 0, %s24
    %s25 = sphi 0, %s22
    %s26 = sphi 0, %s25
    %s42 = sphi 0, %s26
    %s46 = sphi 0, %s46
    %s48 = sphi 0, %s46
    %s49 = sphi 0, %s48
    %s63 = sphi 0, %s49
    %s69 = sphi 0, %s71
    %s72 = sphi 0, %s69
    %s73 = sphi 0, %s72
    %s89 = sphi 0, %s73
    %s93 = sphi 0, %s93
    %s95 = sphi 0, %s93
    %s96 = sphi 0, %s95
    %s110 = sphi 0, %s96
    %s114 = sphi 0, %s114
    %s116 = sphi 0, %s114
    %s117 = sphi 0, %s116
    %s131 = sphi 0, %s117
    %s135 = sphi 0, %s135
    %s137 = sphi 0, %s135
    %s138 = sphi 0, %s137
    %s152 = sphi 0, %s138
    %s158 = sphi 0, %s160
    %s161 = sphi 0, %s158
    %s162 = sphi 0, %s161
    %s178 = sphi 0, %s162
  $region4: #{fcn_forward.11} parent=0 // loop_header_branch
    %15 = sbr.rel (%p13) target = $region8
  $region5: #{fcn_forward.11} parent=0 // loop_body
    %s17 = ssub.s32 %s12, 1
    %s18 = ssub.s32 %s12, 2
    %s19 = sadd.s32 %s12, 1
    %s20 = ssub.s32 %s12, %s19
    %p21 = scmp.eq.s32.totalorder %s20, 0
    %s23 = sadd.s32 %s22, 1
    %s24 = scalar_select %p21, %s22, %s23
    %p27 = pneg %p21
    %p28 = scmp.eq.s32.totalorder %s12, 1
    %p29 = por %p27, %p28
    %p30 = scmp.ne.s32.totalorder %s22, %s25
    %p31 = scmp.eq.s32.totalorder %s12, 0
    %p32 = por %p30, %p31
    %p33 = scmp.ne.s32.totalorder %s22, %s25
    %p34 = scmp.eq.s32.totalorder %s17, 1
    %p35 = por %p33, %p34
    %p36 = scmp.ne.s32.totalorder %s25, %s26
    %p37 = scmp.eq.s32.totalorder %s17, 0
    %p38 = por %p36, %p37
    %p39 = scmp.ne.s32.totalorder %s25, %s26
    %p40 = scmp.eq.s32.totalorder %s18, 1
    %p41 = por %p39, %p40
    %p43 = scmp.ne.s32.totalorder %s26, %s42
    %p44 = scmp.eq.s32.totalorder %s18, 0
    %p45 = por %p43, %p44
    %s47 = sadd.s32 %s46, 1
    %p50 = scmp.eq.s32.totalorder %s12, 1
    %p51 = scmp.ne.s32.totalorder %s46, %s48
    %p52 = scmp.eq.s32.totalorder %s12, 0
    %p53 = por %p51, %p52
    %p54 = scmp.ne.s32.totalorder %s46, %s48
    %p55 = scmp.eq.s32.totalorder %s17, 1
    %p56 = por %p54, %p55
    %p57 = scmp.ne.s32.totalorder %s48, %s49
    %p58 = scmp.eq.s32.totalorder %s17, 0
    %p59 = por %p57, %p58
    %p60 = scmp.ne.s32.totalorder %s48, %s49
    %p61 = scmp.eq.s32.totalorder %s18, 1
    %p62 = por %p60, %p61
    %p64 = scmp.ne.s32.totalorder %s49, %s63
    %p65 = scmp.eq.s32.totalorder %s18, 0
    %p66 = por %p64, %p65
    %s67 = ssub.s32 %s12, %s19
    %p68 = scmp.eq.s32.totalorder %s67, 0
    %s70 = sadd.s32 %s69, 1
    %s71 = scalar_select %p68, %s69, %s70
    %p74 = pneg %p68
    %p75 = scmp.eq.s32.totalorder %s12, 1
    %p76 = por %p74, %p75
    %p77 = scmp.ne.s32.totalorder %s69, %s72
    %p78 = scmp.eq.s32.totalorder %s12, 0
    %p79 = por %p77, %p78
    %p80 = scmp.ne.s32.totalorder %s69, %s72
    %p81 = scmp.eq.s32.totalorder %s17, 1
    %p82 = por %p80, %p81
    %p83 = scmp.ne.s32.totalorder %s72, %s73
    %p84 = scmp.eq.s32.totalorder %s17, 0
    %p85 = por %p83, %p84
    %p86 = scmp.ne.s32.totalorder %s72, %s73
    %p87 = scmp.eq.s32.totalorder %s18, 1
    %p88 = por %p86, %p87
    %p90 = scmp.ne.s32.totalorder %s73, %s89
    %p91 = scmp.eq.s32.totalorder %s18, 0
    %p92 = por %p90, %p91
    %s94 = sadd.s32 %s93, 1
    %p97 = scmp.eq.s32.totalorder %s12, 1
    %p98 = scmp.ne.s32.totalorder %s93, %s95
    %p99 = scmp.eq.s32.totalorder %s12, 0
    %p100 = por %p98, %p99
    %p101 = scmp.ne.s32.totalorder %s93, %s95
    %p102 = scmp.eq.s32.totalorder %s17, 1
    %p103 = por %p101, %p102
    %p104 = scmp.ne.s32.totalorder %s95, %s96
    %p105 = scmp.eq.s32.totalorder %s17, 0
    %p106 = por %p104, %p105
    %p107 = scmp.ne.s32.totalorder %s95, %s96
    %p108 = scmp.eq.s32.totalorder %s18, 1
    %p109 = por %p107, %p108
    %p111 = scmp.ne.s32.totalorder %s96, %s110
    %p112 = scmp.eq.s32.totalorder %s18, 0
    %p113 = por %p111, %p112
    %s115 = sadd.s32 %s114, 1
    %p118 = scmp.eq.s32.totalorder %s12, 1
    %p119 = scmp.ne.s32.totalorder %s114, %s116
    %p120 = scmp.eq.s32.totalorder %s12, 0
    %p121 = por %p119, %p120
    %p122 = scmp.ne.s32.totalorder %s114, %s116
    %p123 = scmp.eq.s32.totalorder %s17, 1
    %p124 = por %p122, %p123
    %p125 = scmp.ne.s32.totalorder %s116, %s117
    %p126 = scmp.eq.s32.totalorder %s17, 0
    %p127 = por %p125, %p126
    %p128 = scmp.ne.s32.totalorder %s116, %s117
    %p129 = scmp.eq.s32.totalorder %s18, 1
    %p130 = por %p128, %p129
    %p132 = scmp.ne.s32.totalorder %s117, %s131
    %p133 = scmp.eq.s32.totalorder %s18, 0
    %p134 = por %p132, %p133
    %s136 = sadd.s32 %s135, 1
    %p139 = scmp.eq.s32.totalorder %s12, 1
    %p140 = scmp.ne.s32.totalorder %s135, %s137
    %p141 = scmp.eq.s32.totalorder %s12, 0
    %p142 = por %p140, %p141
    %p143 = scmp.ne.s32.totalorder %s135, %s137
    %p144 = scmp.eq.s32.totalorder %s17, 1
    %p145 = por %p143, %p144
    %p146 = scmp.ne.s32.totalorder %s137, %s138
    %p147 = scmp.eq.s32.totalorder %s17, 0
    %p148 = por %p146, %p147
    %p149 = scmp.ne.s32.totalorder %s137, %s138
    %p150 = scmp.eq.s32.totalorder %s18, 1
    %p151 = por %p149, %p150
    %p153 = scmp.ne.s32.totalorder %s138, %s152
    %p154 = scmp.eq.s32.totalorder %s18, 0
    %p155 = por %p153, %p154
    %s156 = ssub.s32 %s12, %s19
    %p157 = scmp.eq.s32.totalorder %s156, 0
    %s159 = sadd.s32 %s158, 1
    %s160 = scalar_select %p157, %s158, %s159
    %p163 = pneg %p157
    %p164 = scmp.eq.s32.totalorder %s12, 1
    %p165 = por %p163, %p164
    %p166 = scmp.ne.s32.totalorder %s158, %s161
    %p167 = scmp.eq.s32.totalorder %s12, 0
    %p168 = por %p166, %p167
    %p169 = scmp.ne.s32.totalorder %s158, %s161
    %p170 = scmp.eq.s32.totalorder %s17, 1
    %p171 = por %p169, %p170
    %p172 = scmp.ne.s32.totalorder %s161, %s162
    %p173 = scmp.eq.s32.totalorder %s17, 0
    %p174 = por %p172, %p173
    %p175 = scmp.ne.s32.totalorder %s161, %s162
    %p176 = scmp.eq.s32.totalorder %s18, 1
    %p177 = por %p175, %p176
    %p179 = scmp.ne.s32.totalorder %s162, %s178
    %p180 = scmp.eq.s32.totalorder %s18, 0
    %p181 = por %p179, %p180
    %p182 = scmp.le.s32.totalorder 1, %s12
    %p183 = scmp.lt.s32.totalorder %s12, 3
    %p184 = pnand %p182, %p183
    %p185 = pneg %p184
    // Predicated region
    $region9: #{fcn_forward.11} parent=5 // pred_check
      _
    $region10: #{fcn_forward.11} parent=5 // pred_check_branch
      %187 = sbr.rel (%p184) target = $region12
    $region11: #{fcn_forward.11} parent=5 // pred_region
      %s188 = ssub.s32 %s12, 1
      // Predicated region
      $region13: #{fcn_forward.11} parent=11 // pred_check
        %p189 = pneg %p59
      $region14: #{fcn_forward.11} parent=11 // pred_check_branch
        %191 = sbr.rel (%p189) target = $region16
      $region15: #{fcn_forward.11} parent=11 // pred_region
        _
      $region16: #{fcn_forward.11} parent=11 // pred_fallthru
        _
      // Predicated region
      $region17: #{fcn_forward.11} parent=11 // pred_check
        %p192 = pneg %p106
      $region18: #{fcn_forward.11} parent=11 // pred_check_branch
        %194 = sbr.rel (%p192) target = $region20
      $region19: #{fcn_forward.11} parent=11 // pred_region
        _
      $region20: #{fcn_forward.11} parent=11 // pred_fallthru
        _
      // Predicated region
      $region21: #{fcn_forward.11} parent=11 // pred_check
        %p195 = pneg %p127
      $region22: #{fcn_forward.11} parent=11 // pred_check_branch
        %197 = sbr.rel (%p195) target = $region24
      $region23: #{fcn_forward.11} parent=11 // pred_region
        _
      $region24: #{fcn_forward.11} parent=11 // pred_fallthru
        _
      // Predicated region
      $region25: #{fcn_forward.11} parent=11 // pred_check
        %p198 = pneg %p148
      $region26: #{fcn_forward.11} parent=11 // pred_check_branch
        %200 = sbr.rel (%p198) target = $region28
      $region27: #{fcn_forward.11} parent=11 // pred_region
        _
      $region28: #{fcn_forward.11} parent=11 // pred_fallthru
        _
    $region12: #{fcn_forward.11} parent=5 // pred_fallthru
      _
    %p201 = scmp.lt.s32.totalorder %s12, 2
    // Predicated region
    $region29: #{fcn_forward.11} parent=5 // pred_check
      %p202 = pneg %p201
    $region30: #{fcn_forward.11} parent=5 // pred_check_branch
      %204 = sbr.rel (%p202) target = $region32
    $region31: #{fcn_forward.11} parent=5 // pred_region
      // Predicated region
      $region33: #{fcn_forward.11} parent=31 // pred_check
        %p205 = pneg %p32
      $region34: #{fcn_forward.11} parent=31 // pred_check_branch
        %207 = sbr.rel (%p205) target = $region36
      $region35: #{fcn_forward.11} parent=31 // pred_region
        %s208 = smul.u32 8, %s12
        %p209 = scmp.lt.s32.totalorder %s208, 15
        %s210 = scalar_select %p209, %s208, 15
        %s211 = smul.addr %s210, 4
        %s212 = smul.addr %s211, 4
        %s213 = scalar_lea.vmem %s0, %s212
        %s214 = smul.u32 8, %s12
      $region36: #{fcn_forward.11} parent=31 // pred_fallthru
        _
      // Predicated region
      $region37: #{fcn_forward.11} parent=31 // pred_check
        %p215 = pneg %p79
      $region38: #{fcn_forward.11} parent=31 // pred_check_branch
        %217 = sbr.rel (%p215) target = $region40
      $region39: #{fcn_forward.11} parent=31 // pred_region
        %s218 = smul.u32 8, %s12
        %p219 = scmp.lt.s32.totalorder %s218, 15
        %s220 = scalar_select %p219, %s218, 15
        %s221 = smul.addr %s220, 4
        %s222 = smul.addr %s221, 4
        %s223 = scalar_lea.vmem %s2, %s222
        %s224 = smul.u32 8, %s12
      $region40: #{fcn_forward.11} parent=31 // pred_fallthru
        _
    $region32: #{fcn_forward.11} parent=5 // pred_fallthru
      _
    %p225 = scmp.le.s32.totalorder 1, %s12
    %p226 = scmp.lt.s32.totalorder %s12, 3
    %p227 = pnand %p225, %p226
    %p228 = pneg %p227
    // Predicated region
    $region41: #{fcn_forward.11} parent=5 // pred_check
      _
    $region42: #{fcn_forward.11} parent=5 // pred_check_branch
      %230 = sbr.rel (%p227) target = $region44
    $region43: #{fcn_forward.11} parent=5 // pred_region
      %s231 = ssub.s32 %s12, 1
      %s232 = smul.u32 8, %s17
      %p233 = scmp.lt.s32.totalorder %s232, 15
      %s234 = scalar_select %p233, %s232, 15
      %s235 = smul.addr %s234, 4
      %s236 = smul.addr %s235, 4
      %s237 = scalar_lea.vmem %s0, %s236
      %p238 = pneg %p38
      %p239 = pneg %p35
      %p240 = pneg %p59
      %p241 = pneg %p56
      %s242 = smul.u32 8, %s17
      %p243 = scmp.lt.s32.totalorder %s242, 15
      %s244 = scalar_select %p243, %s242, 15
      %s245 = smul.addr %s244, 4
      %s246 = smul.addr %s245, 4
      %s247 = scalar_lea.vmem %s2, %s246
      %p248 = pneg %p85
      %p249 = pneg %p82
      %p250 = pneg %p106
      %p251 = pneg %p103
      %p252 = pneg %p127
      %p253 = pneg %p124
      %p254 = pneg %p148
      %p255 = pneg %p145
      %p256 = pneg %p174
      %p257 = pneg %p171
      %s258 = smul.u32 8, %s17
      %p259 = scmp.lt.s32.totalorder %s258, 15
      %s260 = scalar_select %p259, %s258, 15
      %s261 = smul.addr %s260, 4
      %s262 = scalar_lea.vmem %s6, %s261
      %s263 = smul.u32 8, %s17
      %p264 = scmp.lt.s32.totalorder %s263, 15
      %s265 = scalar_select %p264, %s263, 15
      %s266 = smul.addr %s265, 4
      %s267 = smul.addr %s266, 4
      %s268 = scalar_lea.vmem %s0, %s267
      %s269 = smul.u32 8, %s17
      %s270 = smul.u32 8, %s17
      %p271 = scmp.lt.s32.totalorder %s270, 15
      %s272 = scalar_select %p271, %s270, 15
      %s273 = smul.addr %s272, 4
      %s274 = smul.addr %s273, 4
      %s275 = scalar_lea.vmem %s2, %s274
      %s276 = smul.u32 8, %s17
      %s277 = smul.u32 8, %s17
      %p278 = scmp.lt.s32.totalorder %s277, 15
      %s279 = scalar_select %p278, %s277, 15
      %s280 = smul.addr %s279, 4
      %s281 = scalar_lea.vmem %s6, %s280
      %s282 = smul.u32 8, %s17
      %v284 = vld [vmem:[%s268] sm:$0xff]
      %v285 = vld [vmem:[%s268 + $0x8] sm:$0xff]
      %v286 = vld [vmem:[%s268 + $0x10] sm:$0xff]
      %v287 = vld [vmem:[%s268 + $0x18] sm:$0xff]
      %v288 = vld [vmem:[%s268 + $0x20] sm:$0xff]
      %v289 = vld [vmem:[%s268 + $0x28] sm:$0xff]
      %v290 = vld [vmem:[%s268 + $0x30] sm:$0xff]
      %v291 = vld [vmem:[%s268 + $0x38] sm:$0xff]
      %v292 = vld [vmem:[%s268 + $0x40] sm:$0xff]
      %v293 = vld [vmem:[%s268 + $0x48] sm:$0xff]
      %v294 = vld [vmem:[%s268 + $0x50] sm:$0xff]
      %v295 = vld [vmem:[%s268 + $0x58] sm:$0xff]
      %v296 = vld [vmem:[%s268 + $0x60] sm:$0xff]
      %v297 = vld [vmem:[%s268 + $0x68] sm:$0xff]
      %v298 = vld [vmem:[%s268 + $0x70] sm:$0xff]
      %v299 = vld [vmem:[%s268 + $0x78] sm:$0xff]
      %v300 = vld [vmem:[%s1] sm:$0xf]
      %v301 = vld [vmem:[%s1 + $0x4] sm:$0xf]
      %v302 = vld [vmem:[%s1 + $0x8] sm:$0xf]
      %v303 = vld [vmem:[%s1 + $0xc] sm:$0xf]
      %v304 = vld [vmem:[%s1 + $0x10] sm:$0xf]
      %v305 = vld [vmem:[%s1 + $0x14] sm:$0xf]
      %v306 = vld [vmem:[%s1 + $0x18] sm:$0xf]
      %v307 = vld [vmem:[%s1 + $0x1c] sm:$0xf]
      %v308 = vld [vmem:[%s1 + $0x20] sm:$0xf]
      %v309 = vld [vmem:[%s1 + $0x24] sm:$0xf]
      %v310 = vld [vmem:[%s1 + $0x28] sm:$0xf]
      %v311 = vld [vmem:[%s1 + $0x2c] sm:$0xf]
      %v312 = vld [vmem:[%s1 + $0x30] sm:$0xf]
      %v313 = vld [vmem:[%s1 + $0x34] sm:$0xf]
      %v314 = vld [vmem:[%s1 + $0x38] sm:$0xf]
      %v315 = vld [vmem:[%s1 + $0x3c] sm:$0xf]
      %v316 = vld [vmem:[%s1 + $0x40] sm:$0xf]
      %v317 = vld [vmem:[%s1 + $0x44] sm:$0xf]
      %v318 = vld [vmem:[%s1 + $0x48] sm:$0xf]
      %v319 = vld [vmem:[%s1 + $0x4c] sm:$0xf]
      %v320 = vld [vmem:[%s1 + $0x50] sm:$0xf]
      %v321 = vld [vmem:[%s1 + $0x54] sm:$0xf]
      %v322 = vld [vmem:[%s1 + $0x58] sm:$0xf]
      %v323 = vld [vmem:[%s1 + $0x5c] sm:$0xf]
      %v324 = vld [vmem:[%s1 + $0x60] sm:$0xf]
      %v325 = vld [vmem:[%s1 + $0x64] sm:$0xf]
      %v326 = vld [vmem:[%s1 + $0x68] sm:$0xf]
      %v327 = vld [vmem:[%s1 + $0x6c] sm:$0xf]
      %v328 = vld [vmem:[%s1 + $0x70] sm:$0xf]
      %v329 = vld [vmem:[%s1 + $0x74] sm:$0xf]
      %v330 = vld [vmem:[%s1 + $0x78] sm:$0xf]
      %v331 = vld [vmem:[%s1 + $0x7c] sm:$0xf]
      %v332 = vld [vmem:[%s1 + $0x80] sm:$0xf]
      %v333 = vld [vmem:[%s1 + $0x84] sm:$0xf]
      %v334 = vld [vmem:[%s1 + $0x88] sm:$0xf]
      %v335 = vld [vmem:[%s1 + $0x8c] sm:$0xf]
      %v336 = vld [vmem:[%s1 + $0x90] sm:$0xf]
      %v337 = vld [vmem:[%s1 + $0x94] sm:$0xf]
      %v338 = vld [vmem:[%s1 + $0x98] sm:$0xf]
      %v339 = vld [vmem:[%s1 + $0x9c] sm:$0xf]
      %v340 = vld [vmem:[%s1 + $0xa0] sm:$0xf]
      %v341 = vld [vmem:[%s1 + $0xa4] sm:$0xf]
      %v342 = vld [vmem:[%s1 + $0xa8] sm:$0xf]
      %v343 = vld [vmem:[%s1 + $0xac] sm:$0xf]
      %v344 = vld [vmem:[%s1 + $0xb0] sm:$0xf]
      %v345 = vld [vmem:[%s1 + $0xb4] sm:$0xf]
      %v346 = vld [vmem:[%s1 + $0xb8] sm:$0xf]
      %v347 = vld [vmem:[%s1 + $0xbc] sm:$0xf]
      %v348 = vld [vmem:[%s1 + $0xc0] sm:$0xf]
      %v349 = vld [vmem:[%s1 + $0xc4] sm:$0xf]
      %v350 = vld [vmem:[%s1 + $0xc8] sm:$0xf]
      %v351 = vld [vmem:[%s1 + $0xcc] sm:$0xf]
      %v352 = vld [vmem:[%s1 + $0xd0] sm:$0xf]
      %v353 = vld [vmem:[%s1 + $0xd4] sm:$0xf]
      %v354 = vld [vmem:[%s1 + $0xd8] sm:$0xf]
      %v355 = vld [vmem:[%s1 + $0xdc] sm:$0xf]
      %v356 = vld [vmem:[%s1 + $0xe0] sm:$0xf]
      %v357 = vld [vmem:[%s1 + $0xe4] sm:$0xf]
      %v358 = vld [vmem:[%s1 + $0xe8] sm:$0xf]
      %v359 = vld [vmem:[%s1 + $0xec] sm:$0xf]
      %v360 = vld [vmem:[%s1 + $0xf0] sm:$0xf]
      %v361 = vld [vmem:[%s1 + $0xf4] sm:$0xf]
      %v362 = vld [vmem:[%s1 + $0xf8] sm:$0xf]
      %v363 = vld [vmem:[%s1 + $0xfc] sm:$0xf]
      %v364 = vld [vmem:[%s275] sm:$0xff]
      %v365 = vld [vmem:[%s275 + $0x8] sm:$0xff]
      %v366 = vld [vmem:[%s275 + $0x10] sm:$0xff]
      %v367 = vld [vmem:[%s275 + $0x18] sm:$0xff]
      %v368 = vld [vmem:[%s275 + $0x20] sm:$0xff]
      %v369 = vld [vmem:[%s275 + $0x28] sm:$0xff]
      %v370 = vld [vmem:[%s275 + $0x30] sm:$0xff]
      %v371 = vld [vmem:[%s275 + $0x38] sm:$0xff]
      %v372 = vld [vmem:[%s275 + $0x40] sm:$0xff]
      %v373 = vld [vmem:[%s275 + $0x48] sm:$0xff]
      %v374 = vld [vmem:[%s275 + $0x50] sm:$0xff]
      %v375 = vld [vmem:[%s275 + $0x58] sm:$0xff]
      %v376 = vld [vmem:[%s275 + $0x60] sm:$0xff]
      %v377 = vld [vmem:[%s275 + $0x68] sm:$0xff]
      %v378 = vld [vmem:[%s275 + $0x70] sm:$0xff]
      %v379 = vld [vmem:[%s275 + $0x78] sm:$0xff]
      %v380 = vld [vmem:[%s3] sm:$0xf]
      %v381 = vld [vmem:[%s3 + $0x4] sm:$0xf]
      %v382 = vld [vmem:[%s3 + $0x8] sm:$0xf]
      %v383 = vld [vmem:[%s3 + $0xc] sm:$0xf]
      %v384 = vld [vmem:[%s3 + $0x10] sm:$0xf]
      %v385 = vld [vmem:[%s3 + $0x14] sm:$0xf]
      %v386 = vld [vmem:[%s3 + $0x18] sm:$0xf]
      %v387 = vld [vmem:[%s3 + $0x1c] sm:$0xf]
      %v388 = vld [vmem:[%s3 + $0x20] sm:$0xf]
      %v389 = vld [vmem:[%s3 + $0x24] sm:$0xf]
      %v390 = vld [vmem:[%s3 + $0x28] sm:$0xf]
      %v391 = vld [vmem:[%s3 + $0x2c] sm:$0xf]
      %v392 = vld [vmem:[%s3 + $0x30] sm:$0xf]
      %v393 = vld [vmem:[%s3 + $0x34] sm:$0xf]
      %v394 = vld [vmem:[%s3 + $0x38] sm:$0xf]
      %v395 = vld [vmem:[%s3 + $0x3c] sm:$0xf]
      %v396 = vld [vmem:[%s3 + $0x40] sm:$0xf]
      %v397 = vld [vmem:[%s3 + $0x44] sm:$0xf]
      %v398 = vld [vmem:[%s3 + $0x48] sm:$0xf]
      %v399 = vld [vmem:[%s3 + $0x4c] sm:$0xf]
      %v400 = vld [vmem:[%s3 + $0x50] sm:$0xf]
      %v401 = vld [vmem:[%s3 + $0x54] sm:$0xf]
      %v402 = vld [vmem:[%s3 + $0x58] sm:$0xf]
      %v403 = vld [vmem:[%s3 + $0x5c] sm:$0xf]
      %v404 = vld [vmem:[%s3 + $0x60] sm:$0xf]
      %v405 = vld [vmem:[%s3 + $0x64] sm:$0xf]
      %v406 = vld [vmem:[%s3 + $0x68] sm:$0xf]
      %v407 = vld [vmem:[%s3 + $0x6c] sm:$0xf]
      %v408 = vld [vmem:[%s3 + $0x70] sm:$0xf]
      %v409 = vld [vmem:[%s3 + $0x74] sm:$0xf]
      %v410 = vld [vmem:[%s3 + $0x78] sm:$0xf]
      %v411 = vld [vmem:[%s3 + $0x7c] sm:$0xf]
      %v412 = vld [vmem:[%s3 + $0x80] sm:$0xf]
      %v413 = vld [vmem:[%s3 + $0x84] sm:$0xf]
      %v414 = vld [vmem:[%s3 + $0x88] sm:$0xf]
      %v415 = vld [vmem:[%s3 + $0x8c] sm:$0xf]
      %v416 = vld [vmem:[%s3 + $0x90] sm:$0xf]
      %v417 = vld [vmem:[%s3 + $0x94] sm:$0xf]
      %v418 = vld [vmem:[%s3 + $0x98] sm:$0xf]
      %v419 = vld [vmem:[%s3 + $0x9c] sm:$0xf]
      %v420 = vld [vmem:[%s3 + $0xa0] sm:$0xf]
      %v421 = vld [vmem:[%s3 + $0xa4] sm:$0xf]
      %v422 = vld [vmem:[%s3 + $0xa8] sm:$0xf]
      %v423 = vld [vmem:[%s3 + $0xac] sm:$0xf]
      %v424 = vld [vmem:[%s3 + $0xb0] sm:$0xf]
      %v425 = vld [vmem:[%s3 + $0xb4] sm:$0xf]
      %v426 = vld [vmem:[%s3 + $0xb8] sm:$0xf]
      %v427 = vld [vmem:[%s3 + $0xbc] sm:$0xf]
      %v428 = vld [vmem:[%s3 + $0xc0] sm:$0xf]
      %v429 = vld [vmem:[%s3 + $0xc4] sm:$0xf]
      %v430 = vld [vmem:[%s3 + $0xc8] sm:$0xf]
      %v431 = vld [vmem:[%s3 + $0xcc] sm:$0xf]
      %v432 = vld [vmem:[%s3 + $0xd0] sm:$0xf]
      %v433 = vld [vmem:[%s3 + $0xd4] sm:$0xf]
      %v434 = vld [vmem:[%s3 + $0xd8] sm:$0xf]
      %v435 = vld [vmem:[%s3 + $0xdc] sm:$0xf]
      %v436 = vld [vmem:[%s3 + $0xe0] sm:$0xf]
      %v437 = vld [vmem:[%s3 + $0xe4] sm:$0xf]
      %v438 = vld [vmem:[%s3 + $0xe8] sm:$0xf]
      %v439 = vld [vmem:[%s3 + $0xec] sm:$0xf]
      %v440 = vld [vmem:[%s3 + $0xf0] sm:$0xf]
      %v441 = vld [vmem:[%s3 + $0xf4] sm:$0xf]
      %v442 = vld [vmem:[%s3 + $0xf8] sm:$0xf]
      %v443 = vld [vmem:[%s3 + $0xfc] sm:$0xf]
      %v460 = vunpack.c.l.b16 %v364
      %v461 = vunpack.c.h.b16 %v364
      %v462 = vunpack.c.l.b16 %v365
      %v463 = vunpack.c.h.b16 %v365
      %v464 = vunpack.c.l.b16 %v366
      %v465 = vunpack.c.h.b16 %v366
      %v466 = vunpack.c.l.b16 %v367
      %v467 = vunpack.c.h.b16 %v367
      %v468 = vunpack.c.l.b16 %v368
      %v469 = vunpack.c.h.b16 %v368
      %v470 = vunpack.c.l.b16 %v369
      %v471 = vunpack.c.h.b16 %v369
      %v472 = vunpack.c.l.b16 %v370
      %v473 = vunpack.c.h.b16 %v370
      %v474 = vunpack.c.l.b16 %v371
      %v475 = vunpack.c.h.b16 %v371
      %v476 = vunpack.c.l.b16 %v372
      %v477 = vunpack.c.h.b16 %v372
      %v478 = vunpack.c.l.b16 %v373
      %v479 = vunpack.c.h.b16 %v373
      %v480 = vunpack.c.l.b16 %v374
      %v481 = vunpack.c.h.b16 %v374
      %v482 = vunpack.c.l.b16 %v375
      %v483 = vunpack.c.h.b16 %v375
      %v484 = vunpack.c.l.b16 %v376
      %v485 = vunpack.c.h.b16 %v376
      %v486 = vunpack.c.l.b16 %v377
      %v487 = vunpack.c.h.b16 %v377
      %v488 = vunpack.c.l.b16 %v378
      %v489 = vunpack.c.h.b16 %v378
      %v490 = vunpack.c.l.b16 %v379
      %v491 = vunpack.c.h.b16 %v379
      %v492 = vpack.c.b16 %v464, %v460
      %v493 = vpack.c.b16 %v465, %v461
      %v494 = vpack.c.b16 %v466, %v462
      %v495 = vpack.c.b16 %v467, %v463
      %v496 = vpack.c.b16 %v472, %v468
      %v497 = vpack.c.b16 %v473, %v469
      %v498 = vpack.c.b16 %v474, %v470
      %v499 = vpack.c.b16 %v475, %v471
      %v500 = vpack.c.b16 %v480, %v476
      %v501 = vpack.c.b16 %v481, %v477
      %v502 = vpack.c.b16 %v482, %v478
      %v503 = vpack.c.b16 %v483, %v479
      %v504 = vpack.c.b16 %v488, %v484
      %v505 = vpack.c.b16 %v489, %v485
      %v506 = vpack.c.b16 %v490, %v486
      %v507 = vpack.c.b16 %v491, %v487
      %v588 = vunpack.c.l.b16 %v380
      %v589 = vunpack.c.l.b16 %v381
      %v590 = vunpack.c.l.b16 %v382
      %v591 = vunpack.c.l.b16 %v383
      %v592 = vunpack.c.l.b16 %v384
      %v593 = vunpack.c.l.b16 %v385
      %v594 = vunpack.c.l.b16 %v386
      %v595 = vunpack.c.l.b16 %v387
      %v596 = vunpack.c.l.b16 %v388
      %v597 = vunpack.c.l.b16 %v389
      %v598 = vunpack.c.l.b16 %v390
      %v599 = vunpack.c.l.b16 %v391
      %v600 = vunpack.c.l.b16 %v392
      %v601 = vunpack.c.l.b16 %v393
      %v602 = vunpack.c.l.b16 %v394
      %v603 = vunpack.c.l.b16 %v395
      %v604 = vunpack.c.l.b16 %v396
      %v605 = vunpack.c.l.b16 %v397
      %v606 = vunpack.c.l.b16 %v398
      %v607 = vunpack.c.l.b16 %v399
      %v608 = vunpack.c.l.b16 %v400
      %v609 = vunpack.c.l.b16 %v401
      %v610 = vunpack.c.l.b16 %v402
      %v611 = vunpack.c.l.b16 %v403
      %v612 = vunpack.c.l.b16 %v404
      %v613 = vunpack.c.l.b16 %v405
      %v614 = vunpack.c.l.b16 %v406
      %v615 = vunpack.c.l.b16 %v407
      %v616 = vunpack.c.l.b16 %v408
      %v617 = vunpack.c.l.b16 %v409
      %v618 = vunpack.c.l.b16 %v410
      %v619 = vunpack.c.l.b16 %v411
      %v620 = vunpack.c.l.b16 %v412
      %v621 = vunpack.c.l.b16 %v413
      %v622 = vunpack.c.l.b16 %v414
      %v623 = vunpack.c.l.b16 %v415
      %v624 = vunpack.c.l.b16 %v416
      %v625 = vunpack.c.l.b16 %v417
      %v626 = vunpack.c.l.b16 %v418
      %v627 = vunpack.c.l.b16 %v419
      %v628 = vunpack.c.l.b16 %v420
      %v629 = vunpack.c.l.b16 %v421
      %v630 = vunpack.c.l.b16 %v422
      %v631 = vunpack.c.l.b16 %v423
      %v632 = vunpack.c.l.b16 %v424
      %v633 = vunpack.c.l.b16 %v425
      %v634 = vunpack.c.l.b16 %v426
      %v635 = vunpack.c.l.b16 %v427
      %v636 = vunpack.c.l.b16 %v428
      %v637 = vunpack.c.l.b16 %v429
      %v638 = vunpack.c.l.b16 %v430
      %v639 = vunpack.c.l.b16 %v431
      %v640 = vunpack.c.l.b16 %v432
      %v641 = vunpack.c.l.b16 %v433
      %v642 = vunpack.c.l.b16 %v434
      %v643 = vunpack.c.l.b16 %v435
      %v644 = vunpack.c.l.b16 %v436
      %v645 = vunpack.c.l.b16 %v437
      %v646 = vunpack.c.l.b16 %v438
      %v647 = vunpack.c.l.b16 %v439
      %v648 = vunpack.c.l.b16 %v440
      %v649 = vunpack.c.l.b16 %v441
      %v650 = vunpack.c.l.b16 %v442
      %v651 = vunpack.c.l.b16 %v443
      %v652 = vpack.c.b16 %v589, %v588
      %v653 = vpack.c.b16 %v591, %v590
      %v654 = vpack.c.b16 %v593, %v592
      %v655 = vpack.c.b16 %v595, %v594
      %v656 = vpack.c.b16 %v597, %v596
      %v657 = vpack.c.b16 %v599, %v598
      %v658 = vpack.c.b16 %v601, %v600
      %v659 = vpack.c.b16 %v603, %v602
      %v660 = vpack.c.b16 %v605, %v604
      %v661 = vpack.c.b16 %v607, %v606
      %v662 = vpack.c.b16 %v609, %v608
      %v663 = vpack.c.b16 %v611, %v610
      %v664 = vpack.c.b16 %v613, %v612
      %v665 = vpack.c.b16 %v615, %v614
      %v666 = vpack.c.b16 %v617, %v616
      %v667 = vpack.c.b16 %v619, %v618
      %v668 = vpack.c.b16 %v621, %v620
      %v669 = vpack.c.b16 %v623, %v622
      %v670 = vpack.c.b16 %v625, %v624
      %v671 = vpack.c.b16 %v627, %v626
      %v672 = vpack.c.b16 %v629, %v628
      %v673 = vpack.c.b16 %v631, %v630
      %v674 = vpack.c.b16 %v633, %v632
      %v675 = vpack.c.b16 %v635, %v634
      %v676 = vpack.c.b16 %v637, %v636
      %v677 = vpack.c.b16 %v639, %v638
      %v678 = vpack.c.b16 %v641, %v640
      %v679 = vpack.c.b16 %v643, %v642
      %v680 = vpack.c.b16 %v645, %v644
      %v681 = vpack.c.b16 %v647, %v646
      %v682 = vpack.c.b16 %v649, %v648
      %v683 = vpack.c.b16 %v651, %v650
      %716 = vmatprep.subr.bf16.mxu0 0
      %717 = vmatpush1.bf16.msra.mxu0 %v659
      %718 = vmatprep.subr.bf16.mxu0 0
      %719 = vmatpush1.bf16.msra.mxu0 %v658
      %720 = vmatprep.subr.bf16.mxu0 0
      %721 = vmatpush1.bf16.msra.mxu0 %v657
      %722 = vmatprep.subr.bf16.mxu0 0
      %723 = vmatpush1.bf16.msra.mxu0 %v656
      %724 = vmatprep.subr.bf16.mxu0 0
      %725 = vmatpush1.bf16.msra.mxu0 %v655
      %726 = vmatprep.subr.bf16.mxu0 0
      %727 = vmatpush1.bf16.msra.mxu0 %v654
      %728 = vmatprep.subr.bf16.mxu0 0
      %729 = vmatpush1.bf16.msra.mxu0 %v653
      %730 = vmatprep.subr.bf16.mxu0 0
      %731 = vmatpush1.bf16.msra.mxu0 %v652
      %732 = vmatprep.subr.bf16.mxu0 0
      %733 = vmatpush2.bf16.msra.mxu0 %v667
      %734 = vmatprep.subr.bf16.mxu0 0
      %735 = vmatpush2.bf16.msra.mxu0 %v666
      %736 = vmatprep.subr.bf16.mxu0 0
      %737 = vmatpush2.bf16.msra.mxu0 %v665
      %738 = vmatprep.subr.bf16.mxu0 0
      %739 = vmatpush2.bf16.msra.mxu0 %v664
      %740 = vmatprep.subr.bf16.mxu0 0
      %741 = vmatpush2.bf16.msra.mxu0 %v663
      %742 = vmatprep.subr.bf16.mxu0 0
      %743 = vmatpush2.bf16.msra.mxu0 %v662
      %744 = vmatprep.subr.bf16.mxu0 0
      %745 = vmatpush2.bf16.msra.mxu0 %v661
      %746 = vmatprep.subr.bf16.mxu0 0
      %747 = vmatpush2.bf16.msra.mxu0 %v660
      %748 = vmatprep.mubr.bf16.mxu0 %v493
      %749 = vmatmul.mubr.bf16.gmra.mxu0 %v492
      %v750 = vpop.f32.mrf.mxu0
      %v751 = vadd.f32 0.0, %v750
      %v752 = vpop.f32.mrf.mxu0
      %v753 = vpop.f32.mrf.mxu0
      %v754 = vadd.f32 0.0, %v753
      %v755 = vpop.f32.mrf.mxu0
      %756 = vmatprep.mubr.bf16.mxu0 %v497
      %757 = vmatmul.mubr.bf16.gmra.mxu0 %v496
      %v758 = vpop.f32.mrf.mxu0
      %v759 = vadd.f32 0.0, %v758
      %v760 = vpop.f32.mrf.mxu0
      %v761 = vpop.f32.mrf.mxu0
      %v762 = vadd.f32 0.0, %v761
      %v763 = vpop.f32.mrf.mxu0
      %764 = vmatprep.mubr.bf16.mxu0 %v501
      %765 = vmatmul.mubr.bf16.gmra.mxu0 %v500
      %v766 = vpop.f32.mrf.mxu0
      %v767 = vadd.f32 0.0, %v766
      %v768 = vpop.f32.mrf.mxu0
      %v769 = vpop.f32.mrf.mxu0
      %v770 = vadd.f32 0.0, %v769
      %v771 = vpop.f32.mrf.mxu0
      %772 = vmatprep.mubr.bf16.mxu0 %v505
      %773 = vmatmul.mubr.bf16.gmra.mxu0 %v504
      %v774 = vpop.f32.mrf.mxu0
      %v775 = vadd.f32 0.0, %v774
      %v776 = vpop.f32.mrf.mxu0
      %v777 = vpop.f32.mrf.mxu0
      %v778 = vadd.f32 0.0, %v777
      %v779 = vpop.f32.mrf.mxu0
      %780 = vdwg.mxu0
      %781 = vmatprep.subr.bf16.mxu0 0
      %782 = vmatpush1.bf16.msra.mxu0 %v675
      %783 = vmatprep.subr.bf16.mxu0 0
      %784 = vmatpush1.bf16.msra.mxu0 %v674
      %785 = vmatprep.subr.bf16.mxu0 0
      %786 = vmatpush1.bf16.msra.mxu0 %v673
      %787 = vmatprep.subr.bf16.mxu0 0
      %788 = vmatpush1.bf16.msra.mxu0 %v672
      %789 = vmatprep.subr.bf16.mxu0 0
      %790 = vmatpush1.bf16.msra.mxu0 %v671
      %791 = vmatprep.subr.bf16.mxu0 0
      %792 = vmatpush1.bf16.msra.mxu0 %v670
      %793 = vmatprep.subr.bf16.mxu0 0
      %794 = vmatpush1.bf16.msra.mxu0 %v669
      %795 = vmatprep.subr.bf16.mxu0 0
      %796 = vmatpush1.bf16.msra.mxu0 %v668
      %797 = vmatprep.subr.bf16.mxu0 0
      %798 = vmatpush2.bf16.msra.mxu0 %v683
      %799 = vmatprep.subr.bf16.mxu0 0
      %800 = vmatpush2.bf16.msra.mxu0 %v682
      %801 = vmatprep.subr.bf16.mxu0 0
      %802 = vmatpush2.bf16.msra.mxu0 %v681
      %803 = vmatprep.subr.bf16.mxu0 0
      %804 = vmatpush2.bf16.msra.mxu0 %v680
      %805 = vmatprep.subr.bf16.mxu0 0
      %806 = vmatpush2.bf16.msra.mxu0 %v679
      %807 = vmatprep.subr.bf16.mxu0 0
      %808 = vmatpush2.bf16.msra.mxu0 %v678
      %809 = vmatprep.subr.bf16.mxu0 0
      %810 = vmatpush2.bf16.msra.mxu0 %v677
      %811 = vmatprep.subr.bf16.mxu0 0
      %812 = vmatpush2.bf16.msra.mxu0 %v676
      %813 = vmatprep.mubr.bf16.mxu0 %v495
      %814 = vmatmul.mubr.bf16.gmra.mxu0 %v494
      %v815 = vpop.f32.mrf.mxu0
      %v816 = vadd.f32 %v751, %v815
      %v817 = vpop.f32.mrf.mxu0
      %v818 = vpop.f32.mrf.mxu0
      %v819 = vadd.f32 %v754, %v818
      %v820 = vpop.f32.mrf.mxu0
      %821 = vmatprep.mubr.bf16.mxu0 %v499
      %822 = vmatmul.mubr.bf16.gmra.mxu0 %v498
      %v823 = vpop.f32.mrf.mxu0
      %v824 = vadd.f32 %v759, %v823
      %v825 = vpop.f32.mrf.mxu0
      %v826 = vpop.f32.mrf.mxu0
      %v827 = vadd.f32 %v762, %v826
      %v828 = vpop.f32.mrf.mxu0
      %829 = vmatprep.mubr.bf16.mxu0 %v503
      %830 = vmatmul.mubr.bf16.gmra.mxu0 %v502
      %v831 = vpop.f32.mrf.mxu0
      %v832 = vadd.f32 %v767, %v831
      %v833 = vpop.f32.mrf.mxu0
      %v834 = vpop.f32.mrf.mxu0
      %v835 = vadd.f32 %v770, %v834
      %v836 = vpop.f32.mrf.mxu0
      %837 = vmatprep.mubr.bf16.mxu0 %v507
      %838 = vmatmul.mubr.bf16.gmra.mxu0 %v506
      %v839 = vpop.f32.mrf.mxu0
      %v840 = vadd.f32 %v775, %v839
      %v841 = vpop.f32.mrf.mxu0
      %v842 = vpop.f32.mrf.mxu0
      %v843 = vadd.f32 %v778, %v842
      %v844 = vpop.f32.mrf.mxu0
      %845 = vdwg.mxu0
      %v862 = vunpack.c.l.b16 %v284
      %v863 = vunpack.c.h.b16 %v284
      %v864 = vunpack.c.l.b16 %v285
      %v865 = vunpack.c.h.b16 %v285
      %v866 = vunpack.c.l.b16 %v286
      %v867 = vunpack.c.h.b16 %v286
      %v868 = vunpack.c.l.b16 %v287
      %v869 = vunpack.c.h.b16 %v287
      %v870 = vunpack.c.l.b16 %v288
      %v871 = vunpack.c.h.b16 %v288
      %v872 = vunpack.c.l.b16 %v289
      %v873 = vunpack.c.h.b16 %v289
      %v874 = vunpack.c.l.b16 %v290
      %v875 = vunpack.c.h.b16 %v290
      %v876 = vunpack.c.l.b16 %v291
      %v877 = vunpack.c.h.b16 %v291
      %v878 = vunpack.c.l.b16 %v292
      %v879 = vunpack.c.h.b16 %v292
      %v880 = vunpack.c.l.b16 %v293
      %v881 = vunpack.c.h.b16 %v293
      %v882 = vunpack.c.l.b16 %v294
      %v883 = vunpack.c.h.b16 %v294
      %v884 = vunpack.c.l.b16 %v295
      %v885 = vunpack.c.h.b16 %v295
      %v886 = vunpack.c.l.b16 %v296
      %v887 = vunpack.c.h.b16 %v296
      %v888 = vunpack.c.l.b16 %v297
      %v889 = vunpack.c.h.b16 %v297
      %v890 = vunpack.c.l.b16 %v298
      %v891 = vunpack.c.h.b16 %v298
      %v892 = vunpack.c.l.b16 %v299
      %v893 = vunpack.c.h.b16 %v299
      %v894 = vpack.c.b16 %v866, %v862
      %v895 = vpack.c.b16 %v867, %v863
      %v896 = vpack.c.b16 %v868, %v864
      %v897 = vpack.c.b16 %v869, %v865
      %v898 = vpack.c.b16 %v874, %v870
      %v899 = vpack.c.b16 %v875, %v871
      %v900 = vpack.c.b16 %v876, %v872
      %v901 = vpack.c.b16 %v877, %v873
      %v902 = vpack.c.b16 %v882, %v878
      %v903 = vpack.c.b16 %v883, %v879
      %v904 = vpack.c.b16 %v884, %v880
      %v905 = vpack.c.b16 %v885, %v881
      %v906 = vpack.c.b16 %v890, %v886
      %v907 = vpack.c.b16 %v891, %v887
      %v908 = vpack.c.b16 %v892, %v888
      %v909 = vpack.c.b16 %v893, %v889
      %v990 = vunpack.c.l.b16 %v300
      %v991 = vunpack.c.l.b16 %v301
      %v992 = vunpack.c.l.b16 %v302
      %v993 = vunpack.c.l.b16 %v303
      %v994 = vunpack.c.l.b16 %v304
      %v995 = vunpack.c.l.b16 %v305
      %v996 = vunpack.c.l.b16 %v306
      %v997 = vunpack.c.l.b16 %v307
      %v998 = vunpack.c.l.b16 %v308
      %v999 = vunpack.c.l.b16 %v309
      %v1000 = vunpack.c.l.b16 %v310
      %v1001 = vunpack.c.l.b16 %v311
      %v1002 = vunpack.c.l.b16 %v312
      %v1003 = vunpack.c.l.b16 %v313
      %v1004 = vunpack.c.l.b16 %v314
      %v1005 = vunpack.c.l.b16 %v315
      %v1006 = vunpack.c.l.b16 %v316
      %v1007 = vunpack.c.l.b16 %v317
      %v1008 = vunpack.c.l.b16 %v318
      %v1009 = vunpack.c.l.b16 %v319
      %v1010 = vunpack.c.l.b16 %v320
      %v1011 = vunpack.c.l.b16 %v321
      %v1012 = vunpack.c.l.b16 %v322
      %v1013 = vunpack.c.l.b16 %v323
      %v1014 = vunpack.c.l.b16 %v324
      %v1015 = vunpack.c.l.b16 %v325
      %v1016 = vunpack.c.l.b16 %v326
      %v1017 = vunpack.c.l.b16 %v327
      %v1018 = vunpack.c.l.b16 %v328
      %v1019 = vunpack.c.l.b16 %v329
      %v1020 = vunpack.c.l.b16 %v330
      %v1021 = vunpack.c.l.b16 %v331
      %v1022 = vunpack.c.l.b16 %v332
      %v1023 = vunpack.c.l.b16 %v333
      %v1024 = vunpack.c.l.b16 %v334
      %v1025 = vunpack.c.l.b16 %v335
      %v1026 = vunpack.c.l.b16 %v336
      %v1027 = vunpack.c.l.b16 %v337
      %v1028 = vunpack.c.l.b16 %v338
      %v1029 = vunpack.c.l.b16 %v339
      %v1030 = vunpack.c.l.b16 %v340
      %v1031 = vunpack.c.l.b16 %v341
      %v1032 = vunpack.c.l.b16 %v342
      %v1033 = vunpack.c.l.b16 %v343
      %v1034 = vunpack.c.l.b16 %v344
      %v1035 = vunpack.c.l.b16 %v345
      %v1036 = vunpack.c.l.b16 %v346
      %v1037 = vunpack.c.l.b16 %v347
      %v1038 = vunpack.c.l.b16 %v348
      %v1039 = vunpack.c.l.b16 %v349
      %v1040 = vunpack.c.l.b16 %v350
      %v1041 = vunpack.c.l.b16 %v351
      %v1042 = vunpack.c.l.b16 %v352
      %v1043 = vunpack.c.l.b16 %v353
      %v1044 = vunpack.c.l.b16 %v354
      %v1045 = vunpack.c.l.b16 %v355
      %v1046 = vunpack.c.l.b16 %v356
      %v1047 = vunpack.c.l.b16 %v357
      %v1048 = vunpack.c.l.b16 %v358
      %v1049 = vunpack.c.l.b16 %v359
      %v1050 = vunpack.c.l.b16 %v360
      %v1051 = vunpack.c.l.b16 %v361
      %v1052 = vunpack.c.l.b16 %v362
      %v1053 = vunpack.c.l.b16 %v363
      %v1054 = vpack.c.b16 %v991, %v990
      %v1055 = vpack.c.b16 %v993, %v992
      %v1056 = vpack.c.b16 %v995, %v994
      %v1057 = vpack.c.b16 %v997, %v996
      %v1058 = vpack.c.b16 %v999, %v998
      %v1059 = vpack.c.b16 %v1001, %v1000
      %v1060 = vpack.c.b16 %v1003, %v1002
      %v1061 = vpack.c.b16 %v1005, %v1004
      %v1062 = vpack.c.b16 %v1007, %v1006
      %v1063 = vpack.c.b16 %v1009, %v1008
      %v1064 = vpack.c.b16 %v1011, %v1010
      %v1065 = vpack.c.b16 %v1013, %v1012
      %v1066 = vpack.c.b16 %v1015, %v1014
      %v1067 = vpack.c.b16 %v1017, %v1016
      %v1068 = vpack.c.b16 %v1019, %v1018
      %v1069 = vpack.c.b16 %v1021, %v1020
      %v1070 = vpack.c.b16 %v1023, %v1022
      %v1071 = vpack.c.b16 %v1025, %v1024
      %v1072 = vpack.c.b16 %v1027, %v1026
      %v1073 = vpack.c.b16 %v1029, %v1028
      %v1074 = vpack.c.b16 %v1031, %v1030
      %v1075 = vpack.c.b16 %v1033, %v1032
      %v1076 = vpack.c.b16 %v1035, %v1034
      %v1077 = vpack.c.b16 %v1037, %v1036
      %v1078 = vpack.c.b16 %v1039, %v1038
      %v1079 = vpack.c.b16 %v1041, %v1040
      %v1080 = vpack.c.b16 %v1043, %v1042
      %v1081 = vpack.c.b16 %v1045, %v1044
      %v1082 = vpack.c.b16 %v1047, %v1046
      %v1083 = vpack.c.b16 %v1049, %v1048
      %v1084 = vpack.c.b16 %v1051, %v1050
      %v1085 = vpack.c.b16 %v1053, %v1052
      %1118 = vmatprep.subr.bf16.mxu0 0
      %1119 = vmatpush1.bf16.msra.mxu0 %v1061
      %1120 = vmatprep.subr.bf16.mxu0 0
      %1121 = vmatpush1.bf16.msra.mxu0 %v1060
      %1122 = vmatprep.subr.bf16.mxu0 0
      %1123 = vmatpush1.bf16.msra.mxu0 %v1059
      %1124 = vmatprep.subr.bf16.mxu0 0
      %1125 = vmatpush1.bf16.msra.mxu0 %v1058
      %1126 = vmatprep.subr.bf16.mxu0 0
      %1127 = vmatpush1.bf16.msra.mxu0 %v1057
      %1128 = vmatprep.subr.bf16.mxu0 0
      %1129 = vmatpush1.bf16.msra.mxu0 %v1056
      %1130 = vmatprep.subr.bf16.mxu0 0
      %1131 = vmatpush1.bf16.msra.mxu0 %v1055
      %1132 = vmatprep.subr.bf16.mxu0 0
      %1133 = vmatpush1.bf16.msra.mxu0 %v1054
      %1134 = vmatprep.subr.bf16.mxu0 0
      %1135 = vmatpush2.bf16.msra.mxu0 %v1069
      %1136 = vmatprep.subr.bf16.mxu0 0
      %1137 = vmatpush2.bf16.msra.mxu0 %v1068
      %1138 = vmatprep.subr.bf16.mxu0 0
      %1139 = vmatpush2.bf16.msra.mxu0 %v1067
      %1140 = vmatprep.subr.bf16.mxu0 0
      %1141 = vmatpush2.bf16.msra.mxu0 %v1066
      %1142 = vmatprep.subr.bf16.mxu0 0
      %1143 = vmatpush2.bf16.msra.mxu0 %v1065
      %1144 = vmatprep.subr.bf16.mxu0 0
      %1145 = vmatpush2.bf16.msra.mxu0 %v1064
      %1146 = vmatprep.subr.bf16.mxu0 0
      %1147 = vmatpush2.bf16.msra.mxu0 %v1063
      %1148 = vmatprep.subr.bf16.mxu0 0
      %1149 = vmatpush2.bf16.msra.mxu0 %v1062
      %1150 = vmatprep.mubr.bf16.mxu0 %v895
      %1151 = vmatmul.mubr.bf16.gmra.mxu0 %v894
      %v1152 = vpop.f32.mrf.mxu0
      %v1153 = vadd.f32 %v816, %v1152
      %v1154 = vpop.f32.mrf.mxu0
      %v1155 = vpop.f32.mrf.mxu0
      %v1156 = vadd.f32 %v819, %v1155
      %v1157 = vpop.f32.mrf.mxu0
      %1158 = vmatprep.mubr.bf16.mxu0 %v899
      %1159 = vmatmul.mubr.bf16.gmra.mxu0 %v898
      %v1160 = vpop.f32.mrf.mxu0
      %v1161 = vadd.f32 %v824, %v1160
      %v1162 = vpop.f32.mrf.mxu0
      %v1163 = vpop.f32.mrf.mxu0
      %v1164 = vadd.f32 %v827, %v1163
      %v1165 = vpop.f32.mrf.mxu0
      %1166 = vmatprep.mubr.bf16.mxu0 %v903
      %1167 = vmatmul.mubr.bf16.gmra.mxu0 %v902
      %v1168 = vpop.f32.mrf.mxu0
      %v1169 = vadd.f32 %v832, %v1168
      %v1170 = vpop.f32.mrf.mxu0
      %v1171 = vpop.f32.mrf.mxu0
      %v1172 = vadd.f32 %v835, %v1171
      %v1173 = vpop.f32.mrf.mxu0
      %1174 = vmatprep.mubr.bf16.mxu0 %v907
      %1175 = vmatmul.mubr.bf16.gmra.mxu0 %v906
      %v1176 = vpop.f32.mrf.mxu0
      %v1177 = vadd.f32 %v840, %v1176
      %v1178 = vpop.f32.mrf.mxu0
      %v1179 = vpop.f32.mrf.mxu0
      %v1180 = vadd.f32 %v843, %v1179
      %v1181 = vpop.f32.mrf.mxu0
      %1182 = vdwg.mxu0
      %1183 = vmatprep.subr.bf16.mxu0 0
      %1184 = vmatpush1.bf16.msra.mxu0 %v1077
      %1185 = vmatprep.subr.bf16.mxu0 0
      %1186 = vmatpush1.bf16.msra.mxu0 %v1076
      %1187 = vmatprep.subr.bf16.mxu0 0
      %1188 = vmatpush1.bf16.msra.mxu0 %v1075
      %1189 = vmatprep.subr.bf16.mxu0 0
      %1190 = vmatpush1.bf16.msra.mxu0 %v1074
      %1191 = vmatprep.subr.bf16.mxu0 0
      %1192 = vmatpush1.bf16.msra.mxu0 %v1073
      %1193 = vmatprep.subr.bf16.mxu0 0
      %1194 = vmatpush1.bf16.msra.mxu0 %v1072
      %1195 = vmatprep.subr.bf16.mxu0 0
      %1196 = vmatpush1.bf16.msra.mxu0 %v1071
      %1197 = vmatprep.subr.bf16.mxu0 0
      %1198 = vmatpush1.bf16.msra.mxu0 %v1070
      %1199 = vmatprep.subr.bf16.mxu0 0
      %1200 = vmatpush2.bf16.msra.mxu0 %v1085
      %1201 = vmatprep.subr.bf16.mxu0 0
      %1202 = vmatpush2.bf16.msra.mxu0 %v1084
      %1203 = vmatprep.subr.bf16.mxu0 0
      %1204 = vmatpush2.bf16.msra.mxu0 %v1083
      %1205 = vmatprep.subr.bf16.mxu0 0
      %1206 = vmatpush2.bf16.msra.mxu0 %v1082
      %1207 = vmatprep.subr.bf16.mxu0 0
      %1208 = vmatpush2.bf16.msra.mxu0 %v1081
      %1209 = vmatprep.subr.bf16.mxu0 0
      %1210 = vmatpush2.bf16.msra.mxu0 %v1080
      %1211 = vmatprep.subr.bf16.mxu0 0
      %1212 = vmatpush2.bf16.msra.mxu0 %v1079
      %1213 = vmatprep.subr.bf16.mxu0 0
      %1214 = vmatpush2.bf16.msra.mxu0 %v1078
      %1215 = vmatprep.mubr.bf16.mxu0 %v897
      %1216 = vmatmul.mubr.bf16.gmra.mxu0 %v896
      %v1217 = vpop.f32.mrf.mxu0
      %v1218 = vadd.f32 %v1153, %v1217
      %v1219 = vpop.f32.mrf.mxu0
      %v1220 = vpop.f32.mrf.mxu0
      %v1221 = vadd.f32 %v1156, %v1220
      %v1222 = vpop.f32.mrf.mxu0
      %1223 = vmatprep.mubr.bf16.mxu0 %v901
      %1224 = vmatmul.mubr.bf16.gmra.mxu0 %v900
      %v1225 = vpop.f32.mrf.mxu0
      %v1226 = vadd.f32 %v1161, %v1225
      %v1227 = vpop.f32.mrf.mxu0
      %v1228 = vpop.f32.mrf.mxu0
      %v1229 = vadd.f32 %v1164, %v1228
      %v1230 = vpop.f32.mrf.mxu0
      %1231 = vmatprep.mubr.bf16.mxu0 %v905
      %1232 = vmatmul.mubr.bf16.gmra.mxu0 %v904
      %v1233 = vpop.f32.mrf.mxu0
      %v1234 = vadd.f32 %v1169, %v1233
      %v1235 = vpop.f32.mrf.mxu0
      %v1236 = vpop.f32.mrf.mxu0
      %v1237 = vadd.f32 %v1172, %v1236
      %v1238 = vpop.f32.mrf.mxu0
      %1239 = vmatprep.mubr.bf16.mxu0 %v909
      %1240 = vmatmul.mubr.bf16.gmra.mxu0 %v908
      %v1241 = vpop.f32.mrf.mxu0
      %v1242 = vadd.f32 %v1177, %v1241
      %v1243 = vpop.f32.mrf.mxu0
      %v1244 = vpop.f32.mrf.mxu0
      %v1245 = vadd.f32 %v1180, %v1244
      %v1246 = vpop.f32.mrf.mxu0
      %1247 = vdwg.mxu0
      %v1248 = vld [vmem:[%s4] sm:$0x1]
      %v1250 = vlaneseq
      %v1251 = vshrl.u32 %v1250, 7
      %v1252 = vsub.s32 0, %v1251
      %v1253 = vrot.slane %v1248, %v1252
      %v1255 = vmul.f32 %v1218, %v1253
      %v1256 = vmul.f32 %v1221, %v1253
      %v1257 = vmul.f32 %v1226, %v1253
      %v1258 = vmul.f32 %v1229, %v1253
      %v1259 = vmul.f32 %v1234, %v1253
      %v1260 = vmul.f32 %v1237, %v1253
      %v1261 = vmul.f32 %v1242, %v1253
      %v1262 = vmul.f32 %v1245, %v1253
      %v1263 = vld [vmem:[%s5] sm:$0x1]
      %v1265 = vlaneseq
      %v1266 = vshrl.u32 %v1265, 7
      %v1267 = vsub.s32 0, %v1266
      %v1268 = vrot.slane %v1263, %v1267
      %v1270 = vadd.f32 %v1255, %v1268
      %v1271 = vadd.f32 %v1256, %v1268
      %v1272 = vadd.f32 %v1257, %v1268
      %v1273 = vadd.f32 %v1258, %v1268
      %v1274 = vadd.f32 %v1259, %v1268
      %v1275 = vadd.f32 %v1260, %v1268
      %v1276 = vadd.f32 %v1261, %v1268
      %v1277 = vadd.f32 %v1262, %v1268
      %v1278 = vmax.f32 %v1270, 0.0
      %v1279 = vmax.f32 %v1271, 0.0
      %v1280 = vmax.f32 %v1272, 0.0
      %v1281 = vmax.f32 %v1273, 0.0
      %v1282 = vmax.f32 %v1274, 0.0
      %v1283 = vmax.f32 %v1275, 0.0
      %v1284 = vmax.f32 %v1276, 0.0
      %v1285 = vmax.f32 %v1277, 0.0
      %v1286 = vpack.c.bf16 %v1279, %v1278
      %v1287 = vpack.c.bf16 %v1281, %v1280
      %v1288 = vpack.c.bf16 %v1283, %v1282
      %v1289 = vpack.c.bf16 %v1285, %v1284
      %v1294 = vunpack.c.l.b16 %v1286
      %v1295 = vunpack.c.h.b16 %v1286
      %v1296 = vunpack.c.l.b16 %v1287
      %v1297 = vunpack.c.h.b16 %v1287
      %v1298 = vunpack.c.l.b16 %v1288
      %v1299 = vunpack.c.h.b16 %v1288
      %v1300 = vunpack.c.l.b16 %v1289
      %v1301 = vunpack.c.h.b16 %v1289
      %v1302 = vpack.c.b16 %v1294, %v1294
      %v1303 = vpack.c.b16 %v1295, %v1295
      %v1304 = vpack.c.b16 %v1296, %v1296
      %v1305 = vpack.c.b16 %v1297, %v1297
      %v1306 = vpack.c.b16 %v1298, %v1298
      %v1307 = vpack.c.b16 %v1299, %v1299
      %v1308 = vpack.c.b16 %v1300, %v1300
      %v1309 = vpack.c.b16 %v1301, %v1301
      %1318 = vst [vmem:[%s281] sm:$0xf] %v1302
      %1319 = vst [vmem:[%s281 + $0x4] sm:$0xf] %v1303
      %1320 = vst [vmem:[%s281 + $0x8] sm:$0xf] %v1304
      %1321 = vst [vmem:[%s281 + $0xc] sm:$0xf] %v1305
      %1322 = vst [vmem:[%s281 + $0x10] sm:$0xf] %v1306
      %1323 = vst [vmem:[%s281 + $0x14] sm:$0xf] %v1307
      %1324 = vst [vmem:[%s281 + $0x18] sm:$0xf] %v1308
      %1325 = vst [vmem:[%s281 + $0x1c] sm:$0xf] %v1309
      %s1326 = smul.u32 8, %s17
      %p1327 = scmp.lt.s32.totalorder %s1326, 15
      %s1328 = scalar_select %p1327, %s1326, 15
      %s1329 = smul.addr %s1328, 4
      %s1330 = scalar_lea.vmem %s6, %s1329
      // Predicated region
      $region45: #{fcn_forward.11} parent=43 // pred_check
        %p1331 = pneg %p171
      $region46: #{fcn_forward.11} parent=43 // pred_check_branch
        %1333 = sbr.rel (%p1331) target = $region48
      $region47: #{fcn_forward.11} parent=43 // pred_region
        %s1334 = smul.u32 8, %s17
      $region48: #{fcn_forward.11} parent=43 // pred_fallthru
        _
    $region44: #{fcn_forward.11} parent=5 // pred_fallthru
      _
    %p1335 = scmp.le.s32.totalorder 2, %s12
    // Predicated region
    $region49: #{fcn_forward.11} parent=5 // pred_check
      %p1336 = pneg %p1335
    $region50: #{fcn_forward.11} parent=5 // pred_check_branch
      %1338 = sbr.rel (%p1336) target = $region52
    $region51: #{fcn_forward.11} parent=5 // pred_region
      %s1339 = ssub.s32 %s12, 2
      // Predicated region
      $region53: #{fcn_forward.11} parent=51 // pred_check
        %p1340 = pneg %p177
      $region54: #{fcn_forward.11} parent=51 // pred_check_branch
        %1342 = sbr.rel (%p1340) target = $region56
      $region55: #{fcn_forward.11} parent=51 // pred_region
        %s1343 = smul.u32 8, %s18
        %p1344 = scmp.lt.s32.totalorder %s1343, 15
        %s1345 = scalar_select %p1344, %s1343, 15
        %s1346 = smul.addr %s1345, 4
        %s1347 = scalar_lea.vmem %s6, %s1346
      $region56: #{fcn_forward.11} parent=51 // pred_fallthru
        _
    $region52: #{fcn_forward.11} parent=5 // pred_fallthru
      _
  $region6: #{fcn_forward.11} parent=0 // loop_footer
    %s16 = sadd.s32 1, %s12
  $region7: #{fcn_forward.11} parent=0 // loop_footer_branch
    %11 = sbr.rel target = $region3
  $region8: #{fcn_forward.11} parent=0 // loop_exit
    _

</llo_original>
